<compile_context>
chip_gen: v7x
topology: tpu7x:2x2x1
jax: 0.10.0
libtpu: 0.0.40
codegen_flags: <defaults>
</compile_context>

<pallas_src>
import functools
import math

import jax
import jax.numpy as jnp
import numpy as np
from jax.experimental import pallas as pl
from jax.experimental.pallas import tpu as pltpu

_C0_LANE = 4        # pad the 3 input channels to 4 so W*C_in = 128 for block 0
_USE_BF16 = True    # bf16 MXU operands, f32 accumulation
_BN_EPS = 1e-5


# ------------------------------ fused kernel -------------------------------

def _disc_fused_kernel(*refs, num_blocks):
    """Whole Discriminator forward on VMEM-resident 2-D activations.

    Activations are (N*H, W*C) matrices.  Each conv layer is
        out = sum_kh (S_kh @ a) @ W_kh
    with host-precomputed gather (S) and structured weight (W) matrices, so
    the kernel is matmuls + elementwise ops only.
    """
    x_ref, o_ref = refs[0], refs[-1]
    args = refs[1:-1]

    a = x_ref[...]                                        # f32 (N*H0, W0*C0)
    pos = 0
    for _ in range(num_blocks):
        s_ref, w_ref, g_ref, be_ref, rm_ref, rmt_ref = args[pos:pos + 6]
        pos += 6
        cout = g_ref.shape[1]
        rows = s_ref.shape[1]                             # N * Hout
        lout = w_ref.shape[2]                             # Wout * Cout
        count = rows * (lout // cout)                     # N * Hout * Wout

        acc = jnp.zeros((rows, lout), jnp.float32)
        for kh in range(4):
            g = jnp.dot(s_ref[kh], a, preferred_element_type=jnp.float32)
            g = g.astype(w_ref.dtype)                     # bf16 operands
            acc = acc + jnp.dot(g, w_ref[kh],
                                preferred_element_type=jnp.float32)

        # Training-mode BatchNorm (biased variance) + ReLU.  The conv bias is
        # omitted: BN's mean subtraction cancels it exactly.
        inv_n = 1.0 / count
        s1 = jnp.sum(acc, axis=0, keepdims=True)          # (1, Wout*Cout)
        s2 = jnp.sum(acc * acc, axis=0, keepdims=True)
        mean_c = jnp.dot(s1, rm_ref[...],
                         preferred_element_type=jnp.float32) * inv_n
        ex2_c = jnp.dot(s2, rm_ref[...],
                        preferred_element_type=jnp.float32) * inv_n
        var_c = jnp.maximum(ex2_c - mean_c * mean_c, 0.0)  # guard cancellation
        inv_std = jax.lax.rsqrt(var_c + _BN_EPS)
        scale_c = g_ref[...] * inv_std                     # (1, Cout)
        shift_c = be_ref[...] - mean_c * scale_c
        scale_l = jnp.dot(scale_c, rmt_ref[...],
                          preferred_element_type=jnp.float32)
        shift_l = jnp.dot(shift_c, rmt_ref[...],
                          preferred_element_type=jnp.float32)
        a = jnp.maximum(acc * scale_l + shift_l, 0.0)      # next block's input

    # Final Conv2d(k=4, s=1, p=0): same matmul form, no BN, bias added.
    s_ref, w_ref, b_ref = args[pos], args[pos + 1], args[pos + 2]
    out = jnp.zeros((s_ref.shape[1], w_ref.shape[2]), jnp.float32)
    for kh in range(4):
        g = jnp.dot(s_ref[kh], a, preferred_element_type=jnp.float32)
        g = g.astype(w_ref.dtype)
        out = out + jnp.dot(g, w_ref[kh], preferred_element_type=jnp.float32)
    o_ref[...] = out + b_ref[...]


# -------------------------------- wrapper -----------------------------------

def discriminator_forward(x_nchw, prepped, *, num_of_block):
    n, _, h, w = x_nchw.shape
    # Model-boundary relayout only: NCHW -> NHWC, pad C 3->4, flatten to a
    # lane-dense (N*H, W*4) matrix (W*4 = 128 here).
    x = jnp.transpose(x_nchw, (0, 2, 3, 1))
    x = jnp.pad(x, ((0, 0), (0, 0), (0, 0), (0, _C0_LANE - x.shape[-1])))
    a0 = x.reshape(n * h, w * _C0_LANE).astype(jnp.float32)

    kernel = functools.partial(_disc_fused_kernel, num_blocks=num_of_block)
    vmem = pl.BlockSpec(memory_space=pltpu.MemorySpace.VMEM)
    out = pl.pallas_call(
        kernel,
        out_shape=jax.ShapeDtypeStruct((n, 1), jnp.float32),
        in_specs=[vmem] * (1 + len(prepped)),
        out_specs=vmem,
    )(a0, *prepped)
    return out.reshape(n, 1, 1, 1)


# ------------------------ one-time weight preparation -----------------------

def _prep_layer(w_oihw, n, hin, win, cin_lane, stride, pad):
    """Build stacked gather (S) and structured weight (W) matrices."""
    w_np = np.asarray(w_oihw, dtype=np.float32)
    cout, cin, kh_sz, kw_sz = w_np.shape
    hout = (hin + 2 * pad - kh_sz) // stride + 1
    wout = (win + 2 * pad - kw_sz) // stride + 1

    s_stack = np.zeros((kh_sz, n * hout, n * hin), np.float32)
    for kh in range(kh_sz):
        for b in range(n):
            for p in range(hout):
                i = stride * p + kh - pad
                if 0 <= i < hin:
                    s_stack[kh, b * hout + p, b * hin + i] = 1.0

    w_stack = np.zeros((kh_sz, win * cin_lane, wout * cout), np.float32)
    for kh in range(kh_sz):
        for q in range(wout):
            for kw in range(kw_sz):
                wcol = stride * q + kw - pad
                if 0 <= wcol < win:
                    w_stack[kh, wcol * cin_lane:wcol * cin_lane + cin,
                            q * cout:(q + 1) * cout] = w_np[:, :, kh, kw].T
    return hout, wout, s_stack, w_stack


def _prep_channel_maps(wout, cout):
    rm = np.zeros((wout * cout, cout), np.float32)
    for q in range(wout):
        rm[q * cout:(q + 1) * cout, :] = np.eye(cout, dtype=np.float32)
    return rm, np.ascontiguousarray(rm.T)


def prepare_params(params, num_of_block, batch, image_size, use_bf16=_USE_BF16):
    """Host-side prep; gather matrices bake in the (static) batch size."""
    wdt = jnp.bfloat16 if use_bf16 else jnp.float32
    flat = []
    hin = win = image_size
    cin_lane = _C0_LANE
    for i in range(num_of_block):
        w, _b, gamma, beta = params[f'd{i}']        # conv bias cancelled by BN
        cout = w.shape[0]
        hin, win, s_stack, w_stack = _prep_layer(w, batch, hin, win,
                                                 cin_lane, stride=2, pad=1)
        rm, rmt = _prep_channel_maps(win, cout)
        flat += [jnp.asarray(s_stack),
                 jnp.asarray(w_stack, dtype=wdt),
                 jnp.asarray(gamma, jnp.float32).reshape(1, cout),
                 jnp.asarray(beta, jnp.float32).reshape(1, cout),
                 jnp.asarray(rm), jnp.asarray(rmt)]
        cin_lane = cout
    w, b = params['last']
    _, _, s_stack, w_stack = _prep_layer(w, batch, hin, win,
                                         cin_lane, stride=1, pad=0)
    flat += [jnp.asarray(s_stack),
             jnp.asarray(w_stack, dtype=wdt),
             jnp.asarray(b, jnp.float32).reshape(1, 1)]
    return tuple(flat)


# -------------------------- pure-JAX reference ------------------------------

def _ref_conv(x_nhwc, w_pt, b, stride, padding):
    wk = jnp.transpose(w_pt, (2, 3, 1, 0))            # OIHW -> HWIO (no flip)
    y = jax.lax.conv_general_dilated(
        x_nhwc, wk, window_strides=(stride, stride),
        padding=[(padding, padding), (padding, padding)],
        dimension_numbers=('NHWC', 'HWIO', 'NHWC'),
        precision=jax.lax.Precision.HIGHEST)
    return y + b[None, None, None, :]


def _ref_bn_relu(x, gamma, beta, eps=_BN_EPS):
    mean = x.mean(axis=(0, 1, 2), keepdims=True)
    var = ((x - mean) ** 2).mean(axis=(0, 1, 2), keepdims=True)
    y = (x - mean) / jnp.sqrt(var + eps) * gamma + beta
    return jnp.maximum(y, 0.0)


def ref_discriminator_forward(x_nchw, params, num_of_block):
    x = jnp.transpose(x_nchw, (0, 2, 3, 1))
    for i in range(num_of_block):
        w, b, gamma, beta = params[f'd{i}']
        x = _ref_conv(x, w, b, stride=2, padding=1)
        x = _ref_bn_relu(x, gamma, beta)
    w, b = params['last']
    x = _ref_conv(x, w, b, stride=1, padding=0)
    return jnp.transpose(x, (0, 3, 1, 2))


# ------------------------------ params / main -------------------------------

def init_params(key, ndf, num_of_block):
    params = {}
    in_ch = 3
    for i in range(num_of_block):
        out_ch = ndf if i == 0 else ndf * (2 ** i)
        key, k1, k2, k3, k4 = jax.random.split(key, 5)
        w = 0.1 * jax.random.normal(k1, (out_ch, in_ch, 4, 4), jnp.float32)
        b = 0.1 * jax.random.normal(k2, (out_ch,), jnp.float32)
        gamma = 1.0 + 0.1 * jax.random.normal(k3, (out_ch,), jnp.float32)
        beta = 0.1 * jax.random.normal(k4, (out_ch,), jnp.float32)
        params[f'd{i}'] = (w, b, gamma, beta)
        in_ch = out_ch
    key, k1, k2 = jax.random.split(key, 3)
    w = 0.1 * jax.random.normal(k1, (1, in_ch, 4, 4), jnp.float32)
    b = 0.1 * jax.random.normal(k2, (1,), jnp.float32)
    params['last'] = (w, b)
    return params


if __name__ == "__main__":
    # Discriminator(image_size=32, ndf=16, leaky_relu=False), batch=2.
    batch, image_size, ndf = 2, 32, 16
    num_of_block = int(round(math.log(image_size // 4, 2)))   # 3 blocks

    key = jax.random.PRNGKey(0)
    key, kx = jax.random.split(key)
    x = jax.random.normal(kx, (batch, 3, image_size, image_size), jnp.float32)
    params = init_params(key, ndf, num_of_block)
    prepped = prepare_params(params, num_of_block, batch, image_size)

    fwd = jax.jit(functools.partial(discriminator_forward,
                                    num_of_block=num_of_block))
    out = jax.block_until_ready(fwd(x, prepped))

    # Spatial trace: 32 -> 16 -> 8 -> 4 -> 1 ; channels 3 -> 16 -> 32 -> 64 -> 1.
    assert out.shape == (batch, 1, 1, 1), out.shape

    ref = ref_discriminator_forward(x, params, num_of_block)
    err = float(jnp.max(jnp.abs(out - ref)))
    tol = 5e-2 if _USE_BF16 else 2e-3        # bf16 MXU operands, f32 accumulate
    assert jnp.allclose(out, ref, atol=tol, rtol=tol), f"max abs err {err}"

    print("KERNEL_OK")
</pallas_src>

<mosaic_0001>
module attributes {stable_mosaic.version = 11 : i64} {
  func.func @_disc_fused_kernel(%arg0: memref<64x128xf32, #tpu.memory_space<vmem>>, %arg1: memref<4x32x64xf32, #tpu.memory_space<vmem>>, %arg2: memref<4x128x256xbf16, #tpu.memory_space<vmem>>, %arg3: memref<1x16xf32, #tpu.memory_space<vmem>>, %arg4: memref<1x16xf32, #tpu.memory_space<vmem>>, %arg5: memref<256x16xf32, #tpu.memory_space<vmem>>, %arg6: memref<16x256xf32, #tpu.memory_space<vmem>>, %arg7: memref<4x16x32xf32, #tpu.memory_space<vmem>>, %arg8: memref<4x256x256xbf16, #tpu.memory_space<vmem>>, %arg9: memref<1x32xf32, #tpu.memory_space<vmem>>, %arg10: memref<1x32xf32, #tpu.memory_space<vmem>>, %arg11: memref<256x32xf32, #tpu.memory_space<vmem>>, %arg12: memref<32x256xf32, #tpu.memory_space<vmem>>, %arg13: memref<4x8x16xf32, #tpu.memory_space<vmem>>, %arg14: memref<4x256x256xbf16, #tpu.memory_space<vmem>>, %arg15: memref<1x64xf32, #tpu.memory_space<vmem>>, %arg16: memref<1x64xf32, #tpu.memory_space<vmem>>, %arg17: memref<256x64xf32, #tpu.memory_space<vmem>>, %arg18: memref<64x256xf32, #tpu.memory_space<vmem>>, %arg19: memref<4x2x8xf32, #tpu.memory_space<vmem>>, %arg20: memref<4x256x1xbf16, #tpu.memory_space<vmem>>, %arg21: memref<1x1xf32, #tpu.memory_space<vmem>>, %arg22: memref<2x1xf32, #tpu.memory_space<vmem>>) attributes {dimension_semantics = [], scalar_prefetch = 0 : i64, scratch_operands = 0 : i64, tpu.core_type = #tpu.core_type<tc>} {
    %c0 = arith.constant 0 : index
    %c0_0 = arith.constant 0 : index
    %0 = vector.load %arg0[%c0, %c0_0] : memref<64x128xf32, #tpu.memory_space<vmem>>, vector<64x128xf32>
    %cst = arith.constant 0.000000e+00 : f32
    %1 = vector.broadcast %cst : f32 to vector<32x256xf32>
    %c0_1 = arith.constant 0 : index
    %c0_2 = arith.constant 0 : index
    %c0_3 = arith.constant 0 : index
    %2 = vector.load %arg1[%c0_1, %c0_2, %c0_3] : memref<4x32x64xf32, #tpu.memory_space<vmem>>, vector<1x32x64xf32>
    %3 = vector.shape_cast %2 : vector<1x32x64xf32> to vector<32x64xf32>
    %cst_4 = arith.constant dense<0.000000e+00> : vector<32x128xf32>
    %4 = tpu.matmul %3, %0, %cst_4 {dimension_numbers = #tpu.dot_dimension_numbers<[1], [0], [0], [1], [0, 0, 1, 1], [], []>} : vector<32x64xf32>, vector<64x128xf32>, vector<32x128xf32> -> vector<32x128xf32>
    %5 = arith.truncf %4 : vector<32x128xf32> to vector<32x128xbf16>
    %c0_5 = arith.constant 0 : index
    %c0_6 = arith.constant 0 : index
    %c0_7 = arith.constant 0 : index
    %6 = vector.load %arg2[%c0_5, %c0_6, %c0_7] : memref<4x128x256xbf16, #tpu.memory_space<vmem>>, vector<1x128x256xbf16>
    %7 = vector.shape_cast %6 : vector<1x128x256xbf16> to vector<128x256xbf16>
    %cst_8 = arith.constant dense<0.000000e+00> : vector<32x256xf32>
    %8 = tpu.matmul %5, %7, %cst_8 {dimension_numbers = #tpu.dot_dimension_numbers<[1], [0], [0], [1], [0, 0, 1, 1], [], []>} : vector<32x128xbf16>, vector<128x256xbf16>, vector<32x256xf32> -> vector<32x256xf32>
    %9 = arith.addf %1, %8 : vector<32x256xf32>
    %c1 = arith.constant 1 : index
    %c0_9 = arith.constant 0 : index
    %c0_10 = arith.constant 0 : index
    %10 = vector.load %arg1[%c1, %c0_9, %c0_10] : memref<4x32x64xf32, #tpu.memory_space<vmem>>, vector<1x32x64xf32>
    %11 = vector.shape_cast %10 : vector<1x32x64xf32> to vector<32x64xf32>
    %cst_11 = arith.constant dense<0.000000e+00> : vector<32x128xf32>
    %12 = tpu.matmul %11, %0, %cst_11 {dimension_numbers = #tpu.dot_dimension_numbers<[1], [0], [0], [1], [0, 0, 1, 1], [], []>} : vector<32x64xf32>, vector<64x128xf32>, vector<32x128xf32> -> vector<32x128xf32>
    %13 = arith.truncf %12 : vector<32x128xf32> to vector<32x128xbf16>
    %c1_12 = arith.constant 1 : index
    %c0_13 = arith.constant 0 : index
    %c0_14 = arith.constant 0 : index
    %14 = vector.load %arg2[%c1_12, %c0_13, %c0_14] : memref<4x128x256xbf16, #tpu.memory_space<vmem>>, vector<1x128x256xbf16>
    %15 = vector.shape_cast %14 : vector<1x128x256xbf16> to vector<128x256xbf16>
    %cst_15 = arith.constant dense<0.000000e+00> : vector<32x256xf32>
    %16 = tpu.matmul %13, %15, %cst_15 {dimension_numbers = #tpu.dot_dimension_numbers<[1], [0], [0], [1], [0, 0, 1, 1], [], []>} : vector<32x128xbf16>, vector<128x256xbf16>, vector<32x256xf32> -> vector<32x256xf32>
    %17 = arith.addf %9, %16 : vector<32x256xf32>
    %c2 = arith.constant 2 : index
    %c0_16 = arith.constant 0 : index
    %c0_17 = arith.constant 0 : index
    %18 = vector.load %arg1[%c2, %c0_16, %c0_17] : memref<4x32x64xf32, #tpu.memory_space<vmem>>, vector<1x32x64xf32>
    %19 = vector.shape_cast %18 : vector<1x32x64xf32> to vector<32x64xf32>
    %cst_18 = arith.constant dense<0.000000e+00> : vector<32x128xf32>
    %20 = tpu.matmul %19, %0, %cst_18 {dimension_numbers = #tpu.dot_dimension_numbers<[1], [0], [0], [1], [0, 0, 1, 1], [], []>} : vector<32x64xf32>, vector<64x128xf32>, vector<32x128xf32> -> vector<32x128xf32>
    %21 = arith.truncf %20 : vector<32x128xf32> to vector<32x128xbf16>
    %c2_19 = arith.constant 2 : index
    %c0_20 = arith.constant 0 : index
    %c0_21 = arith.constant 0 : index
    %22 = vector.load %arg2[%c2_19, %c0_20, %c0_21] : memref<4x128x256xbf16, #tpu.memory_space<vmem>>, vector<1x128x256xbf16>
    %23 = vector.shape_cast %22 : vector<1x128x256xbf16> to vector<128x256xbf16>
    %cst_22 = arith.constant dense<0.000000e+00> : vector<32x256xf32>
    %24 = tpu.matmul %21, %23, %cst_22 {dimension_numbers = #tpu.dot_dimension_numbers<[1], [0], [0], [1], [0, 0, 1, 1], [], []>} : vector<32x128xbf16>, vector<128x256xbf16>, vector<32x256xf32> -> vector<32x256xf32>
    %25 = arith.addf %17, %24 : vector<32x256xf32>
    %c3 = arith.constant 3 : index
    %c0_23 = arith.constant 0 : index
    %c0_24 = arith.constant 0 : index
    %26 = vector.load %arg1[%c3, %c0_23, %c0_24] : memref<4x32x64xf32, #tpu.memory_space<vmem>>, vector<1x32x64xf32>
    %27 = vector.shape_cast %26 : vector<1x32x64xf32> to vector<32x64xf32>
    %cst_25 = arith.constant dense<0.000000e+00> : vector<32x128xf32>
    %28 = tpu.matmul %27, %0, %cst_25 {dimension_numbers = #tpu.dot_dimension_numbers<[1], [0], [0], [1], [0, 0, 1, 1], [], []>} : vector<32x64xf32>, vector<64x128xf32>, vector<32x128xf32> -> vector<32x128xf32>
    %29 = arith.truncf %28 : vector<32x128xf32> to vector<32x128xbf16>
    %c3_26 = arith.constant 3 : index
    %c0_27 = arith.constant 0 : index
    %c0_28 = arith.constant 0 : index
    %30 = vector.load %arg2[%c3_26, %c0_27, %c0_28] : memref<4x128x256xbf16, #tpu.memory_space<vmem>>, vector<1x128x256xbf16>
    %31 = vector.shape_cast %30 : vector<1x128x256xbf16> to vector<128x256xbf16>
    %cst_29 = arith.constant dense<0.000000e+00> : vector<32x256xf32>
    %32 = tpu.matmul %29, %31, %cst_29 {dimension_numbers = #tpu.dot_dimension_numbers<[1], [0], [0], [1], [0, 0, 1, 1], [], []>} : vector<32x128xbf16>, vector<128x256xbf16>, vector<32x256xf32> -> vector<32x256xf32>
    %33 = arith.addf %25, %32 : vector<32x256xf32>
    %cst_30 = arith.constant dense<0.000000e+00> : vector<256xf32>
    %34 = vector.multi_reduction <add>, %33, %cst_30 [0] : vector<32x256xf32> to vector<256xf32>
    %35 = vector.shape_cast %34 : vector<256xf32> to vector<1x256xf32>
    %36 = arith.mulf %33, %33 : vector<32x256xf32>
    %cst_31 = arith.constant dense<0.000000e+00> : vector<256xf32>
    %37 = vector.multi_reduction <add>, %36, %cst_31 [0] : vector<32x256xf32> to vector<256xf32>
    %38 = vector.shape_cast %37 : vector<256xf32> to vector<1x256xf32>
    %c0_32 = arith.constant 0 : index
    %c0_33 = arith.constant 0 : index
    %39 = vector.load %arg5[%c0_32, %c0_33] : memref<256x16xf32, #tpu.memory_space<vmem>>, vector<256x16xf32>
    %cst_34 = arith.constant dense<0.000000e+00> : vector<1x16xf32>
    %40 = tpu.matmul %35, %39, %cst_34 {dimension_numbers = #tpu.dot_dimension_numbers<[1], [0], [0], [1], [0, 0, 1, 1], [], []>} : vector<1x256xf32>, vector<256x16xf32>, vector<1x16xf32> -> vector<1x16xf32>
    %cst_35 = arith.constant 0.001953125 : f32
    %41 = vector.broadcast %cst_35 : f32 to vector<1x16xf32>
    %42 = arith.mulf %40, %41 : vector<1x16xf32>
    %c0_36 = arith.constant 0 : index
    %c0_37 = arith.constant 0 : index
    %43 = vector.load %arg5[%c0_36, %c0_37] : memref<256x16xf32, #tpu.memory_space<vmem>>, vector<256x16xf32>
    %cst_38 = arith.constant dense<0.000000e+00> : vector<1x16xf32>
    %44 = tpu.matmul %38, %43, %cst_38 {dimension_numbers = #tpu.dot_dimension_numbers<[1], [0], [0], [1], [0, 0, 1, 1], [], []>} : vector<1x256xf32>, vector<256x16xf32>, vector<1x16xf32> -> vector<1x16xf32>
    %cst_39 = arith.constant 0.001953125 : f32
    %45 = vector.broadcast %cst_39 : f32 to vector<1x16xf32>
    %46 = arith.mulf %44, %45 : vector<1x16xf32>
    %47 = arith.mulf %42, %42 : vector<1x16xf32>
    %48 = arith.subf %46, %47 : vector<1x16xf32>
    %cst_40 = arith.constant 0.000000e+00 : f32
    %49 = vector.broadcast %cst_40 : f32 to vector<1x16xf32>
    %50 = arith.maximumf %48, %49 : vector<1x16xf32>
    %cst_41 = arith.constant 9.99999974E-6 : f32
    %51 = vector.broadcast %cst_41 : f32 to vector<1x16xf32>
    %52 = arith.addf %50, %51 : vector<1x16xf32>
    %53 = math.rsqrt %52 : vector<1x16xf32>
    %c0_42 = arith.constant 0 : index
    %c0_43 = arith.constant 0 : index
    %54 = vector.load %arg3[%c0_42, %c0_43] : memref<1x16xf32, #tpu.memory_space<vmem>>, vector<1x16xf32>
    %55 = arith.mulf %54, %53 : vector<1x16xf32>
    %c0_44 = arith.constant 0 : index
    %c0_45 = arith.constant 0 : index
    %56 = vector.load %arg4[%c0_44, %c0_45] : memref<1x16xf32, #tpu.memory_space<vmem>>, vector<1x16xf32>
    %57 = arith.mulf %42, %55 : vector<1x16xf32>
    %58 = arith.subf %56, %57 : vector<1x16xf32>
    %c0_46 = arith.constant 0 : index
    %c0_47 = arith.constant 0 : index
    %59 = vector.load %arg6[%c0_46, %c0_47] : memref<16x256xf32, #tpu.memory_space<vmem>>, vector<16x256xf32>
    %cst_48 = arith.constant dense<0.000000e+00> : vector<1x256xf32>
    %60 = tpu.matmul %55, %59, %cst_48 {dimension_numbers = #tpu.dot_dimension_numbers<[1], [0], [0], [1], [0, 0, 1, 1], [], []>} : vector<1x16xf32>, vector<16x256xf32>, vector<1x256xf32> -> vector<1x256xf32>
    %c0_49 = arith.constant 0 : index
    %c0_50 = arith.constant 0 : index
    %61 = vector.load %arg6[%c0_49, %c0_50] : memref<16x256xf32, #tpu.memory_space<vmem>>, vector<16x256xf32>
    %cst_51 = arith.constant dense<0.000000e+00> : vector<1x256xf32>
    %62 = tpu.matmul %58, %61, %cst_51 {dimension_numbers = #tpu.dot_dimension_numbers<[1], [0], [0], [1], [0, 0, 1, 1], [], []>} : vector<1x16xf32>, vector<16x256xf32>, vector<1x256xf32> -> vector<1x256xf32>
    %63 = vector.broadcast %60 : vector<1x256xf32> to vector<32x256xf32>
    %64 = arith.mulf %33, %63 : vector<32x256xf32>
    %65 = vector.broadcast %62 : vector<1x256xf32> to vector<32x256xf32>
    %66 = arith.addf %64, %65 : vector<32x256xf32>
    %cst_52 = arith.constant 0.000000e+00 : f32
    %67 = vector.broadcast %cst_52 : f32 to vector<32x256xf32>
    %68 = arith.maximumf %66, %67 : vector<32x256xf32>
    %cst_53 = arith.constant 0.000000e+00 : f32
    %69 = vector.broadcast %cst_53 : f32 to vector<16x256xf32>
    %c0_54 = arith.constant 0 : index
    %c0_55 = arith.constant 0 : index
    %c0_56 = arith.constant 0 : index
    %70 = vector.load %arg7[%c0_54, %c0_55, %c0_56] : memref<4x16x32xf32, #tpu.memory_space<vmem>>, vector<1x16x32xf32>
    %71 = vector.shape_cast %70 : vector<1x16x32xf32> to vector<16x32xf32>
    %cst_57 = arith.constant dense<0.000000e+00> : vector<16x256xf32>
    %72 = tpu.matmul %71, %68, %cst_57 {dimension_numbers = #tpu.dot_dimension_numbers<[1], [0], [0], [1], [0, 0, 1, 1], [], []>} : vector<16x32xf32>, vector<32x256xf32>, vector<16x256xf32> -> vector<16x256xf32>
    %73 = arith.truncf %72 : vector<16x256xf32> to vector<16x256xbf16>
    %c0_58 = arith.constant 0 : index
    %c0_59 = arith.constant 0 : index
    %c0_60 = arith.constant 0 : index
    %74 = vector.load %arg8[%c0_58, %c0_59, %c0_60] : memref<4x256x256xbf16, #tpu.memory_space<vmem>>, vector<1x256x256xbf16>
    %75 = vector.shape_cast %74 : vector<1x256x256xbf16> to vector<256x256xbf16>
    %cst_61 = arith.constant dense<0.000000e+00> : vector<16x256xf32>
    %76 = tpu.matmul %73, %75, %cst_61 {dimension_numbers = #tpu.dot_dimension_numbers<[1], [0], [0], [1], [0, 0, 1, 1], [], []>} : vector<16x256xbf16>, vector<256x256xbf16>, vector<16x256xf32> -> vector<16x256xf32>
    %77 = arith.addf %69, %76 : vector<16x256xf32>
    %c1_62 = arith.constant 1 : index
    %c0_63 = arith.constant 0 : index
    %c0_64 = arith.constant 0 : index
    %78 = vector.load %arg7[%c1_62, %c0_63, %c0_64] : memref<4x16x32xf32, #tpu.memory_space<vmem>>, vector<1x16x32xf32>
    %79 = vector.shape_cast %78 : vector<1x16x32xf32> to vector<16x32xf32>
    %cst_65 = arith.constant dense<0.000000e+00> : vector<16x256xf32>
    %80 = tpu.matmul %79, %68, %cst_65 {dimension_numbers = #tpu.dot_dimension_numbers<[1], [0], [0], [1], [0, 0, 1, 1], [], []>} : vector<16x32xf32>, vector<32x256xf32>, vector<16x256xf32> -> vector<16x256xf32>
    %81 = arith.truncf %80 : vector<16x256xf32> to vector<16x256xbf16>
    %c1_66 = arith.constant 1 : index
    %c0_67 = arith.constant 0 : index
    %c0_68 = arith.constant 0 : index
    %82 = vector.load %arg8[%c1_66, %c0_67, %c0_68] : memref<4x256x256xbf16, #tpu.memory_space<vmem>>, vector<1x256x256xbf16>
    %83 = vector.shape_cast %82 : vector<1x256x256xbf16> to vector<256x256xbf16>
    %cst_69 = arith.constant dense<0.000000e+00> : vector<16x256xf32>
    %84 = tpu.matmul %81, %83, %cst_69 {dimension_numbers = #tpu.dot_dimension_numbers<[1], [0], [0], [1], [0, 0, 1, 1], [], []>} : vector<16x256xbf16>, vector<256x256xbf16>, vector<16x256xf32> -> vector<16x256xf32>
    %85 = arith.addf %77, %84 : vector<16x256xf32>
    %c2_70 = arith.constant 2 : index
    %c0_71 = arith.constant 0 : index
    %c0_72 = arith.constant 0 : index
    %86 = vector.load %arg7[%c2_70, %c0_71, %c0_72] : memref<4x16x32xf32, #tpu.memory_space<vmem>>, vector<1x16x32xf32>
    %87 = vector.shape_cast %86 : vector<1x16x32xf32> to vector<16x32xf32>
    %cst_73 = arith.constant dense<0.000000e+00> : vector<16x256xf32>
    %88 = tpu.matmul %87, %68, %cst_73 {dimension_numbers = #tpu.dot_dimension_numbers<[1], [0], [0], [1], [0, 0, 1, 1], [], []>} : vector<16x32xf32>, vector<32x256xf32>, vector<16x256xf32> -> vector<16x256xf32>
    %89 = arith.truncf %88 : vector<16x256xf32> to vector<16x256xbf16>
    %c2_74 = arith.constant 2 : index
    %c0_75 = arith.constant 0 : index
    %c0_76 = arith.constant 0 : index
    %90 = vector.load %arg8[%c2_74, %c0_75, %c0_76] : memref<4x256x256xbf16, #tpu.memory_space<vmem>>, vector<1x256x256xbf16>
    %91 = vector.shape_cast %90 : vector<1x256x256xbf16> to vector<256x256xbf16>
    %cst_77 = arith.constant dense<0.000000e+00> : vector<16x256xf32>
    %92 = tpu.matmul %89, %91, %cst_77 {dimension_numbers = #tpu.dot_dimension_numbers<[1], [0], [0], [1], [0, 0, 1, 1], [], []>} : vector<16x256xbf16>, vector<256x256xbf16>, vector<16x256xf32> -> vector<16x256xf32>
    %93 = arith.addf %85, %92 : vector<16x256xf32>
    %c3_78 = arith.constant 3 : index
    %c0_79 = arith.constant 0 : index
    %c0_80 = arith.constant 0 : index
    %94 = vector.load %arg7[%c3_78, %c0_79, %c0_80] : memref<4x16x32xf32, #tpu.memory_space<vmem>>, vector<1x16x32xf32>
    %95 = vector.shape_cast %94 : vector<1x16x32xf32> to vector<16x32xf32>
    %cst_81 = arith.constant dense<0.000000e+00> : vector<16x256xf32>
    %96 = tpu.matmul %95, %68, %cst_81 {dimension_numbers = #tpu.dot_dimension_numbers<[1], [0], [0], [1], [0, 0, 1, 1], [], []>} : vector<16x32xf32>, vector<32x256xf32>, vector<16x256xf32> -> vector<16x256xf32>
    %97 = arith.truncf %96 : vector<16x256xf32> to vector<16x256xbf16>
    %c3_82 = arith.constant 3 : index
    %c0_83 = arith.constant 0 : index
    %c0_84 = arith.constant 0 : index
    %98 = vector.load %arg8[%c3_82, %c0_83, %c0_84] : memref<4x256x256xbf16, #tpu.memory_space<vmem>>, vector<1x256x256xbf16>
    %99 = vector.shape_cast %98 : vector<1x256x256xbf16> to vector<256x256xbf16>
    %cst_85 = arith.constant dense<0.000000e+00> : vector<16x256xf32>
    %100 = tpu.matmul %97, %99, %cst_85 {dimension_numbers = #tpu.dot_dimension_numbers<[1], [0], [0], [1], [0, 0, 1, 1], [], []>} : vector<16x256xbf16>, vector<256x256xbf16>, vector<16x256xf32> -> vector<16x256xf32>
    %101 = arith.addf %93, %100 : vector<16x256xf32>
    %cst_86 = arith.constant dense<0.000000e+00> : vector<256xf32>
    %102 = vector.multi_reduction <add>, %101, %cst_86 [0] : vector<16x256xf32> to vector<256xf32>
    %103 = vector.shape_cast %102 : vector<256xf32> to vector<1x256xf32>
    %104 = arith.mulf %101, %101 : vector<16x256xf32>
    %cst_87 = arith.constant dense<0.000000e+00> : vector<256xf32>
    %105 = vector.multi_reduction <add>, %104, %cst_87 [0] : vector<16x256xf32> to vector<256xf32>
    %106 = vector.shape_cast %105 : vector<256xf32> to vector<1x256xf32>
    %c0_88 = arith.constant 0 : index
    %c0_89 = arith.constant 0 : index
    %107 = vector.load %arg11[%c0_88, %c0_89] : memref<256x32xf32, #tpu.memory_space<vmem>>, vector<256x32xf32>
    %cst_90 = arith.constant dense<0.000000e+00> : vector<1x32xf32>
    %108 = tpu.matmul %103, %107, %cst_90 {dimension_numbers = #tpu.dot_dimension_numbers<[1], [0], [0], [1], [0, 0, 1, 1], [], []>} : vector<1x256xf32>, vector<256x32xf32>, vector<1x32xf32> -> vector<1x32xf32>
    %cst_91 = arith.constant 7.812500e-03 : f32
    %109 = vector.broadcast %cst_91 : f32 to vector<1x32xf32>
    %110 = arith.mulf %108, %109 : vector<1x32xf32>
    %c0_92 = arith.constant 0 : index
    %c0_93 = arith.constant 0 : index
    %111 = vector.load %arg11[%c0_92, %c0_93] : memref<256x32xf32, #tpu.memory_space<vmem>>, vector<256x32xf32>
    %cst_94 = arith.constant dense<0.000000e+00> : vector<1x32xf32>
    %112 = tpu.matmul %106, %111, %cst_94 {dimension_numbers = #tpu.dot_dimension_numbers<[1], [0], [0], [1], [0, 0, 1, 1], [], []>} : vector<1x256xf32>, vector<256x32xf32>, vector<1x32xf32> -> vector<1x32xf32>
    %cst_95 = arith.constant 7.812500e-03 : f32
    %113 = vector.broadcast %cst_95 : f32 to vector<1x32xf32>
    %114 = arith.mulf %112, %113 : vector<1x32xf32>
    %115 = arith.mulf %110, %110 : vector<1x32xf32>
    %116 = arith.subf %114, %115 : vector<1x32xf32>
    %cst_96 = arith.constant 0.000000e+00 : f32
    %117 = vector.broadcast %cst_96 : f32 to vector<1x32xf32>
    %118 = arith.maximumf %116, %117 : vector<1x32xf32>
    %cst_97 = arith.constant 9.99999974E-6 : f32
    %119 = vector.broadcast %cst_97 : f32 to vector<1x32xf32>
    %120 = arith.addf %118, %119 : vector<1x32xf32>
    %121 = math.rsqrt %120 : vector<1x32xf32>
    %c0_98 = arith.constant 0 : index
    %c0_99 = arith.constant 0 : index
    %122 = vector.load %arg9[%c0_98, %c0_99] : memref<1x32xf32, #tpu.memory_space<vmem>>, vector<1x32xf32>
    %123 = arith.mulf %122, %121 : vector<1x32xf32>
    %c0_100 = arith.constant 0 : index
    %c0_101 = arith.constant 0 : index
    %124 = vector.load %arg10[%c0_100, %c0_101] : memref<1x32xf32, #tpu.memory_space<vmem>>, vector<1x32xf32>
    %125 = arith.mulf %110, %123 : vector<1x32xf32>
    %126 = arith.subf %124, %125 : vector<1x32xf32>
    %c0_102 = arith.constant 0 : index
    %c0_103 = arith.constant 0 : index
    %127 = vector.load %arg12[%c0_102, %c0_103] : memref<32x256xf32, #tpu.memory_space<vmem>>, vector<32x256xf32>
    %cst_104 = arith.constant dense<0.000000e+00> : vector<1x256xf32>
    %128 = tpu.matmul %123, %127, %cst_104 {dimension_numbers = #tpu.dot_dimension_numbers<[1], [0], [0], [1], [0, 0, 1, 1], [], []>} : vector<1x32xf32>, vector<32x256xf32>, vector<1x256xf32> -> vector<1x256xf32>
    %c0_105 = arith.constant 0 : index
    %c0_106 = arith.constant 0 : index
    %129 = vector.load %arg12[%c0_105, %c0_106] : memref<32x256xf32, #tpu.memory_space<vmem>>, vector<32x256xf32>
    %cst_107 = arith.constant dense<0.000000e+00> : vector<1x256xf32>
    %130 = tpu.matmul %126, %129, %cst_107 {dimension_numbers = #tpu.dot_dimension_numbers<[1], [0], [0], [1], [0, 0, 1, 1], [], []>} : vector<1x32xf32>, vector<32x256xf32>, vector<1x256xf32> -> vector<1x256xf32>
    %131 = vector.broadcast %128 : vector<1x256xf32> to vector<16x256xf32>
    %132 = arith.mulf %101, %131 : vector<16x256xf32>
    %133 = vector.broadcast %130 : vector<1x256xf32> to vector<16x256xf32>
    %134 = arith.addf %132, %133 : vector<16x256xf32>
    %cst_108 = arith.constant 0.000000e+00 : f32
    %135 = vector.broadcast %cst_108 : f32 to vector<16x256xf32>
    %136 = arith.maximumf %134, %135 : vector<16x256xf32>
    %cst_109 = arith.constant 0.000000e+00 : f32
    %137 = vector.broadcast %cst_109 : f32 to vector<8x256xf32>
    %c0_110 = arith.constant 0 : index
    %c0_111 = arith.constant 0 : index
    %c0_112 = arith.constant 0 : index
    %138 = vector.load %arg13[%c0_110, %c0_111, %c0_112] : memref<4x8x16xf32, #tpu.memory_space<vmem>>, vector<1x8x16xf32>
    %139 = vector.shape_cast %138 : vector<1x8x16xf32> to vector<8x16xf32>
    %cst_113 = arith.constant dense<0.000000e+00> : vector<8x256xf32>
    %140 = tpu.matmul %139, %136, %cst_113 {dimension_numbers = #tpu.dot_dimension_numbers<[1], [0], [0], [1], [0, 0, 1, 1], [], []>} : vector<8x16xf32>, vector<16x256xf32>, vector<8x256xf32> -> vector<8x256xf32>
    %141 = arith.truncf %140 : vector<8x256xf32> to vector<8x256xbf16>
    %c0_114 = arith.constant 0 : index
    %c0_115 = arith.constant 0 : index
    %c0_116 = arith.constant 0 : index
    %142 = vector.load %arg14[%c0_114, %c0_115, %c0_116] : memref<4x256x256xbf16, #tpu.memory_space<vmem>>, vector<1x256x256xbf16>
    %143 = vector.shape_cast %142 : vector<1x256x256xbf16> to vector<256x256xbf16>
    %cst_117 = arith.constant dense<0.000000e+00> : vector<8x256xf32>
    %144 = tpu.matmul %141, %143, %cst_117 {dimension_numbers = #tpu.dot_dimension_numbers<[1], [0], [0], [1], [0, 0, 1, 1], [], []>} : vector<8x256xbf16>, vector<256x256xbf16>, vector<8x256xf32> -> vector<8x256xf32>
    %145 = arith.addf %137, %144 : vector<8x256xf32>
    %c1_118 = arith.constant 1 : index
    %c0_119 = arith.constant 0 : index
    %c0_120 = arith.constant 0 : index
    %146 = vector.load %arg13[%c1_118, %c0_119, %c0_120] : memref<4x8x16xf32, #tpu.memory_space<vmem>>, vector<1x8x16xf32>
    %147 = vector.shape_cast %146 : vector<1x8x16xf32> to vector<8x16xf32>
    %cst_121 = arith.constant dense<0.000000e+00> : vector<8x256xf32>
    %148 = tpu.matmul %147, %136, %cst_121 {dimension_numbers = #tpu.dot_dimension_numbers<[1], [0], [0], [1], [0, 0, 1, 1], [], []>} : vector<8x16xf32>, vector<16x256xf32>, vector<8x256xf32> -> vector<8x256xf32>
    %149 = arith.truncf %148 : vector<8x256xf32> to vector<8x256xbf16>
    %c1_122 = arith.constant 1 : index
    %c0_123 = arith.constant 0 : index
    %c0_124 = arith.constant 0 : index
    %150 = vector.load %arg14[%c1_122, %c0_123, %c0_124] : memref<4x256x256xbf16, #tpu.memory_space<vmem>>, vector<1x256x256xbf16>
    %151 = vector.shape_cast %150 : vector<1x256x256xbf16> to vector<256x256xbf16>
    %cst_125 = arith.constant dense<0.000000e+00> : vector<8x256xf32>
    %152 = tpu.matmul %149, %151, %cst_125 {dimension_numbers = #tpu.dot_dimension_numbers<[1], [0], [0], [1], [0, 0, 1, 1], [], []>} : vector<8x256xbf16>, vector<256x256xbf16>, vector<8x256xf32> -> vector<8x256xf32>
    %153 = arith.addf %145, %152 : vector<8x256xf32>
    %c2_126 = arith.constant 2 : index
    %c0_127 = arith.constant 0 : index
    %c0_128 = arith.constant 0 : index
    %154 = vector.load %arg13[%c2_126, %c0_127, %c0_128] : memref<4x8x16xf32, #tpu.memory_space<vmem>>, vector<1x8x16xf32>
    %155 = vector.shape_cast %154 : vector<1x8x16xf32> to vector<8x16xf32>
    %cst_129 = arith.constant dense<0.000000e+00> : vector<8x256xf32>
    %156 = tpu.matmul %155, %136, %cst_129 {dimension_numbers = #tpu.dot_dimension_numbers<[1], [0], [0], [1], [0, 0, 1, 1], [], []>} : vector<8x16xf32>, vector<16x256xf32>, vector<8x256xf32> -> vector<8x256xf32>
    %157 = arith.truncf %156 : vector<8x256xf32> to vector<8x256xbf16>
    %c2_130 = arith.constant 2 : index
    %c0_131 = arith.constant 0 : index
    %c0_132 = arith.constant 0 : index
    %158 = vector.load %arg14[%c2_130, %c0_131, %c0_132] : memref<4x256x256xbf16, #tpu.memory_space<vmem>>, vector<1x256x256xbf16>
    %159 = vector.shape_cast %158 : vector<1x256x256xbf16> to vector<256x256xbf16>
    %cst_133 = arith.constant dense<0.000000e+00> : vector<8x256xf32>
    %160 = tpu.matmul %157, %159, %cst_133 {dimension_numbers = #tpu.dot_dimension_numbers<[1], [0], [0], [1], [0, 0, 1, 1], [], []>} : vector<8x256xbf16>, vector<256x256xbf16>, vector<8x256xf32> -> vector<8x256xf32>
    %161 = arith.addf %153, %160 : vector<8x256xf32>
    %c3_134 = arith.constant 3 : index
    %c0_135 = arith.constant 0 : index
    %c0_136 = arith.constant 0 : index
    %162 = vector.load %arg13[%c3_134, %c0_135, %c0_136] : memref<4x8x16xf32, #tpu.memory_space<vmem>>, vector<1x8x16xf32>
    %163 = vector.shape_cast %162 : vector<1x8x16xf32> to vector<8x16xf32>
    %cst_137 = arith.constant dense<0.000000e+00> : vector<8x256xf32>
    %164 = tpu.matmul %163, %136, %cst_137 {dimension_numbers = #tpu.dot_dimension_numbers<[1], [0], [0], [1], [0, 0, 1, 1], [], []>} : vector<8x16xf32>, vector<16x256xf32>, vector<8x256xf32> -> vector<8x256xf32>
    %165 = arith.truncf %164 : vector<8x256xf32> to vector<8x256xbf16>
    %c3_138 = arith.constant 3 : index
    %c0_139 = arith.constant 0 : index
    %c0_140 = arith.constant 0 : index
    %166 = vector.load %arg14[%c3_138, %c0_139, %c0_140] : memref<4x256x256xbf16, #tpu.memory_space<vmem>>, vector<1x256x256xbf16>
    %167 = vector.shape_cast %166 : vector<1x256x256xbf16> to vector<256x256xbf16>
    %cst_141 = arith.constant dense<0.000000e+00> : vector<8x256xf32>
    %168 = tpu.matmul %165, %167, %cst_141 {dimension_numbers = #tpu.dot_dimension_numbers<[1], [0], [0], [1], [0, 0, 1, 1], [], []>} : vector<8x256xbf16>, vector<256x256xbf16>, vector<8x256xf32> -> vector<8x256xf32>
    %169 = arith.addf %161, %168 : vector<8x256xf32>
    %cst_142 = arith.constant dense<0.000000e+00> : vector<256xf32>
    %170 = vector.multi_reduction <add>, %169, %cst_142 [0] : vector<8x256xf32> to vector<256xf32>
    %171 = vector.shape_cast %170 : vector<256xf32> to vector<1x256xf32>
    %172 = arith.mulf %169, %169 : vector<8x256xf32>
    %cst_143 = arith.constant dense<0.000000e+00> : vector<256xf32>
    %173 = vector.multi_reduction <add>, %172, %cst_143 [0] : vector<8x256xf32> to vector<256xf32>
    %174 = vector.shape_cast %173 : vector<256xf32> to vector<1x256xf32>
    %c0_144 = arith.constant 0 : index
    %c0_145 = arith.constant 0 : index
    %175 = vector.load %arg17[%c0_144, %c0_145] : memref<256x64xf32, #tpu.memory_space<vmem>>, vector<256x64xf32>
    %cst_146 = arith.constant dense<0.000000e+00> : vector<1x64xf32>
    %176 = tpu.matmul %171, %175, %cst_146 {dimension_numbers = #tpu.dot_dimension_numbers<[1], [0], [0], [1], [0, 0, 1, 1], [], []>} : vector<1x256xf32>, vector<256x64xf32>, vector<1x64xf32> -> vector<1x64xf32>
    %cst_147 = arith.constant 3.125000e-02 : f32
    %177 = vector.broadcast %cst_147 : f32 to vector<1x64xf32>
    %178 = arith.mulf %176, %177 : vector<1x64xf32>
    %c0_148 = arith.constant 0 : index
    %c0_149 = arith.constant 0 : index
    %179 = vector.load %arg17[%c0_148, %c0_149] : memref<256x64xf32, #tpu.memory_space<vmem>>, vector<256x64xf32>
    %cst_150 = arith.constant dense<0.000000e+00> : vector<1x64xf32>
    %180 = tpu.matmul %174, %179, %cst_150 {dimension_numbers = #tpu.dot_dimension_numbers<[1], [0], [0], [1], [0, 0, 1, 1], [], []>} : vector<1x256xf32>, vector<256x64xf32>, vector<1x64xf32> -> vector<1x64xf32>
    %cst_151 = arith.constant 3.125000e-02 : f32
    %181 = vector.broadcast %cst_151 : f32 to vector<1x64xf32>
    %182 = arith.mulf %180, %181 : vector<1x64xf32>
    %183 = arith.mulf %178, %178 : vector<1x64xf32>
    %184 = arith.subf %182, %183 : vector<1x64xf32>
    %cst_152 = arith.constant 0.000000e+00 : f32
    %185 = vector.broadcast %cst_152 : f32 to vector<1x64xf32>
    %186 = arith.maximumf %184, %185 : vector<1x64xf32>
    %cst_153 = arith.constant 9.99999974E-6 : f32
    %187 = vector.broadcast %cst_153 : f32 to vector<1x64xf32>
    %188 = arith.addf %186, %187 : vector<1x64xf32>
    %189 = math.rsqrt %188 : vector<1x64xf32>
    %c0_154 = arith.constant 0 : index
    %c0_155 = arith.constant 0 : index
    %190 = vector.load %arg15[%c0_154, %c0_155] : memref<1x64xf32, #tpu.memory_space<vmem>>, vector<1x64xf32>
    %191 = arith.mulf %190, %189 : vector<1x64xf32>
    %c0_156 = arith.constant 0 : index
    %c0_157 = arith.constant 0 : index
    %192 = vector.load %arg16[%c0_156, %c0_157] : memref<1x64xf32, #tpu.memory_space<vmem>>, vector<1x64xf32>
    %193 = arith.mulf %178, %191 : vector<1x64xf32>
    %194 = arith.subf %192, %193 : vector<1x64xf32>
    %c0_158 = arith.constant 0 : index
    %c0_159 = arith.constant 0 : index
    %195 = vector.load %arg18[%c0_158, %c0_159] : memref<64x256xf32, #tpu.memory_space<vmem>>, vector<64x256xf32>
    %cst_160 = arith.constant dense<0.000000e+00> : vector<1x256xf32>
    %196 = tpu.matmul %191, %195, %cst_160 {dimension_numbers = #tpu.dot_dimension_numbers<[1], [0], [0], [1], [0, 0, 1, 1], [], []>} : vector<1x64xf32>, vector<64x256xf32>, vector<1x256xf32> -> vector<1x256xf32>
    %c0_161 = arith.constant 0 : index
    %c0_162 = arith.constant 0 : index
    %197 = vector.load %arg18[%c0_161, %c0_162] : memref<64x256xf32, #tpu.memory_space<vmem>>, vector<64x256xf32>
    %cst_163 = arith.constant dense<0.000000e+00> : vector<1x256xf32>
    %198 = tpu.matmul %194, %197, %cst_163 {dimension_numbers = #tpu.dot_dimension_numbers<[1], [0], [0], [1], [0, 0, 1, 1], [], []>} : vector<1x64xf32>, vector<64x256xf32>, vector<1x256xf32> -> vector<1x256xf32>
    %199 = vector.broadcast %196 : vector<1x256xf32> to vector<8x256xf32>
    %200 = arith.mulf %169, %199 : vector<8x256xf32>
    %201 = vector.broadcast %198 : vector<1x256xf32> to vector<8x256xf32>
    %202 = arith.addf %200, %201 : vector<8x256xf32>
    %cst_164 = arith.constant 0.000000e+00 : f32
    %203 = vector.broadcast %cst_164 : f32 to vector<8x256xf32>
    %204 = arith.maximumf %202, %203 : vector<8x256xf32>
    %cst_165 = arith.constant 0.000000e+00 : f32
    %205 = vector.broadcast %cst_165 : f32 to vector<2x1xf32>
    %c0_166 = arith.constant 0 : index
    %c0_167 = arith.constant 0 : index
    %c0_168 = arith.constant 0 : index
    %206 = vector.load %arg19[%c0_166, %c0_167, %c0_168] : memref<4x2x8xf32, #tpu.memory_space<vmem>>, vector<1x2x8xf32>
    %207 = vector.shape_cast %206 : vector<1x2x8xf32> to vector<2x8xf32>
    %cst_169 = arith.constant dense<0.000000e+00> : vector<2x256xf32>
    %208 = tpu.matmul %207, %204, %cst_169 {dimension_numbers = #tpu.dot_dimension_numbers<[1], [0], [0], [1], [0, 0, 1, 1], [], []>} : vector<2x8xf32>, vector<8x256xf32>, vector<2x256xf32> -> vector<2x256xf32>
    %209 = arith.truncf %208 : vector<2x256xf32> to vector<2x256xbf16>
    %c0_170 = arith.constant 0 : index
    %c0_171 = arith.constant 0 : index
    %c0_172 = arith.constant 0 : index
    %210 = vector.load %arg20[%c0_170, %c0_171, %c0_172] : memref<4x256x1xbf16, #tpu.memory_space<vmem>>, vector<1x256x1xbf16>
    %211 = vector.shape_cast %210 : vector<1x256x1xbf16> to vector<256x1xbf16>
    %cst_173 = arith.constant dense<0.000000e+00> : vector<2x1xf32>
    %212 = tpu.matmul %209, %211, %cst_173 {dimension_numbers = #tpu.dot_dimension_numbers<[1], [0], [0], [1], [0, 0, 1, 1], [], []>} : vector<2x256xbf16>, vector<256x1xbf16>, vector<2x1xf32> -> vector<2x1xf32>
    %213 = arith.addf %205, %212 : vector<2x1xf32>
    %c1_174 = arith.constant 1 : index
    %c0_175 = arith.constant 0 : index
    %c0_176 = arith.constant 0 : index
    %214 = vector.load %arg19[%c1_174, %c0_175, %c0_176] : memref<4x2x8xf32, #tpu.memory_space<vmem>>, vector<1x2x8xf32>
    %215 = vector.shape_cast %214 : vector<1x2x8xf32> to vector<2x8xf32>
    %cst_177 = arith.constant dense<0.000000e+00> : vector<2x256xf32>
    %216 = tpu.matmul %215, %204, %cst_177 {dimension_numbers = #tpu.dot_dimension_numbers<[1], [0], [0], [1], [0, 0, 1, 1], [], []>} : vector<2x8xf32>, vector<8x256xf32>, vector<2x256xf32> -> vector<2x256xf32>
    %217 = arith.truncf %216 : vector<2x256xf32> to vector<2x256xbf16>
    %c1_178 = arith.constant 1 : index
    %c0_179 = arith.constant 0 : index
    %c0_180 = arith.constant 0 : index
    %218 = vector.load %arg20[%c1_178, %c0_179, %c0_180] : memref<4x256x1xbf16, #tpu.memory_space<vmem>>, vector<1x256x1xbf16>
    %219 = vector.shape_cast %218 : vector<1x256x1xbf16> to vector<256x1xbf16>
    %cst_181 = arith.constant dense<0.000000e+00> : vector<2x1xf32>
    %220 = tpu.matmul %217, %219, %cst_181 {dimension_numbers = #tpu.dot_dimension_numbers<[1], [0], [0], [1], [0, 0, 1, 1], [], []>} : vector<2x256xbf16>, vector<256x1xbf16>, vector<2x1xf32> -> vector<2x1xf32>
    %221 = arith.addf %213, %220 : vector<2x1xf32>
    %c2_182 = arith.constant 2 : index
    %c0_183 = arith.constant 0 : index
    %c0_184 = arith.constant 0 : index
    %222 = vector.load %arg19[%c2_182, %c0_183, %c0_184] : memref<4x2x8xf32, #tpu.memory_space<vmem>>, vector<1x2x8xf32>
    %223 = vector.shape_cast %222 : vector<1x2x8xf32> to vector<2x8xf32>
    %cst_185 = arith.constant dense<0.000000e+00> : vector<2x256xf32>
    %224 = tpu.matmul %223, %204, %cst_185 {dimension_numbers = #tpu.dot_dimension_numbers<[1], [0], [0], [1], [0, 0, 1, 1], [], []>} : vector<2x8xf32>, vector<8x256xf32>, vector<2x256xf32> -> vector<2x256xf32>
    %225 = arith.truncf %224 : vector<2x256xf32> to vector<2x256xbf16>
    %c2_186 = arith.constant 2 : index
    %c0_187 = arith.constant 0 : index
    %c0_188 = arith.constant 0 : index
    %226 = vector.load %arg20[%c2_186, %c0_187, %c0_188] : memref<4x256x1xbf16, #tpu.memory_space<vmem>>, vector<1x256x1xbf16>
    %227 = vector.shape_cast %226 : vector<1x256x1xbf16> to vector<256x1xbf16>
    %cst_189 = arith.constant dense<0.000000e+00> : vector<2x1xf32>
    %228 = tpu.matmul %225, %227, %cst_189 {dimension_numbers = #tpu.dot_dimension_numbers<[1], [0], [0], [1], [0, 0, 1, 1], [], []>} : vector<2x256xbf16>, vector<256x1xbf16>, vector<2x1xf32> -> vector<2x1xf32>
    %229 = arith.addf %221, %228 : vector<2x1xf32>
    %c3_190 = arith.constant 3 : index
    %c0_191 = arith.constant 0 : index
    %c0_192 = arith.constant 0 : index
    %230 = vector.load %arg19[%c3_190, %c0_191, %c0_192] : memref<4x2x8xf32, #tpu.memory_space<vmem>>, vector<1x2x8xf32>
    %231 = vector.shape_cast %230 : vector<1x2x8xf32> to vector<2x8xf32>
    %cst_193 = arith.constant dense<0.000000e+00> : vector<2x256xf32>
    %232 = tpu.matmul %231, %204, %cst_193 {dimension_numbers = #tpu.dot_dimension_numbers<[1], [0], [0], [1], [0, 0, 1, 1], [], []>} : vector<2x8xf32>, vector<8x256xf32>, vector<2x256xf32> -> vector<2x256xf32>
    %233 = arith.truncf %232 : vector<2x256xf32> to vector<2x256xbf16>
    %c3_194 = arith.constant 3 : index
    %c0_195 = arith.constant 0 : index
    %c0_196 = arith.constant 0 : index
    %234 = vector.load %arg20[%c3_194, %c0_195, %c0_196] : memref<4x256x1xbf16, #tpu.memory_space<vmem>>, vector<1x256x1xbf16>
    %235 = vector.shape_cast %234 : vector<1x256x1xbf16> to vector<256x1xbf16>
    %cst_197 = arith.constant dense<0.000000e+00> : vector<2x1xf32>
    %236 = tpu.matmul %233, %235, %cst_197 {dimension_numbers = #tpu.dot_dimension_numbers<[1], [0], [0], [1], [0, 0, 1, 1], [], []>} : vector<2x256xbf16>, vector<256x1xbf16>, vector<2x1xf32> -> vector<2x1xf32>
    %237 = arith.addf %229, %236 : vector<2x1xf32>
    %c0_198 = arith.constant 0 : index
    %c0_199 = arith.constant 0 : index
    %238 = vector.load %arg21[%c0_198, %c0_199] : memref<1x1xf32, #tpu.memory_space<vmem>>, vector<1x1xf32>
    %239 = vector.broadcast %238 : vector<1x1xf32> to vector<2x1xf32>
    %240 = arith.addf %237, %239 : vector<2x1xf32>
    %c0_200 = arith.constant 0 : index
    %c0_201 = arith.constant 0 : index
    %241 = vector.load %arg22[%c0_200, %c0_201] : memref<2x1xf32, #tpu.memory_space<vmem>>, vector<2x1xf32>
    tpu.vector_store %arg22[%c0_200, %c0_201], %240 {strides = array<i32>} : memref<2x1xf32, #tpu.memory_space<vmem>>, vector<2x1xf32>,
    return
  }
}

</mosaic_0001>

<llo_original>
// kernel: discriminator_forward.1
$region0: #{discriminator_forward.1}
  #allocation0 [shape = 'u32[]', space=smem, size = 0x4, offset = 0x4, fixed_abs, tag = 'smem constant byte address 0x4 - core index']
  #allocation1 [shape = 'u32[144,128]{1,0:T(1,128)}', space=vmem, size = 0x12000, scoped, tag = 'internal scratch']
  #allocation2 [shape = 'f32[1,1]{1,0:T(1,128)S(1)}', space=vmem, size = 0x200, scoped, tag = 'scoped memory for discriminator_forward.1']
  %s0 = inlined_call_operand.vmem [shape: f32[64,128], index: 0, kind: input, shape index: {}]
  %s1 = inlined_call_operand.vmem [shape: f32[4,32,64], index: 1, kind: input, shape index: {}]
  %s2 = inlined_call_operand.vmem [shape: bf16[4,128,256], index: 2, kind: input, shape index: {}]
  %s3 = inlined_call_operand.vmem [shape: f32[1,16], index: 3, kind: input, shape index: {}]
  %s4 = inlined_call_operand.vmem [shape: f32[1,16], index: 4, kind: input, shape index: {}]
  %s5 = inlined_call_operand.vmem [shape: f32[256,16], index: 5, kind: input, shape index: {}]
  %s6 = inlined_call_operand.hbm [shape: f32[16,256], index: 6, kind: input, shape index: {}]
  %s7 = inlined_call_operand.hbm [shape: f32[4,16,32], index: 7, kind: input, shape index: {}]
  %s8 = inlined_call_operand.vmem [shape: bf16[4,256,256], index: 8, kind: input, shape index: {}]
  %s9 = inlined_call_operand.vmem [shape: f32[1,32], index: 9, kind: input, shape index: {}]
  %s10 = inlined_call_operand.hbm [shape: f32[1,32], index: 10, kind: input, shape index: {}]
  %s11 = inlined_call_operand.vmem [shape: f32[256,32], index: 11, kind: input, shape index: {}]
  %s12 = inlined_call_operand.hbm [shape: f32[32,256], index: 12, kind: input, shape index: {}]
  %s13 = inlined_call_operand.hbm [shape: f32[4,8,16], index: 13, kind: input, shape index: {}]
  %s14 = inlined_call_operand.vmem [shape: bf16[4,256,256], index: 14, kind: input, shape index: {}]
  %s15 = inlined_call_operand.vmem [shape: f32[1,64], index: 15, kind: input, shape index: {}]
  %s16 = inlined_call_operand.vmem [shape: f32[1,64], index: 16, kind: input, shape index: {}]
  %s17 = inlined_call_operand.vmem [shape: f32[256,64], index: 17, kind: input, shape index: {}]
  %s18 = inlined_call_operand.vmem [shape: f32[64,256], index: 18, kind: input, shape index: {}]
  %s19 = inlined_call_operand.vmem [shape: f32[4,2,8], index: 19, kind: input, shape index: {}]
  %s20 = inlined_call_operand.vmem [shape: bf16[4,256,1], index: 20, kind: input, shape index: {}]
  %s21 = inlined_call_operand.<no memory space> [shape: f32[1,1], index: 21, kind: input, shape index: {}]
  %s22 = inlined_call_operand.vmem [shape: f32[2,1], index: 22, kind: output, shape index: {}]
  %s23 = sld [smem:[#allocation0]]
  $region118: #{discriminator_forward.1} parent=0
    _
  %s25 = ssub.s32 1, %s23
  %s26 = scalar_select 0, %s25, %s23
  %v27 = vstv %s21
  %28 = vst [vmem:[#allocation2] sm:$0x1] %v27
  $region1: #{discriminator_forward.1} parent=0
    #allocation3 [shape = 'u8[16384]{0}', space=vmem, size = 0x4000, scoped, tag = 'input window, operand 6, single buffered']
    #allocation4 [shape = 's32[1]{0}', space=sflag, size = 0x4, scoped, tag = 'scoped memory for discriminator_forward.1']
    #allocation5 [shape = 'u8[32768]{0}', space=vmem, size = 0x8000, scoped, tag = 'input window, operand 7, single buffered']
    #allocation6 [shape = 's32[1]{0}', space=sflag, size = 0x4, scoped, tag = 'scoped memory for discriminator_forward.1']
    #allocation7 [shape = 'u8[512]{0}', space=vmem, size = 0x400, scoped, tag = 'input window, operand 10, single buffered']
    #allocation8 [shape = 'u8[32768]{0}', space=vmem, size = 0x8000, scoped, tag = 'input window, operand 12, single buffered']
    #allocation9 [shape = 's32[1]{0}', space=sflag, size = 0x4, scoped, tag = 'scoped memory for discriminator_forward.1']
    #allocation10 [shape = 'u8[16384]{0}', space=vmem, size = 0x4000, scoped, tag = 'input window, operand 13, single buffered']
    %29 = vsyncpa [#allocation4], 0
    %30 = vsyncpa [#allocation6], 0
    %31 = vsyncpa [#allocation9], 0
    // Predicated region
    $region2: #{discriminator_forward.1} parent=1 // pred_check
      _
    $region3: #{discriminator_forward.1} parent=1 // pred_check_branch
      %33 = sbr.rel (0) target = $region5
    $region4: #{discriminator_forward.1} parent=1 // pred_region
      _
    $region5: #{discriminator_forward.1} parent=1 // pred_fallthru
      _
    // Predicated region
    $region6: #{discriminator_forward.1} parent=1 // pred_check
      _
    $region7: #{discriminator_forward.1} parent=1 // pred_check_branch
      %35 = sbr.rel (0) target = $region9
    $region8: #{discriminator_forward.1} parent=1 // pred_region
      _
    $region9: #{discriminator_forward.1} parent=1 // pred_fallthru
      _
    // Predicated region
    $region10: #{discriminator_forward.1} parent=1 // pred_check
      _
    $region11: #{discriminator_forward.1} parent=1 // pred_check_branch
      %37 = sbr.rel (0) target = $region13
    $region12: #{discriminator_forward.1} parent=1 // pred_region
      _
    $region13: #{discriminator_forward.1} parent=1 // pred_fallthru
      _
    // Predicated region
    $region14: #{discriminator_forward.1} parent=1 // pred_check
      _
    $region15: #{discriminator_forward.1} parent=1 // pred_check_branch
      %39 = sbr.rel (0) target = $region17
    $region16: #{discriminator_forward.1} parent=1 // pred_region
      _
    $region17: #{discriminator_forward.1} parent=1 // pred_fallthru
      _
    // Predicated region
    $region18: #{discriminator_forward.1} parent=1 // pred_check
      _
    $region19: #{discriminator_forward.1} parent=1 // pred_check_branch
      %41 = sbr.rel (0) target = $region21
    $region20: #{discriminator_forward.1} parent=1 // pred_region
      _
    $region21: #{discriminator_forward.1} parent=1 // pred_fallthru
      _
    // Predicated region
    $region22: #{discriminator_forward.1} parent=1 // pred_check
      _
    $region23: #{discriminator_forward.1} parent=1 // pred_check_branch
      %43 = sbr.rel (0) target = $region25
    $region24: #{discriminator_forward.1} parent=1 // pred_region
      _
    $region25: #{discriminator_forward.1} parent=1 // pred_fallthru
      _
    // Predicated region
    $region26: #{discriminator_forward.1} parent=1 // pred_check
      _
    $region27: #{discriminator_forward.1} parent=1 // pred_check_branch
      %45 = sbr.rel (0) target = $region29
    $region28: #{discriminator_forward.1} parent=1 // pred_region
      %s47 = ssub.s32 512, 512
      %48 = vsyncadd [#allocation4], %s47
      %s49 = sshll.u32 [#allocation3], 4
      %s50 = int_to_ptr.vmem [resolvable:$true] %s49
      %55 = dma.hbm_to_vmem [thread:$0]  %s6, 512, %s50, [#allocation4], 256, 256, 16
    $region29: #{discriminator_forward.1} parent=1 // pred_fallthru
      _
    // Predicated region
    $region30: #{discriminator_forward.1} parent=1 // pred_check
      _
    $region31: #{discriminator_forward.1} parent=1 // pred_check_branch
      %57 = sbr.rel (0) target = $region33
    $region32: #{discriminator_forward.1} parent=1 // pred_region
      %s59 = ssub.s32 1024, 1024
      %60 = vsyncadd [#allocation6], %s59
      %s61 = sshll.u32 [#allocation5], 4
      %s62 = int_to_ptr.vmem [resolvable:$true] %s61
      %67 = dma.hbm_to_vmem [thread:$0]  %s7, 1024, %s62, [#allocation6], 128, 128, 8
    $region33: #{discriminator_forward.1} parent=1 // pred_fallthru
      _
    // Predicated region
    $region34: #{discriminator_forward.1} parent=1 // pred_check
      _
    $region35: #{discriminator_forward.1} parent=1 // pred_check_branch
      %69 = sbr.rel (0) target = $region37
    $region36: #{discriminator_forward.1} parent=1 // pred_region
      _
    $region37: #{discriminator_forward.1} parent=1 // pred_fallthru
      _
    // Predicated region
    $region38: #{discriminator_forward.1} parent=1 // pred_check
      _
    $region39: #{discriminator_forward.1} parent=1 // pred_check_branch
      %71 = sbr.rel (0) target = $region41
    $region40: #{discriminator_forward.1} parent=1 // pred_region
      _
    $region41: #{discriminator_forward.1} parent=1 // pred_fallthru
      _
    // Predicated region
    $region42: #{discriminator_forward.1} parent=1 // pred_check
      _
    $region43: #{discriminator_forward.1} parent=1 // pred_check_branch
      %73 = sbr.rel (0) target = $region45
    $region44: #{discriminator_forward.1} parent=1 // pred_region
      %s75 = ssub.s32 16, 16
      %76 = vsyncadd [#allocation6], %s75
      %s78 = sshll.u32 [#allocation7], 4
      %s79 = int_to_ptr.vmem [resolvable:$true] %s78
      %81 = dma.hbm_to_vmem [thread:$0]  %s10, 16, %s79, [#allocation6]
    $region45: #{discriminator_forward.1} parent=1 // pred_fallthru
      _
    // Predicated region
    $region46: #{discriminator_forward.1} parent=1 // pred_check
      _
    $region47: #{discriminator_forward.1} parent=1 // pred_check_branch
      %83 = sbr.rel (0) target = $region49
    $region48: #{discriminator_forward.1} parent=1 // pred_region
      _
    $region49: #{discriminator_forward.1} parent=1 // pred_fallthru
      _
    // Predicated region
    $region50: #{discriminator_forward.1} parent=1 // pred_check
      _
    $region51: #{discriminator_forward.1} parent=1 // pred_check_branch
      %85 = sbr.rel (0) target = $region53
    $region52: #{discriminator_forward.1} parent=1 // pred_region
      %s87 = ssub.s32 1024, 1024
      %88 = vsyncadd [#allocation9], %s87
      %s89 = sshll.u32 [#allocation8], 4
      %s90 = int_to_ptr.vmem [resolvable:$true] %s89
      %95 = dma.hbm_to_vmem [thread:$0]  %s12, 1024, %s90, [#allocation9], 256, 256, 16
    $region53: #{discriminator_forward.1} parent=1 // pred_fallthru
      _
    // Predicated region
    $region54: #{discriminator_forward.1} parent=1 // pred_check
      _
    $region55: #{discriminator_forward.1} parent=1 // pred_check_branch
      %97 = sbr.rel (0) target = $region57
    $region56: #{discriminator_forward.1} parent=1 // pred_region
      %s99 = ssub.s32 512, 512
      %100 = vsyncadd [#allocation9], %s99
      %s101 = sshll.u32 [#allocation10], 4
      %s102 = int_to_ptr.vmem [resolvable:$true] %s101
      %107 = dma.hbm_to_vmem [thread:$0]  %s13, 512, %s102, [#allocation9], 128, 128, 8
    $region57: #{discriminator_forward.1} parent=1 // pred_fallthru
      _
    // Predicated region
    $region58: #{discriminator_forward.1} parent=1 // pred_check
      _
    $region59: #{discriminator_forward.1} parent=1 // pred_check_branch
      %109 = sbr.rel (0) target = $region61
    $region60: #{discriminator_forward.1} parent=1 // pred_region
      _
    $region61: #{discriminator_forward.1} parent=1 // pred_fallthru
      _
    // Predicated region
    $region62: #{discriminator_forward.1} parent=1 // pred_check
      _
    $region63: #{discriminator_forward.1} parent=1 // pred_check_branch
      %111 = sbr.rel (0) target = $region65
    $region64: #{discriminator_forward.1} parent=1 // pred_region
      _
    $region65: #{discriminator_forward.1} parent=1 // pred_fallthru
      _
    // Predicated region
    $region66: #{discriminator_forward.1} parent=1 // pred_check
      _
    $region67: #{discriminator_forward.1} parent=1 // pred_check_branch
      %113 = sbr.rel (0) target = $region69
    $region68: #{discriminator_forward.1} parent=1 // pred_region
      _
    $region69: #{discriminator_forward.1} parent=1 // pred_fallthru
      _
    // Predicated region
    $region70: #{discriminator_forward.1} parent=1 // pred_check
      _
    $region71: #{discriminator_forward.1} parent=1 // pred_check_branch
      %115 = sbr.rel (0) target = $region73
    $region72: #{discriminator_forward.1} parent=1 // pred_region
      _
    $region73: #{discriminator_forward.1} parent=1 // pred_fallthru
      _
    // Predicated region
    $region74: #{discriminator_forward.1} parent=1 // pred_check
      _
    $region75: #{discriminator_forward.1} parent=1 // pred_check_branch
      %117 = sbr.rel (0) target = $region77
    $region76: #{discriminator_forward.1} parent=1 // pred_region
      _
    $region77: #{discriminator_forward.1} parent=1 // pred_fallthru
      _
    // Predicated region
    $region78: #{discriminator_forward.1} parent=1 // pred_check
      _
    $region79: #{discriminator_forward.1} parent=1 // pred_check_branch
      %119 = sbr.rel (0) target = $region81
    $region80: #{discriminator_forward.1} parent=1 // pred_region
      _
    $region81: #{discriminator_forward.1} parent=1 // pred_fallthru
      _
    // Predicated region
    $region82: #{discriminator_forward.1} parent=1 // pred_check
      _
    $region83: #{discriminator_forward.1} parent=1 // pred_check_branch
      %121 = sbr.rel (0) target = $region85
    $region84: #{discriminator_forward.1} parent=1 // pred_region
      _
    $region85: #{discriminator_forward.1} parent=1 // pred_fallthru
      _
    // Predicated region
    $region86: #{discriminator_forward.1} parent=1 // pred_check
      _
    $region87: #{discriminator_forward.1} parent=1 // pred_check_branch
      %123 = sbr.rel (0) target = $region89
    $region88: #{discriminator_forward.1} parent=1 // pred_region
      _
    $region89: #{discriminator_forward.1} parent=1 // pred_fallthru
      _
    // Predicated region
    $region90: #{discriminator_forward.1} parent=1 // pred_check
      _
    $region91: #{discriminator_forward.1} parent=1 // pred_check_branch
      %125 = sbr.rel (0) target = $region93
    $region92: #{discriminator_forward.1} parent=1 // pred_region
      %126 = dma.done [#allocation4], 512
    $region93: #{discriminator_forward.1} parent=1 // pred_fallthru
      _
    // Predicated region
    $region94: #{discriminator_forward.1} parent=1 // pred_check
      _
    $region95: #{discriminator_forward.1} parent=1 // pred_check_branch
      %128 = sbr.rel (0) target = $region97
    $region96: #{discriminator_forward.1} parent=1 // pred_region
      %129 = dma.done [#allocation6], 1024
    $region97: #{discriminator_forward.1} parent=1 // pred_fallthru
      _
    // Predicated region
    $region98: #{discriminator_forward.1} parent=1 // pred_check
      _
    $region99: #{discriminator_forward.1} parent=1 // pred_check_branch
      %131 = sbr.rel (0) target = $region101
    $region100: #{discriminator_forward.1} parent=1 // pred_region
      %132 = dma.done [#allocation6], 16
    $region101: #{discriminator_forward.1} parent=1 // pred_fallthru
      _
    // Predicated region
    $region102: #{discriminator_forward.1} parent=1 // pred_check
      _
    $region103: #{discriminator_forward.1} parent=1 // pred_check_branch
      %134 = sbr.rel (0) target = $region105
    $region104: #{discriminator_forward.1} parent=1 // pred_region
      %135 = dma.done [#allocation9], 1024
    $region105: #{discriminator_forward.1} parent=1 // pred_fallthru
      _
    // Predicated region
    $region106: #{discriminator_forward.1} parent=1 // pred_check
      _
    $region107: #{discriminator_forward.1} parent=1 // pred_check_branch
      %137 = sbr.rel (0) target = $region109
    $region108: #{discriminator_forward.1} parent=1 // pred_region
      %138 = dma.done [#allocation9], 512
    $region109: #{discriminator_forward.1} parent=1 // pred_fallthru
      _
    %v140 = vld [vmem:[%s0] sm:$0xff]
    %v141 = vld [vmem:[%s0 + $0x8] sm:$0xff]
    %v142 = vld [vmem:[%s0 + $0x10] sm:$0xff]
    %v143 = vld [vmem:[%s0 + $0x18] sm:$0xff]
    %v144 = vld [vmem:[%s0 + $0x20] sm:$0xff]
    %v145 = vld [vmem:[%s0 + $0x28] sm:$0xff]
    %v146 = vld [vmem:[%s0 + $0x30] sm:$0xff]
    %v147 = vld [vmem:[%s0 + $0x38] sm:$0xff]
    %v148 = vld [vmem:[%s1] sm:$0xff]
    %v149 = vld [vmem:[%s1 + $0x8] sm:$0xff]
    %v150 = vld [vmem:[%s1 + $0x10] sm:$0xff]
    %v151 = vld [vmem:[%s1 + $0x18] sm:$0xff]
    %vm152 = vcmask 523264
    %v154 = vsel %vm152, %v148, 0
    %v157 = vsel %vm152, %v149, 0
    %v160 = vsel %vm152, %v150, 0
    %v163 = vsel %vm152, %v151, 0
    %165 = vmatprep.subr.mxu0 0.0
    %166 = vmatpush1.msra.mxu0 %v140
    %167 = vmatprep.subr.mxu0 0.0
    %168 = vmatpush1.msra.mxu0 %v141
    %169 = vmatprep.subr.mxu0 0.0
    %170 = vmatpush1.msra.mxu0 %v142
    %171 = vmatprep.subr.mxu0 0.0
    %172 = vmatpush1.msra.mxu0 %v143
    %173 = vmatprep.subr.mxu0 0.0
    %174 = vmatpush1.msra.mxu0 %v144
    %175 = vmatprep.subr.mxu0 0.0
    %176 = vmatpush1.msra.mxu0 %v145
    %177 = vmatprep.subr.mxu0 0.0
    %178 = vmatpush1.msra.mxu0 %v146
    %179 = vmatprep.subr.mxu0 0.0
    %180 = vmatpush1.msra.mxu0 %v147
    %181 = vmatprep.subr.mxu0 0.0
    %182 = vmatpush1.msra.mxu0 0.0
    %183 = vmatprep.subr.mxu0 0.0
    %184 = vmatpush1.msra.mxu0 0.0
    %185 = vmatprep.subr.mxu0 0.0
    %186 = vmatpush1.msra.mxu0 0.0
    %187 = vmatprep.subr.mxu0 0.0
    %188 = vmatpush1.msra.mxu0 0.0
    %189 = vmatprep.subr.mxu0 0.0
    %190 = vmatpush1.msra.mxu0 0.0
    %191 = vmatprep.subr.mxu0 0.0
    %192 = vmatpush1.msra.mxu0 0.0
    %193 = vmatprep.subr.mxu0 0.0
    %194 = vmatpush1.msra.mxu0 0.0
    %195 = vmatprep.subr.mxu0 0.0
    %196 = vmatpush1.msra.mxu0 0.0
    %197 = vmatprep.subr.mxu0 0.0
    %198 = vmatpush1.msra.mxu0 0.0
    %199 = vmatprep.subr.mxu0 0.0
    %200 = vmatpush1.msra.mxu0 0.0
    %201 = vmatprep.subr.mxu0 0.0
    %202 = vmatpush1.msra.mxu0 0.0
    %203 = vmatprep.subr.mxu0 0.0
    %204 = vmatpush1.msra.mxu0 0.0
    %205 = vmatprep.subr.mxu0 0.0
    %206 = vmatpush1.msra.mxu0 0.0
    %207 = vmatprep.subr.mxu0 0.0
    %208 = vmatpush1.msra.mxu0 0.0
    %209 = vmatprep.subr.mxu0 0.0
    %210 = vmatpush1.msra.mxu0 0.0
    %211 = vmatprep.subr.mxu0 0.0
    %212 = vmatpush1.msra.mxu0 0.0
    %213 = vmatprep.subr.mxu0 0.0
    %214 = vmatpush1.msra.mxu0 0.0
    %215 = vmatprep.subr.mxu0 0.0
    %216 = vmatpush1.msra.mxu0 0.0
    %217 = vmatprep.subr.mxu0 0.0
    %218 = vmatpush1.msra.mxu0 0.0
    %219 = vmatprep.subr.mxu0 0.0
    %220 = vmatpush1.msra.mxu0 0.0
    %221 = vmatprep.subr.mxu0 0.0
    %222 = vmatpush1.msra.mxu0 0.0
    %223 = vmatprep.subr.mxu0 0.0
    %224 = vmatpush1.msra.mxu0 0.0
    %225 = vmatprep.subr.mxu0 0.0
    %226 = vmatpush1.msra.mxu0 0.0
    %227 = vmatprep.subr.mxu0 0.0
    %228 = vmatpush1.msra.mxu0 0.0
    %229 = vmatprep.mubr.f32.mxu0 0.0
    %230 = vmatmul.mubr.f32.gmra.mrb[0].mxu0 %v154
    %v231 = vpop.f32.mrb[0].mxu0
    %v232 = vadd.f32 0.0, %v231
    %v233 = vpop.f32.mrb[0].mxu0
    %234 = vmatprep.mubr.f32.mxu0 0.0
    %235 = vmatmul.mubr.f32.gmra.mrb[0].mxu0 %v157
    %v236 = vpop.f32.mrb[0].mxu0
    %v237 = vadd.f32 0.0, %v236
    %v238 = vpop.f32.mrb[0].mxu0
    %239 = vmatprep.mubr.f32.mxu0 0.0
    %240 = vmatmul.mubr.f32.gmra.mrb[0].mxu0 %v160
    %v241 = vpop.f32.mrb[0].mxu0
    %v242 = vadd.f32 0.0, %v241
    %v243 = vpop.f32.mrb[0].mxu0
    %244 = vmatprep.mubr.f32.mxu0 0.0
    %245 = vmatmul.mubr.f32.gmra.mrb[0].mxu0 %v163
    %v246 = vpop.f32.mrb[0].mxu0
    %v247 = vadd.f32 0.0, %v246
    %v248 = vpop.f32.mrb[0].mxu0
    %249 = vdwg.mxu0
    %v250 = vpack.c.bf16 %v237, %v232
    %v251 = vpack.c.bf16 %v247, %v242
    %v252 = vld [vmem:[%s2] sm:$0xff]
    %v253 = vld [vmem:[%s2 + $0x8] sm:$0xff]
    %v254 = vld [vmem:[%s2 + $0x10] sm:$0xff]
    %v255 = vld [vmem:[%s2 + $0x18] sm:$0xff]
    %v256 = vld [vmem:[%s2 + $0x20] sm:$0xff]
    %v257 = vld [vmem:[%s2 + $0x28] sm:$0xff]
    %v258 = vld [vmem:[%s2 + $0x30] sm:$0xff]
    %v259 = vld [vmem:[%s2 + $0x38] sm:$0xff]
    %v260 = vld [vmem:[%s2 + $0x40] sm:$0xff]
    %v261 = vld [vmem:[%s2 + $0x48] sm:$0xff]
    %v262 = vld [vmem:[%s2 + $0x50] sm:$0xff]
    %v263 = vld [vmem:[%s2 + $0x58] sm:$0xff]
    %v264 = vld [vmem:[%s2 + $0x60] sm:$0xff]
    %v265 = vld [vmem:[%s2 + $0x68] sm:$0xff]
    %v266 = vld [vmem:[%s2 + $0x70] sm:$0xff]
    %v267 = vld [vmem:[%s2 + $0x78] sm:$0xff]
    %s268 = scalar_lea.vmem %s1, 32
    %v269 = vld [vmem:[%s268] sm:$0xff]
    %v270 = vld [vmem:[%s268 + $0x8] sm:$0xff]
    %v271 = vld [vmem:[%s268 + $0x10] sm:$0xff]
    %v272 = vld [vmem:[%s268 + $0x18] sm:$0xff]
    %v274 = vsel %vm152, %v269, 0
    %v277 = vsel %vm152, %v270, 0
    %v280 = vsel %vm152, %v271, 0
    %v283 = vsel %vm152, %v272, 0
    %285 = vmatprep.subr.mxu0 0.0
    %286 = vmatpush1.msra.mxu0 %v140
    %287 = vmatprep.subr.mxu0 0.0
    %288 = vmatpush1.msra.mxu0 %v141
    %289 = vmatprep.subr.mxu0 0.0
    %290 = vmatpush1.msra.mxu0 %v142
    %291 = vmatprep.subr.mxu0 0.0
    %292 = vmatpush1.msra.mxu0 %v143
    %293 = vmatprep.subr.mxu0 0.0
    %294 = vmatpush1.msra.mxu0 %v144
    %295 = vmatprep.subr.mxu0 0.0
    %296 = vmatpush1.msra.mxu0 %v145
    %297 = vmatprep.subr.mxu0 0.0
    %298 = vmatpush1.msra.mxu0 %v146
    %299 = vmatprep.subr.mxu0 0.0
    %300 = vmatpush1.msra.mxu0 %v147
    %301 = vmatprep.subr.mxu0 0.0
    %302 = vmatpush1.msra.mxu0 0.0
    %303 = vmatprep.subr.mxu0 0.0
    %304 = vmatpush1.msra.mxu0 0.0
    %305 = vmatprep.subr.mxu0 0.0
    %306 = vmatpush1.msra.mxu0 0.0
    %307 = vmatprep.subr.mxu0 0.0
    %308 = vmatpush1.msra.mxu0 0.0
    %309 = vmatprep.subr.mxu0 0.0
    %310 = vmatpush1.msra.mxu0 0.0
    %311 = vmatprep.subr.mxu0 0.0
    %312 = vmatpush1.msra.mxu0 0.0
    %313 = vmatprep.subr.mxu0 0.0
    %314 = vmatpush1.msra.mxu0 0.0
    %315 = vmatprep.subr.mxu0 0.0
    %316 = vmatpush1.msra.mxu0 0.0
    %317 = vmatprep.subr.mxu0 0.0
    %318 = vmatpush1.msra.mxu0 0.0
    %319 = vmatprep.subr.mxu0 0.0
    %320 = vmatpush1.msra.mxu0 0.0
    %321 = vmatprep.subr.mxu0 0.0
    %322 = vmatpush1.msra.mxu0 0.0
    %323 = vmatprep.subr.mxu0 0.0
    %324 = vmatpush1.msra.mxu0 0.0
    %325 = vmatprep.subr.mxu0 0.0
    %326 = vmatpush1.msra.mxu0 0.0
    %327 = vmatprep.subr.mxu0 0.0
    %328 = vmatpush1.msra.mxu0 0.0
    %329 = vmatprep.subr.mxu0 0.0
    %330 = vmatpush1.msra.mxu0 0.0
    %331 = vmatprep.subr.mxu0 0.0
    %332 = vmatpush1.msra.mxu0 0.0
    %333 = vmatprep.subr.mxu0 0.0
    %334 = vmatpush1.msra.mxu0 0.0
    %335 = vmatprep.subr.mxu0 0.0
    %336 = vmatpush1.msra.mxu0 0.0
    %337 = vmatprep.subr.mxu0 0.0
    %338 = vmatpush1.msra.mxu0 0.0
    %339 = vmatprep.subr.mxu0 0.0
    %340 = vmatpush1.msra.mxu0 0.0
    %341 = vmatprep.subr.mxu0 0.0
    %342 = vmatpush1.msra.mxu0 0.0
    %343 = vmatprep.subr.mxu0 0.0
    %344 = vmatpush1.msra.mxu0 0.0
    %345 = vmatprep.subr.mxu0 0.0
    %346 = vmatpush1.msra.mxu0 0.0
    %347 = vmatprep.subr.mxu0 0.0
    %348 = vmatpush1.msra.mxu0 0.0
    %349 = vmatprep.mubr.f32.mxu0 0.0
    %350 = vmatmul.mubr.f32.gmra.mrb[0].mxu0 %v274
    %v351 = vpop.f32.mrb[0].mxu0
    %v352 = vadd.f32 0.0, %v351
    %v353 = vpop.f32.mrb[0].mxu0
    %354 = vmatprep.mubr.f32.mxu0 0.0
    %355 = vmatmul.mubr.f32.gmra.mrb[0].mxu0 %v277
    %v356 = vpop.f32.mrb[0].mxu0
    %v357 = vadd.f32 0.0, %v356
    %v358 = vpop.f32.mrb[0].mxu0
    %359 = vmatprep.mubr.f32.mxu0 0.0
    %360 = vmatmul.mubr.f32.gmra.mrb[0].mxu0 %v280
    %v361 = vpop.f32.mrb[0].mxu0
    %v362 = vadd.f32 0.0, %v361
    %v363 = vpop.f32.mrb[0].mxu0
    %364 = vmatprep.mubr.f32.mxu0 0.0
    %365 = vmatmul.mubr.f32.gmra.mrb[0].mxu0 %v283
    %v366 = vpop.f32.mrb[0].mxu0
    %v367 = vadd.f32 0.0, %v366
    %v368 = vpop.f32.mrb[0].mxu0
    %369 = vdwg.mxu0
    %v370 = vpack.c.bf16 %v357, %v352
    %v371 = vpack.c.bf16 %v367, %v362
    %s372 = scalar_lea.vmem %s2, 128
    %v373 = vld [vmem:[%s372] sm:$0xff]
    %v374 = vld [vmem:[%s372 + $0x8] sm:$0xff]
    %v375 = vld [vmem:[%s372 + $0x10] sm:$0xff]
    %v376 = vld [vmem:[%s372 + $0x18] sm:$0xff]
    %v377 = vld [vmem:[%s372 + $0x20] sm:$0xff]
    %v378 = vld [vmem:[%s372 + $0x28] sm:$0xff]
    %v379 = vld [vmem:[%s372 + $0x30] sm:$0xff]
    %v380 = vld [vmem:[%s372 + $0x38] sm:$0xff]
    %v381 = vld [vmem:[%s372 + $0x40] sm:$0xff]
    %v382 = vld [vmem:[%s372 + $0x48] sm:$0xff]
    %v383 = vld [vmem:[%s372 + $0x50] sm:$0xff]
    %v384 = vld [vmem:[%s372 + $0x58] sm:$0xff]
    %v385 = vld [vmem:[%s372 + $0x60] sm:$0xff]
    %v386 = vld [vmem:[%s372 + $0x68] sm:$0xff]
    %v387 = vld [vmem:[%s372 + $0x70] sm:$0xff]
    %v388 = vld [vmem:[%s372 + $0x78] sm:$0xff]
    %v405 = vunpack.c.l.b16 %v373
    %v406 = vunpack.c.h.b16 %v373
    %v407 = vunpack.c.l.b16 %v374
    %v408 = vunpack.c.h.b16 %v374
    %v409 = vunpack.c.l.b16 %v375
    %v410 = vunpack.c.h.b16 %v375
    %v411 = vunpack.c.l.b16 %v376
    %v412 = vunpack.c.h.b16 %v376
    %v413 = vunpack.c.l.b16 %v377
    %v414 = vunpack.c.h.b16 %v377
    %v415 = vunpack.c.l.b16 %v378
    %v416 = vunpack.c.h.b16 %v378
    %v417 = vunpack.c.l.b16 %v379
    %v418 = vunpack.c.h.b16 %v379
    %v419 = vunpack.c.l.b16 %v380
    %v420 = vunpack.c.h.b16 %v380
    %v421 = vunpack.c.l.b16 %v381
    %v422 = vunpack.c.h.b16 %v381
    %v423 = vunpack.c.l.b16 %v382
    %v424 = vunpack.c.h.b16 %v382
    %v425 = vunpack.c.l.b16 %v383
    %v426 = vunpack.c.h.b16 %v383
    %v427 = vunpack.c.l.b16 %v384
    %v428 = vunpack.c.h.b16 %v384
    %v429 = vunpack.c.l.b16 %v385
    %v430 = vunpack.c.h.b16 %v385
    %v431 = vunpack.c.l.b16 %v386
    %v432 = vunpack.c.h.b16 %v386
    %v433 = vunpack.c.l.b16 %v387
    %v434 = vunpack.c.h.b16 %v387
    %v435 = vunpack.c.l.b16 %v388
    %v436 = vunpack.c.h.b16 %v388
    %v437 = vpack.c.b16 %v407, %v405
    %v438 = vpack.c.b16 %v408, %v406
    %v439 = vpack.c.b16 %v411, %v409
    %v440 = vpack.c.b16 %v412, %v410
    %v441 = vpack.c.b16 %v415, %v413
    %v442 = vpack.c.b16 %v416, %v414
    %v443 = vpack.c.b16 %v419, %v417
    %v444 = vpack.c.b16 %v420, %v418
    %v445 = vpack.c.b16 %v423, %v421
    %v446 = vpack.c.b16 %v424, %v422
    %v447 = vpack.c.b16 %v427, %v425
    %v448 = vpack.c.b16 %v428, %v426
    %v449 = vpack.c.b16 %v431, %v429
    %v450 = vpack.c.b16 %v432, %v430
    %v451 = vpack.c.b16 %v435, %v433
    %v452 = vpack.c.b16 %v436, %v434
    %469 = vmatprep.subr.bf16.mxu0 %v438
    %470 = vmatpush1.bf16.msra.mxu0 %v437
    %471 = vmatprep.subr.bf16.mxu0 %v440
    %472 = vmatpush1.bf16.msra.mxu0 %v439
    %473 = vmatprep.subr.bf16.mxu0 %v442
    %474 = vmatpush1.bf16.msra.mxu0 %v441
    %475 = vmatprep.subr.bf16.mxu0 %v444
    %476 = vmatpush1.bf16.msra.mxu0 %v443
    %477 = vmatprep.subr.bf16.mxu0 %v446
    %478 = vmatpush1.bf16.msra.mxu0 %v445
    %479 = vmatprep.subr.bf16.mxu0 %v448
    %480 = vmatpush1.bf16.msra.mxu0 %v447
    %481 = vmatprep.subr.bf16.mxu0 %v450
    %482 = vmatpush1.bf16.msra.mxu0 %v449
    %483 = vmatprep.subr.bf16.mxu0 %v452
    %484 = vmatpush1.bf16.msra.mxu0 %v451
    %485 = vmatprep.subr.bf16.mxu0 0
    %486 = vmatpush1.bf16.msra.mxu0 0
    %487 = vmatprep.subr.bf16.mxu0 0
    %488 = vmatpush1.bf16.msra.mxu0 0
    %489 = vmatprep.subr.bf16.mxu0 0
    %490 = vmatpush1.bf16.msra.mxu0 0
    %491 = vmatprep.subr.bf16.mxu0 0
    %492 = vmatpush1.bf16.msra.mxu0 0
    %493 = vmatprep.subr.bf16.mxu0 0
    %494 = vmatpush1.bf16.msra.mxu0 0
    %495 = vmatprep.subr.bf16.mxu0 0
    %496 = vmatpush1.bf16.msra.mxu0 0
    %497 = vmatprep.subr.bf16.mxu0 0
    %498 = vmatpush1.bf16.msra.mxu0 0
    %499 = vmatprep.subr.bf16.mxu0 0
    %500 = vmatpush1.bf16.msra.mxu0 0
    %501 = vmatprep.mubr.bf16.mxu0 0
    %502 = vmatmul.mubr.bf16.gmra.mrb[0].mxu0 %v370
    %v503 = vpop.f32.mrb[0].mxu0
    %v504 = vadd.f32 0.0, %v503
    %v505 = vpop.f32.mrb[0].mxu0
    %v506 = vadd.f32 0.0, %v505
    %v507 = vpop.f32.mrb[0].mxu0
    %v508 = vadd.f32 0.0, %v507
    %v509 = vpop.f32.mrb[0].mxu0
    %v510 = vadd.f32 0.0, %v509
    %511 = vmatprep.mubr.bf16.mxu0 0
    %512 = vmatmul.mubr.bf16.gmra.mrb[0].mxu0 %v371
    %v513 = vpop.f32.mrb[0].mxu0
    %v514 = vadd.f32 0.0, %v513
    %v515 = vpop.f32.mrb[0].mxu0
    %v516 = vadd.f32 0.0, %v515
    %v517 = vpop.f32.mrb[0].mxu0
    %v518 = vadd.f32 0.0, %v517
    %v519 = vpop.f32.mrb[0].mxu0
    %v520 = vadd.f32 0.0, %v519
    %521 = vdwg.mxu0
    %v538 = vunpack.c.l.b16 %v252
    %v539 = vunpack.c.h.b16 %v252
    %v540 = vunpack.c.l.b16 %v253
    %v541 = vunpack.c.h.b16 %v253
    %v542 = vunpack.c.l.b16 %v254
    %v543 = vunpack.c.h.b16 %v254
    %v544 = vunpack.c.l.b16 %v255
    %v545 = vunpack.c.h.b16 %v255
    %v546 = vunpack.c.l.b16 %v256
    %v547 = vunpack.c.h.b16 %v256
    %v548 = vunpack.c.l.b16 %v257
    %v549 = vunpack.c.h.b16 %v257
    %v550 = vunpack.c.l.b16 %v258
    %v551 = vunpack.c.h.b16 %v258
    %v552 = vunpack.c.l.b16 %v259
    %v553 = vunpack.c.h.b16 %v259
    %v554 = vunpack.c.l.b16 %v260
    %v555 = vunpack.c.h.b16 %v260
    %v556 = vunpack.c.l.b16 %v261
    %v557 = vunpack.c.h.b16 %v261
    %v558 = vunpack.c.l.b16 %v262
    %v559 = vunpack.c.h.b16 %v262
    %v560 = vunpack.c.l.b16 %v263
    %v561 = vunpack.c.h.b16 %v263
    %v562 = vunpack.c.l.b16 %v264
    %v563 = vunpack.c.h.b16 %v264
    %v564 = vunpack.c.l.b16 %v265
    %v565 = vunpack.c.h.b16 %v265
    %v566 = vunpack.c.l.b16 %v266
    %v567 = vunpack.c.h.b16 %v266
    %v568 = vunpack.c.l.b16 %v267
    %v569 = vunpack.c.h.b16 %v267
    %v570 = vpack.c.b16 %v540, %v538
    %v571 = vpack.c.b16 %v541, %v539
    %v572 = vpack.c.b16 %v544, %v542
    %v573 = vpack.c.b16 %v545, %v543
    %v574 = vpack.c.b16 %v548, %v546
    %v575 = vpack.c.b16 %v549, %v547
    %v576 = vpack.c.b16 %v552, %v550
    %v577 = vpack.c.b16 %v553, %v551
    %v578 = vpack.c.b16 %v556, %v554
    %v579 = vpack.c.b16 %v557, %v555
    %v580 = vpack.c.b16 %v560, %v558
    %v581 = vpack.c.b16 %v561, %v559
    %v582 = vpack.c.b16 %v564, %v562
    %v583 = vpack.c.b16 %v565, %v563
    %v584 = vpack.c.b16 %v568, %v566
    %v585 = vpack.c.b16 %v569, %v567
    %602 = vmatprep.subr.bf16.mxu0 %v571
    %603 = vmatpush1.bf16.msra.mxu0 %v570
    %604 = vmatprep.subr.bf16.mxu0 %v573
    %605 = vmatpush1.bf16.msra.mxu0 %v572
    %606 = vmatprep.subr.bf16.mxu0 %v575
    %607 = vmatpush1.bf16.msra.mxu0 %v574
    %608 = vmatprep.subr.bf16.mxu0 %v577
    %609 = vmatpush1.bf16.msra.mxu0 %v576
    %610 = vmatprep.subr.bf16.mxu0 %v579
    %611 = vmatpush1.bf16.msra.mxu0 %v578
    %612 = vmatprep.subr.bf16.mxu0 %v581
    %613 = vmatpush1.bf16.msra.mxu0 %v580
    %614 = vmatprep.subr.bf16.mxu0 %v583
    %615 = vmatpush1.bf16.msra.mxu0 %v582
    %616 = vmatprep.subr.bf16.mxu0 %v585
    %617 = vmatpush1.bf16.msra.mxu0 %v584
    %618 = vmatprep.subr.bf16.mxu0 0
    %619 = vmatpush1.bf16.msra.mxu0 0
    %620 = vmatprep.subr.bf16.mxu0 0
    %621 = vmatpush1.bf16.msra.mxu0 0
    %622 = vmatprep.subr.bf16.mxu0 0
    %623 = vmatpush1.bf16.msra.mxu0 0
    %624 = vmatprep.subr.bf16.mxu0 0
    %625 = vmatpush1.bf16.msra.mxu0 0
    %626 = vmatprep.subr.bf16.mxu0 0
    %627 = vmatpush1.bf16.msra.mxu0 0
    %628 = vmatprep.subr.bf16.mxu0 0
    %629 = vmatpush1.bf16.msra.mxu0 0
    %630 = vmatprep.subr.bf16.mxu0 0
    %631 = vmatpush1.bf16.msra.mxu0 0
    %632 = vmatprep.subr.bf16.mxu0 0
    %633 = vmatpush1.bf16.msra.mxu0 0
    %634 = vmatprep.mubr.bf16.mxu0 0
    %635 = vmatmul.mubr.bf16.gmra.mrb[0].mxu0 %v250
    %v636 = vpop.f32.mrb[0].mxu0
    %v637 = vadd.f32 %v504, %v636
    %v638 = vpop.f32.mrb[0].mxu0
    %v639 = vadd.f32 %v506, %v638
    %v640 = vpop.f32.mrb[0].mxu0
    %v641 = vadd.f32 %v508, %v640
    %v642 = vpop.f32.mrb[0].mxu0
    %v643 = vadd.f32 %v510, %v642
    %644 = vmatprep.mubr.bf16.mxu0 0
    %645 = vmatmul.mubr.bf16.gmra.mrb[0].mxu0 %v251
    %v646 = vpop.f32.mrb[0].mxu0
    %v647 = vadd.f32 %v514, %v646
    %v648 = vpop.f32.mrb[0].mxu0
    %v649 = vadd.f32 %v516, %v648
    %v650 = vpop.f32.mrb[0].mxu0
    %v651 = vadd.f32 %v518, %v650
    %v652 = vpop.f32.mrb[0].mxu0
    %v653 = vadd.f32 %v520, %v652
    %654 = vdwg.mxu0
    %s655 = scalar_lea.vmem %s1, 64
    %v656 = vld [vmem:[%s655] sm:$0xff]
    %v657 = vld [vmem:[%s655 + $0x8] sm:$0xff]
    %v658 = vld [vmem:[%s655 + $0x10] sm:$0xff]
    %v659 = vld [vmem:[%s655 + $0x18] sm:$0xff]
    %v661 = vsel %vm152, %v656, 0
    %v664 = vsel %vm152, %v657, 0
    %v667 = vsel %vm152, %v658, 0
    %v670 = vsel %vm152, %v659, 0
    %672 = vmatprep.subr.mxu0 0.0
    %673 = vmatpush1.msra.mxu0 %v140
    %674 = vmatprep.subr.mxu0 0.0
    %675 = vmatpush1.msra.mxu0 %v141
    %676 = vmatprep.subr.mxu0 0.0
    %677 = vmatpush1.msra.mxu0 %v142
    %678 = vmatprep.subr.mxu0 0.0
    %679 = vmatpush1.msra.mxu0 %v143
    %680 = vmatprep.subr.mxu0 0.0
    %681 = vmatpush1.msra.mxu0 %v144
    %682 = vmatprep.subr.mxu0 0.0
    %683 = vmatpush1.msra.mxu0 %v145
    %684 = vmatprep.subr.mxu0 0.0
    %685 = vmatpush1.msra.mxu0 %v146
    %686 = vmatprep.subr.mxu0 0.0
    %687 = vmatpush1.msra.mxu0 %v147
    %688 = vmatprep.subr.mxu0 0.0
    %689 = vmatpush1.msra.mxu0 0.0
    %690 = vmatprep.subr.mxu0 0.0
    %691 = vmatpush1.msra.mxu0 0.0
    %692 = vmatprep.subr.mxu0 0.0
    %693 = vmatpush1.msra.mxu0 0.0
    %694 = vmatprep.subr.mxu0 0.0
    %695 = vmatpush1.msra.mxu0 0.0
    %696 = vmatprep.subr.mxu0 0.0
    %697 = vmatpush1.msra.mxu0 0.0
    %698 = vmatprep.subr.mxu0 0.0
    %699 = vmatpush1.msra.mxu0 0.0
    %700 = vmatprep.subr.mxu0 0.0
    %701 = vmatpush1.msra.mxu0 0.0
    %702 = vmatprep.subr.mxu0 0.0
    %703 = vmatpush1.msra.mxu0 0.0
    %704 = vmatprep.subr.mxu0 0.0
    %705 = vmatpush1.msra.mxu0 0.0
    %706 = vmatprep.subr.mxu0 0.0
    %707 = vmatpush1.msra.mxu0 0.0
    %708 = vmatprep.subr.mxu0 0.0
    %709 = vmatpush1.msra.mxu0 0.0
    %710 = vmatprep.subr.mxu0 0.0
    %711 = vmatpush1.msra.mxu0 0.0
    %712 = vmatprep.subr.mxu0 0.0
    %713 = vmatpush1.msra.mxu0 0.0
    %714 = vmatprep.subr.mxu0 0.0
    %715 = vmatpush1.msra.mxu0 0.0
    %716 = vmatprep.subr.mxu0 0.0
    %717 = vmatpush1.msra.mxu0 0.0
    %718 = vmatprep.subr.mxu0 0.0
    %719 = vmatpush1.msra.mxu0 0.0
    %720 = vmatprep.subr.mxu0 0.0
    %721 = vmatpush1.msra.mxu0 0.0
    %722 = vmatprep.subr.mxu0 0.0
    %723 = vmatpush1.msra.mxu0 0.0
    %724 = vmatprep.subr.mxu0 0.0
    %725 = vmatpush1.msra.mxu0 0.0
    %726 = vmatprep.subr.mxu0 0.0
    %727 = vmatpush1.msra.mxu0 0.0
    %728 = vmatprep.subr.mxu0 0.0
    %729 = vmatpush1.msra.mxu0 0.0
    %730 = vmatprep.subr.mxu0 0.0
    %731 = vmatpush1.msra.mxu0 0.0
    %732 = vmatprep.subr.mxu0 0.0
    %733 = vmatpush1.msra.mxu0 0.0
    %734 = vmatprep.subr.mxu0 0.0
    %735 = vmatpush1.msra.mxu0 0.0
    %736 = vmatprep.mubr.f32.mxu0 0.0
    %737 = vmatmul.mubr.f32.gmra.mrb[0].mxu0 %v661
    %v738 = vpop.f32.mrb[0].mxu0
    %v739 = vadd.f32 0.0, %v738
    %v740 = vpop.f32.mrb[0].mxu0
    %741 = vmatprep.mubr.f32.mxu0 0.0
    %742 = vmatmul.mubr.f32.gmra.mrb[0].mxu0 %v664
    %v743 = vpop.f32.mrb[0].mxu0
    %v744 = vadd.f32 0.0, %v743
    %v745 = vpop.f32.mrb[0].mxu0
    %746 = vmatprep.mubr.f32.mxu0 0.0
    %747 = vmatmul.mubr.f32.gmra.mrb[0].mxu0 %v667
    %v748 = vpop.f32.mrb[0].mxu0
    %v749 = vadd.f32 0.0, %v748
    %v750 = vpop.f32.mrb[0].mxu0
    %751 = vmatprep.mubr.f32.mxu0 0.0
    %752 = vmatmul.mubr.f32.gmra.mrb[0].mxu0 %v670
    %v753 = vpop.f32.mrb[0].mxu0
    %v754 = vadd.f32 0.0, %v753
    %v755 = vpop.f32.mrb[0].mxu0
    %756 = vdwg.mxu0
    %v757 = vpack.c.bf16 %v744, %v739
    %v758 = vpack.c.bf16 %v754, %v749
    %s759 = scalar_lea.vmem %s2, 256
    %v760 = vld [vmem:[%s759] sm:$0xff]
    %v761 = vld [vmem:[%s759 + $0x8] sm:$0xff]
    %v762 = vld [vmem:[%s759 + $0x10] sm:$0xff]
    %v763 = vld [vmem:[%s759 + $0x18] sm:$0xff]
    %v764 = vld [vmem:[%s759 + $0x20] sm:$0xff]
    %v765 = vld [vmem:[%s759 + $0x28] sm:$0xff]
    %v766 = vld [vmem:[%s759 + $0x30] sm:$0xff]
    %v767 = vld [vmem:[%s759 + $0x38] sm:$0xff]
    %v768 = vld [vmem:[%s759 + $0x40] sm:$0xff]
    %v769 = vld [vmem:[%s759 + $0x48] sm:$0xff]
    %v770 = vld [vmem:[%s759 + $0x50] sm:$0xff]
    %v771 = vld [vmem:[%s759 + $0x58] sm:$0xff]
    %v772 = vld [vmem:[%s759 + $0x60] sm:$0xff]
    %v773 = vld [vmem:[%s759 + $0x68] sm:$0xff]
    %v774 = vld [vmem:[%s759 + $0x70] sm:$0xff]
    %v775 = vld [vmem:[%s759 + $0x78] sm:$0xff]
    %v792 = vunpack.c.l.b16 %v760
    %v793 = vunpack.c.h.b16 %v760
    %v794 = vunpack.c.l.b16 %v761
    %v795 = vunpack.c.h.b16 %v761
    %v796 = vunpack.c.l.b16 %v762
    %v797 = vunpack.c.h.b16 %v762
    %v798 = vunpack.c.l.b16 %v763
    %v799 = vunpack.c.h.b16 %v763
    %v800 = vunpack.c.l.b16 %v764
    %v801 = vunpack.c.h.b16 %v764
    %v802 = vunpack.c.l.b16 %v765
    %v803 = vunpack.c.h.b16 %v765
    %v804 = vunpack.c.l.b16 %v766
    %v805 = vunpack.c.h.b16 %v766
    %v806 = vunpack.c.l.b16 %v767
    %v807 = vunpack.c.h.b16 %v767
    %v808 = vunpack.c.l.b16 %v768
    %v809 = vunpack.c.h.b16 %v768
    %v810 = vunpack.c.l.b16 %v769
    %v811 = vunpack.c.h.b16 %v769
    %v812 = vunpack.c.l.b16 %v770
    %v813 = vunpack.c.h.b16 %v770
    %v814 = vunpack.c.l.b16 %v771
    %v815 = vunpack.c.h.b16 %v771
    %v816 = vunpack.c.l.b16 %v772
    %v817 = vunpack.c.h.b16 %v772
    %v818 = vunpack.c.l.b16 %v773
    %v819 = vunpack.c.h.b16 %v773
    %v820 = vunpack.c.l.b16 %v774
    %v821 = vunpack.c.h.b16 %v774
    %v822 = vunpack.c.l.b16 %v775
    %v823 = vunpack.c.h.b16 %v775
    %v824 = vpack.c.b16 %v794, %v792
    %v825 = vpack.c.b16 %v795, %v793
    %v826 = vpack.c.b16 %v798, %v796
    %v827 = vpack.c.b16 %v799, %v797
    %v828 = vpack.c.b16 %v802, %v800
    %v829 = vpack.c.b16 %v803, %v801
    %v830 = vpack.c.b16 %v806, %v804
    %v831 = vpack.c.b16 %v807, %v805
    %v832 = vpack.c.b16 %v810, %v808
    %v833 = vpack.c.b16 %v811, %v809
    %v834 = vpack.c.b16 %v814, %v812
    %v835 = vpack.c.b16 %v815, %v813
    %v836 = vpack.c.b16 %v818, %v816
    %v837 = vpack.c.b16 %v819, %v817
    %v838 = vpack.c.b16 %v822, %v820
    %v839 = vpack.c.b16 %v823, %v821
    %856 = vmatprep.subr.bf16.mxu0 %v825
    %857 = vmatpush1.bf16.msra.mxu0 %v824
    %858 = vmatprep.subr.bf16.mxu0 %v827
    %859 = vmatpush1.bf16.msra.mxu0 %v826
    %860 = vmatprep.subr.bf16.mxu0 %v829
    %861 = vmatpush1.bf16.msra.mxu0 %v828
    %862 = vmatprep.subr.bf16.mxu0 %v831
    %863 = vmatpush1.bf16.msra.mxu0 %v830
    %864 = vmatprep.subr.bf16.mxu0 %v833
    %865 = vmatpush1.bf16.msra.mxu0 %v832
    %866 = vmatprep.subr.bf16.mxu0 %v835
    %867 = vmatpush1.bf16.msra.mxu0 %v834
    %868 = vmatprep.subr.bf16.mxu0 %v837
    %869 = vmatpush1.bf16.msra.mxu0 %v836
    %870 = vmatprep.subr.bf16.mxu0 %v839
    %871 = vmatpush1.bf16.msra.mxu0 %v838
    %872 = vmatprep.subr.bf16.mxu0 0
    %873 = vmatpush1.bf16.msra.mxu0 0
    %874 = vmatprep.subr.bf16.mxu0 0
    %875 = vmatpush1.bf16.msra.mxu0 0
    %876 = vmatprep.subr.bf16.mxu0 0
    %877 = vmatpush1.bf16.msra.mxu0 0
    %878 = vmatprep.subr.bf16.mxu0 0
    %879 = vmatpush1.bf16.msra.mxu0 0
    %880 = vmatprep.subr.bf16.mxu0 0
    %881 = vmatpush1.bf16.msra.mxu0 0
    %882 = vmatprep.subr.bf16.mxu0 0
    %883 = vmatpush1.bf16.msra.mxu0 0
    %884 = vmatprep.subr.bf16.mxu0 0
    %885 = vmatpush1.bf16.msra.mxu0 0
    %886 = vmatprep.subr.bf16.mxu0 0
    %887 = vmatpush1.bf16.msra.mxu0 0
    %888 = vmatprep.mubr.bf16.mxu0 0
    %889 = vmatmul.mubr.bf16.gmra.mrb[0].mxu0 %v757
    %v890 = vpop.f32.mrb[0].mxu0
    %v891 = vadd.f32 0.0, %v890
    %v892 = vpop.f32.mrb[0].mxu0
    %v893 = vadd.f32 0.0, %v892
    %v894 = vpop.f32.mrb[0].mxu0
    %v895 = vadd.f32 0.0, %v894
    %v896 = vpop.f32.mrb[0].mxu0
    %v897 = vadd.f32 0.0, %v896
    %898 = vmatprep.mubr.bf16.mxu0 0
    %899 = vmatmul.mubr.bf16.gmra.mrb[0].mxu0 %v758
    %v900 = vpop.f32.mrb[0].mxu0
    %v901 = vadd.f32 0.0, %v900
    %v902 = vpop.f32.mrb[0].mxu0
    %v903 = vadd.f32 0.0, %v902
    %v904 = vpop.f32.mrb[0].mxu0
    %v905 = vadd.f32 0.0, %v904
    %v906 = vpop.f32.mrb[0].mxu0
    %v907 = vadd.f32 0.0, %v906
    %908 = vdwg.mxu0
    %v909 = vadd.f32 %v637, %v891
    %v910 = vadd.f32 %v639, %v893
    %v911 = vadd.f32 %v641, %v895
    %v912 = vadd.f32 %v643, %v897
    %v913 = vadd.f32 %v647, %v901
    %v914 = vadd.f32 %v649, %v903
    %v915 = vadd.f32 %v651, %v905
    %v916 = vadd.f32 %v653, %v907
    %s917 = scalar_lea.vmem %s1, 96
    %v918 = vld [vmem:[%s917] sm:$0xff]
    %v919 = vld [vmem:[%s917 + $0x8] sm:$0xff]
    %v920 = vld [vmem:[%s917 + $0x10] sm:$0xff]
    %v921 = vld [vmem:[%s917 + $0x18] sm:$0xff]
    %v923 = vsel %vm152, %v918, 0
    %v926 = vsel %vm152, %v919, 0
    %v929 = vsel %vm152, %v920, 0
    %v932 = vsel %vm152, %v921, 0
    %934 = vmatprep.subr.mxu0 0.0
    %935 = vmatpush1.msra.mxu0 %v140
    %936 = vmatprep.subr.mxu0 0.0
    %937 = vmatpush1.msra.mxu0 %v141
    %938 = vmatprep.subr.mxu0 0.0
    %939 = vmatpush1.msra.mxu0 %v142
    %940 = vmatprep.subr.mxu0 0.0
    %941 = vmatpush1.msra.mxu0 %v143
    %942 = vmatprep.subr.mxu0 0.0
    %943 = vmatpush1.msra.mxu0 %v144
    %944 = vmatprep.subr.mxu0 0.0
    %945 = vmatpush1.msra.mxu0 %v145
    %946 = vmatprep.subr.mxu0 0.0
    %947 = vmatpush1.msra.mxu0 %v146
    %948 = vmatprep.subr.mxu0 0.0
    %949 = vmatpush1.msra.mxu0 %v147
    %950 = vmatprep.subr.mxu0 0.0
    %951 = vmatpush1.msra.mxu0 0.0
    %952 = vmatprep.subr.mxu0 0.0
    %953 = vmatpush1.msra.mxu0 0.0
    %954 = vmatprep.subr.mxu0 0.0
    %955 = vmatpush1.msra.mxu0 0.0
    %956 = vmatprep.subr.mxu0 0.0
    %957 = vmatpush1.msra.mxu0 0.0
    %958 = vmatprep.subr.mxu0 0.0
    %959 = vmatpush1.msra.mxu0 0.0
    %960 = vmatprep.subr.mxu0 0.0
    %961 = vmatpush1.msra.mxu0 0.0
    %962 = vmatprep.subr.mxu0 0.0
    %963 = vmatpush1.msra.mxu0 0.0
    %964 = vmatprep.subr.mxu0 0.0
    %965 = vmatpush1.msra.mxu0 0.0
    %966 = vmatprep.subr.mxu0 0.0
    %967 = vmatpush1.msra.mxu0 0.0
    %968 = vmatprep.subr.mxu0 0.0
    %969 = vmatpush1.msra.mxu0 0.0
    %970 = vmatprep.subr.mxu0 0.0
    %971 = vmatpush1.msra.mxu0 0.0
    %972 = vmatprep.subr.mxu0 0.0
    %973 = vmatpush1.msra.mxu0 0.0
    %974 = vmatprep.subr.mxu0 0.0
    %975 = vmatpush1.msra.mxu0 0.0
    %976 = vmatprep.subr.mxu0 0.0
    %977 = vmatpush1.msra.mxu0 0.0
    %978 = vmatprep.subr.mxu0 0.0
    %979 = vmatpush1.msra.mxu0 0.0
    %980 = vmatprep.subr.mxu0 0.0
    %981 = vmatpush1.msra.mxu0 0.0
    %982 = vmatprep.subr.mxu0 0.0
    %983 = vmatpush1.msra.mxu0 0.0
    %984 = vmatprep.subr.mxu0 0.0
    %985 = vmatpush1.msra.mxu0 0.0
    %986 = vmatprep.subr.mxu0 0.0
    %987 = vmatpush1.msra.mxu0 0.0
    %988 = vmatprep.subr.mxu0 0.0
    %989 = vmatpush1.msra.mxu0 0.0
    %990 = vmatprep.subr.mxu0 0.0
    %991 = vmatpush1.msra.mxu0 0.0
    %992 = vmatprep.subr.mxu0 0.0
    %993 = vmatpush1.msra.mxu0 0.0
    %994 = vmatprep.subr.mxu0 0.0
    %995 = vmatpush1.msra.mxu0 0.0
    %996 = vmatprep.subr.mxu0 0.0
    %997 = vmatpush1.msra.mxu0 0.0
    %998 = vmatprep.mubr.f32.mxu0 0.0
    %999 = vmatmul.mubr.f32.gmra.mrb[0].mxu0 %v923
    %v1000 = vpop.f32.mrb[0].mxu0
    %v1001 = vadd.f32 0.0, %v1000
    %v1002 = vpop.f32.mrb[0].mxu0
    %1003 = vmatprep.mubr.f32.mxu0 0.0
    %1004 = vmatmul.mubr.f32.gmra.mrb[0].mxu0 %v926
    %v1005 = vpop.f32.mrb[0].mxu0
    %v1006 = vadd.f32 0.0, %v1005
    %v1007 = vpop.f32.mrb[0].mxu0
    %1008 = vmatprep.mubr.f32.mxu0 0.0
    %1009 = vmatmul.mubr.f32.gmra.mrb[0].mxu0 %v929
    %v1010 = vpop.f32.mrb[0].mxu0
    %v1011 = vadd.f32 0.0, %v1010
    %v1012 = vpop.f32.mrb[0].mxu0
    %1013 = vmatprep.mubr.f32.mxu0 0.0
    %1014 = vmatmul.mubr.f32.gmra.mrb[0].mxu0 %v932
    %v1015 = vpop.f32.mrb[0].mxu0
    %v1016 = vadd.f32 0.0, %v1015
    %v1017 = vpop.f32.mrb[0].mxu0
    %1018 = vdwg.mxu0
    %v1019 = vpack.c.bf16 %v1006, %v1001
    %v1020 = vpack.c.bf16 %v1016, %v1011
    %s1021 = scalar_lea.vmem %s2, 384
    %v1022 = vld [vmem:[%s1021] sm:$0xff]
    %v1023 = vld [vmem:[%s1021 + $0x8] sm:$0xff]
    %v1024 = vld [vmem:[%s1021 + $0x10] sm:$0xff]
    %v1025 = vld [vmem:[%s1021 + $0x18] sm:$0xff]
    %v1026 = vld [vmem:[%s1021 + $0x20] sm:$0xff]
    %v1027 = vld [vmem:[%s1021 + $0x28] sm:$0xff]
    %v1028 = vld [vmem:[%s1021 + $0x30] sm:$0xff]
    %v1029 = vld [vmem:[%s1021 + $0x38] sm:$0xff]
    %v1030 = vld [vmem:[%s1021 + $0x40] sm:$0xff]
    %v1031 = vld [vmem:[%s1021 + $0x48] sm:$0xff]
    %v1032 = vld [vmem:[%s1021 + $0x50] sm:$0xff]
    %v1033 = vld [vmem:[%s1021 + $0x58] sm:$0xff]
    %v1034 = vld [vmem:[%s1021 + $0x60] sm:$0xff]
    %v1035 = vld [vmem:[%s1021 + $0x68] sm:$0xff]
    %v1036 = vld [vmem:[%s1021 + $0x70] sm:$0xff]
    %v1037 = vld [vmem:[%s1021 + $0x78] sm:$0xff]
    %v1054 = vunpack.c.l.b16 %v1022
    %v1055 = vunpack.c.h.b16 %v1022
    %v1056 = vunpack.c.l.b16 %v1023
    %v1057 = vunpack.c.h.b16 %v1023
    %v1058 = vunpack.c.l.b16 %v1024
    %v1059 = vunpack.c.h.b16 %v1024
    %v1060 = vunpack.c.l.b16 %v1025
    %v1061 = vunpack.c.h.b16 %v1025
    %v1062 = vunpack.c.l.b16 %v1026
    %v1063 = vunpack.c.h.b16 %v1026
    %v1064 = vunpack.c.l.b16 %v1027
    %v1065 = vunpack.c.h.b16 %v1027
    %v1066 = vunpack.c.l.b16 %v1028
    %v1067 = vunpack.c.h.b16 %v1028
    %v1068 = vunpack.c.l.b16 %v1029
    %v1069 = vunpack.c.h.b16 %v1029
    %v1070 = vunpack.c.l.b16 %v1030
    %v1071 = vunpack.c.h.b16 %v1030
    %v1072 = vunpack.c.l.b16 %v1031
    %v1073 = vunpack.c.h.b16 %v1031
    %v1074 = vunpack.c.l.b16 %v1032
    %v1075 = vunpack.c.h.b16 %v1032
    %v1076 = vunpack.c.l.b16 %v1033
    %v1077 = vunpack.c.h.b16 %v1033
    %v1078 = vunpack.c.l.b16 %v1034
    %v1079 = vunpack.c.h.b16 %v1034
    %v1080 = vunpack.c.l.b16 %v1035
    %v1081 = vunpack.c.h.b16 %v1035
    %v1082 = vunpack.c.l.b16 %v1036
    %v1083 = vunpack.c.h.b16 %v1036
    %v1084 = vunpack.c.l.b16 %v1037
    %v1085 = vunpack.c.h.b16 %v1037
    %v1086 = vpack.c.b16 %v1056, %v1054
    %v1087 = vpack.c.b16 %v1057, %v1055
    %v1088 = vpack.c.b16 %v1060, %v1058
    %v1089 = vpack.c.b16 %v1061, %v1059
    %v1090 = vpack.c.b16 %v1064, %v1062
    %v1091 = vpack.c.b16 %v1065, %v1063
    %v1092 = vpack.c.b16 %v1068, %v1066
    %v1093 = vpack.c.b16 %v1069, %v1067
    %v1094 = vpack.c.b16 %v1072, %v1070
    %v1095 = vpack.c.b16 %v1073, %v1071
    %v1096 = vpack.c.b16 %v1076, %v1074
    %v1097 = vpack.c.b16 %v1077, %v1075
    %v1098 = vpack.c.b16 %v1080, %v1078
    %v1099 = vpack.c.b16 %v1081, %v1079
    %v1100 = vpack.c.b16 %v1084, %v1082
    %v1101 = vpack.c.b16 %v1085, %v1083
    %1118 = vmatprep.subr.bf16.mxu0 %v1087
    %1119 = vmatpush1.bf16.msra.mxu0 %v1086
    %1120 = vmatprep.subr.bf16.mxu0 %v1089
    %1121 = vmatpush1.bf16.msra.mxu0 %v1088
    %1122 = vmatprep.subr.bf16.mxu0 %v1091
    %1123 = vmatpush1.bf16.msra.mxu0 %v1090
    %1124 = vmatprep.subr.bf16.mxu0 %v1093
    %1125 = vmatpush1.bf16.msra.mxu0 %v1092
    %1126 = vmatprep.subr.bf16.mxu0 %v1095
    %1127 = vmatpush1.bf16.msra.mxu0 %v1094
    %1128 = vmatprep.subr.bf16.mxu0 %v1097
    %1129 = vmatpush1.bf16.msra.mxu0 %v1096
    %1130 = vmatprep.subr.bf16.mxu0 %v1099
    %1131 = vmatpush1.bf16.msra.mxu0 %v1098
    %1132 = vmatprep.subr.bf16.mxu0 %v1101
    %1133 = vmatpush1.bf16.msra.mxu0 %v1100
    %1134 = vmatprep.subr.bf16.mxu0 0
    %1135 = vmatpush1.bf16.msra.mxu0 0
    %1136 = vmatprep.subr.bf16.mxu0 0
    %1137 = vmatpush1.bf16.msra.mxu0 0
    %1138 = vmatprep.subr.bf16.mxu0 0
    %1139 = vmatpush1.bf16.msra.mxu0 0
    %1140 = vmatprep.subr.bf16.mxu0 0
    %1141 = vmatpush1.bf16.msra.mxu0 0
    %1142 = vmatprep.subr.bf16.mxu0 0
    %1143 = vmatpush1.bf16.msra.mxu0 0
    %1144 = vmatprep.subr.bf16.mxu0 0
    %1145 = vmatpush1.bf16.msra.mxu0 0
    %1146 = vmatprep.subr.bf16.mxu0 0
    %1147 = vmatpush1.bf16.msra.mxu0 0
    %1148 = vmatprep.subr.bf16.mxu0 0
    %1149 = vmatpush1.bf16.msra.mxu0 0
    %1150 = vmatprep.mubr.bf16.mxu0 0
    %1151 = vmatmul.mubr.bf16.gmra.mrb[0].mxu0 %v1019
    %v1152 = vpop.f32.mrb[0].mxu0
    %v1153 = vadd.f32 0.0, %v1152
    %v1154 = vpop.f32.mrb[0].mxu0
    %v1155 = vadd.f32 0.0, %v1154
    %v1156 = vpop.f32.mrb[0].mxu0
    %v1157 = vadd.f32 0.0, %v1156
    %v1158 = vpop.f32.mrb[0].mxu0
    %v1159 = vadd.f32 0.0, %v1158
    %1160 = vmatprep.mubr.bf16.mxu0 0
    %1161 = vmatmul.mubr.bf16.gmra.mrb[0].mxu0 %v1020
    %v1162 = vpop.f32.mrb[0].mxu0
    %v1163 = vadd.f32 0.0, %v1162
    %v1164 = vpop.f32.mrb[0].mxu0
    %v1165 = vadd.f32 0.0, %v1164
    %v1166 = vpop.f32.mrb[0].mxu0
    %v1167 = vadd.f32 0.0, %v1166
    %v1168 = vpop.f32.mrb[0].mxu0
    %v1169 = vadd.f32 0.0, %v1168
    %1170 = vdwg.mxu0
    %v1171 = vadd.f32 %v909, %v1153
    %v1172 = vadd.f32 %v910, %v1155
    %v1173 = vadd.f32 %v911, %v1157
    %v1174 = vadd.f32 %v912, %v1159
    %v1175 = vadd.f32 %v913, %v1163
    %v1176 = vadd.f32 %v914, %v1165
    %v1177 = vadd.f32 %v915, %v1167
    %v1178 = vadd.f32 %v916, %v1169
    %v1179 = vadd.f32 %v1171, %v1173
    %v1180 = vadd.f32 %v1179, %v1175
    %v1181 = vadd.f32 %v1180, %v1177
    %v1182 = vrot.slane %v1181, 4
    %v1183 = vadd.f32 %v1181, %v1182
    %v1184 = vrot.slane %v1183, 2
    %v1185 = vadd.f32 %v1183, %v1184
    %v1186 = vrot.slane %v1185, 1
    %v1187 = vadd.f32 %v1185, %v1186
    %v1188 = vadd.f32 %v1172, %v1174
    %v1189 = vadd.f32 %v1188, %v1176
    %v1190 = vadd.f32 %v1189, %v1178
    %v1191 = vrot.slane %v1190, 4
    %v1192 = vadd.f32 %v1190, %v1191
    %v1193 = vrot.slane %v1192, 2
    %v1194 = vadd.f32 %v1192, %v1193
    %v1195 = vrot.slane %v1194, 1
    %v1196 = vadd.f32 %v1194, %v1195
    %v1197 = vmul.f32 %v1171, %v1171
    %v1198 = vmul.f32 %v1172, %v1172
    %v1199 = vmul.f32 %v1173, %v1173
    %v1200 = vmul.f32 %v1174, %v1174
    %v1201 = vmul.f32 %v1175, %v1175
    %v1202 = vmul.f32 %v1176, %v1176
    %v1203 = vmul.f32 %v1177, %v1177
    %v1204 = vmul.f32 %v1178, %v1178
    %v1205 = vadd.f32 %v1197, %v1199
    %v1206 = vadd.f32 %v1205, %v1201
    %v1207 = vadd.f32 %v1206, %v1203
    %v1208 = vrot.slane %v1207, 4
    %v1209 = vadd.f32 %v1207, %v1208
    %v1210 = vrot.slane %v1209, 2
    %v1211 = vadd.f32 %v1209, %v1210
    %v1212 = vrot.slane %v1211, 1
    %v1213 = vadd.f32 %v1211, %v1212
    %v1214 = vadd.f32 %v1198, %v1200
    %v1215 = vadd.f32 %v1214, %v1202
    %v1216 = vadd.f32 %v1215, %v1204
    %v1217 = vrot.slane %v1216, 4
    %v1218 = vadd.f32 %v1216, %v1217
    %v1219 = vrot.slane %v1218, 2
    %v1220 = vadd.f32 %v1218, %v1219
    %v1221 = vrot.slane %v1220, 1
    %v1222 = vadd.f32 %v1220, %v1221
    %v1223 = vld [vmem:[%s5] sm:$0xff]
    %v1224 = vld [vmem:[%s5 + $0x8] sm:$0xff]
    %v1225 = vld [vmem:[%s5 + $0x10] sm:$0xff]
    %v1226 = vld [vmem:[%s5 + $0x18] sm:$0xff]
    %v1227 = vld [vmem:[%s5 + $0x20] sm:$0xff]
    %v1228 = vld [vmem:[%s5 + $0x28] sm:$0xff]
    %v1229 = vld [vmem:[%s5 + $0x30] sm:$0xff]
    %v1230 = vld [vmem:[%s5 + $0x38] sm:$0xff]
    %v1231 = vld [vmem:[%s5 + $0x40] sm:$0xff]
    %v1232 = vld [vmem:[%s5 + $0x48] sm:$0xff]
    %v1233 = vld [vmem:[%s5 + $0x50] sm:$0xff]
    %v1234 = vld [vmem:[%s5 + $0x58] sm:$0xff]
    %v1235 = vld [vmem:[%s5 + $0x60] sm:$0xff]
    %v1236 = vld [vmem:[%s5 + $0x68] sm:$0xff]
    %v1237 = vld [vmem:[%s5 + $0x70] sm:$0xff]
    %v1238 = vld [vmem:[%s5 + $0x78] sm:$0xff]
    %v1239 = vld [vmem:[%s5 + $0x80] sm:$0xff]
    %v1240 = vld [vmem:[%s5 + $0x88] sm:$0xff]
    %v1241 = vld [vmem:[%s5 + $0x90] sm:$0xff]
    %v1242 = vld [vmem:[%s5 + $0x98] sm:$0xff]
    %v1243 = vld [vmem:[%s5 + $0xa0] sm:$0xff]
    %v1244 = vld [vmem:[%s5 + $0xa8] sm:$0xff]
    %v1245 = vld [vmem:[%s5 + $0xb0] sm:$0xff]
    %v1246 = vld [vmem:[%s5 + $0xb8] sm:$0xff]
    %v1247 = vld [vmem:[%s5 + $0xc0] sm:$0xff]
    %v1248 = vld [vmem:[%s5 + $0xc8] sm:$0xff]
    %v1249 = vld [vmem:[%s5 + $0xd0] sm:$0xff]
    %v1250 = vld [vmem:[%s5 + $0xd8] sm:$0xff]
    %v1251 = vld [vmem:[%s5 + $0xe0] sm:$0xff]
    %v1252 = vld [vmem:[%s5 + $0xe8] sm:$0xff]
    %v1253 = vld [vmem:[%s5 + $0xf0] sm:$0xff]
    %v1254 = vld [vmem:[%s5 + $0xf8] sm:$0xff]
    %1255 = vmatprep.subr.mxu0 0.0
    %1256 = vmatpush1.msra.mxu0 %v1223
    %1257 = vmatprep.subr.mxu0 0.0
    %1258 = vmatpush1.msra.mxu0 %v1224
    %1259 = vmatprep.subr.mxu0 0.0
    %1260 = vmatpush1.msra.mxu0 %v1225
    %1261 = vmatprep.subr.mxu0 0.0
    %1262 = vmatpush1.msra.mxu0 %v1226
    %1263 = vmatprep.subr.mxu0 0.0
    %1264 = vmatpush1.msra.mxu0 %v1227
    %1265 = vmatprep.subr.mxu0 0.0
    %1266 = vmatpush1.msra.mxu0 %v1228
    %1267 = vmatprep.subr.mxu0 0.0
    %1268 = vmatpush1.msra.mxu0 %v1229
    %1269 = vmatprep.subr.mxu0 0.0
    %1270 = vmatpush1.msra.mxu0 %v1230
    %1271 = vmatprep.subr.mxu0 0.0
    %1272 = vmatpush1.msra.mxu0 %v1231
    %1273 = vmatprep.subr.mxu0 0.0
    %1274 = vmatpush1.msra.mxu0 %v1232
    %1275 = vmatprep.subr.mxu0 0.0
    %1276 = vmatpush1.msra.mxu0 %v1233
    %1277 = vmatprep.subr.mxu0 0.0
    %1278 = vmatpush1.msra.mxu0 %v1234
    %1279 = vmatprep.subr.mxu0 0.0
    %1280 = vmatpush1.msra.mxu0 %v1235
    %1281 = vmatprep.subr.mxu0 0.0
    %1282 = vmatpush1.msra.mxu0 %v1236
    %1283 = vmatprep.subr.mxu0 0.0
    %1284 = vmatpush1.msra.mxu0 %v1237
    %1285 = vmatprep.subr.mxu0 0.0
    %1286 = vmatpush1.msra.mxu0 %v1238
    %1287 = vmatprep.subr.mxu0 0.0
    %1288 = vmatpush1.msra.mxu0 %v1239
    %1289 = vmatprep.subr.mxu0 0.0
    %1290 = vmatpush1.msra.mxu0 %v1240
    %1291 = vmatprep.subr.mxu0 0.0
    %1292 = vmatpush1.msra.mxu0 %v1241
    %1293 = vmatprep.subr.mxu0 0.0
    %1294 = vmatpush1.msra.mxu0 %v1242
    %1295 = vmatprep.subr.mxu0 0.0
    %1296 = vmatpush1.msra.mxu0 %v1243
    %1297 = vmatprep.subr.mxu0 0.0
    %1298 = vmatpush1.msra.mxu0 %v1244
    %1299 = vmatprep.subr.mxu0 0.0
    %1300 = vmatpush1.msra.mxu0 %v1245
    %1301 = vmatprep.subr.mxu0 0.0
    %1302 = vmatpush1.msra.mxu0 %v1246
    %1303 = vmatprep.subr.mxu0 0.0
    %1304 = vmatpush1.msra.mxu0 %v1247
    %1305 = vmatprep.subr.mxu0 0.0
    %1306 = vmatpush1.msra.mxu0 %v1248
    %1307 = vmatprep.subr.mxu0 0.0
    %1308 = vmatpush1.msra.mxu0 %v1249
    %1309 = vmatprep.subr.mxu0 0.0
    %1310 = vmatpush1.msra.mxu0 %v1250
    %1311 = vmatprep.subr.mxu0 0.0
    %1312 = vmatpush1.msra.mxu0 %v1251
    %1313 = vmatprep.subr.mxu0 0.0
    %1314 = vmatpush1.msra.mxu0 %v1252
    %1315 = vmatprep.subr.mxu0 0.0
    %1316 = vmatpush1.msra.mxu0 %v1253
    %1317 = vmatprep.subr.mxu0 0.0
    %1318 = vmatpush1.msra.mxu0 %v1254
    %1319 = vmatprep.mubr.f32.mxu0 %v1196
    %1320 = vmatmul.mubr.f32.gmra.mrb[0].mxu0 %v1187
    %v1321 = vpop.f32.mrb[0].mxu0
    %v1322 = vadd.f32 0.0, %v1321
    %v1323 = vpop.f32.mrb[0].mxu0
    %1324 = vdwg.mxu0
    %v1325 = vmul.f32 %v1322, 0.001953125
    %1326 = vmatprep.subr.mxu0 0.0
    %1327 = vmatpush1.msra.mxu0 %v1223
    %1328 = vmatprep.subr.mxu0 0.0
    %1329 = vmatpush1.msra.mxu0 %v1224
    %1330 = vmatprep.subr.mxu0 0.0
    %1331 = vmatpush1.msra.mxu0 %v1225
    %1332 = vmatprep.subr.mxu0 0.0
    %1333 = vmatpush1.msra.mxu0 %v1226
    %1334 = vmatprep.subr.mxu0 0.0
    %1335 = vmatpush1.msra.mxu0 %v1227
    %1336 = vmatprep.subr.mxu0 0.0
    %1337 = vmatpush1.msra.mxu0 %v1228
    %1338 = vmatprep.subr.mxu0 0.0
    %1339 = vmatpush1.msra.mxu0 %v1229
    %1340 = vmatprep.subr.mxu0 0.0
    %1341 = vmatpush1.msra.mxu0 %v1230
    %1342 = vmatprep.subr.mxu0 0.0
    %1343 = vmatpush1.msra.mxu0 %v1231
    %1344 = vmatprep.subr.mxu0 0.0
    %1345 = vmatpush1.msra.mxu0 %v1232
    %1346 = vmatprep.subr.mxu0 0.0
    %1347 = vmatpush1.msra.mxu0 %v1233
    %1348 = vmatprep.subr.mxu0 0.0
    %1349 = vmatpush1.msra.mxu0 %v1234
    %1350 = vmatprep.subr.mxu0 0.0
    %1351 = vmatpush1.msra.mxu0 %v1235
    %1352 = vmatprep.subr.mxu0 0.0
    %1353 = vmatpush1.msra.mxu0 %v1236
    %1354 = vmatprep.subr.mxu0 0.0
    %1355 = vmatpush1.msra.mxu0 %v1237
    %1356 = vmatprep.subr.mxu0 0.0
    %1357 = vmatpush1.msra.mxu0 %v1238
    %1358 = vmatprep.subr.mxu0 0.0
    %1359 = vmatpush1.msra.mxu0 %v1239
    %1360 = vmatprep.subr.mxu0 0.0
    %1361 = vmatpush1.msra.mxu0 %v1240
    %1362 = vmatprep.subr.mxu0 0.0
    %1363 = vmatpush1.msra.mxu0 %v1241
    %1364 = vmatprep.subr.mxu0 0.0
    %1365 = vmatpush1.msra.mxu0 %v1242
    %1366 = vmatprep.subr.mxu0 0.0
    %1367 = vmatpush1.msra.mxu0 %v1243
    %1368 = vmatprep.subr.mxu0 0.0
    %1369 = vmatpush1.msra.mxu0 %v1244
    %1370 = vmatprep.subr.mxu0 0.0
    %1371 = vmatpush1.msra.mxu0 %v1245
    %1372 = vmatprep.subr.mxu0 0.0
    %1373 = vmatpush1.msra.mxu0 %v1246
    %1374 = vmatprep.subr.mxu0 0.0
    %1375 = vmatpush1.msra.mxu0 %v1247
    %1376 = vmatprep.subr.mxu0 0.0
    %1377 = vmatpush1.msra.mxu0 %v1248
    %1378 = vmatprep.subr.mxu0 0.0
    %1379 = vmatpush1.msra.mxu0 %v1249
    %1380 = vmatprep.subr.mxu0 0.0
    %1381 = vmatpush1.msra.mxu0 %v1250
    %1382 = vmatprep.subr.mxu0 0.0
    %1383 = vmatpush1.msra.mxu0 %v1251
    %1384 = vmatprep.subr.mxu0 0.0
    %1385 = vmatpush1.msra.mxu0 %v1252
    %1386 = vmatprep.subr.mxu0 0.0
    %1387 = vmatpush1.msra.mxu0 %v1253
    %1388 = vmatprep.subr.mxu0 0.0
    %1389 = vmatpush1.msra.mxu0 %v1254
    %1390 = vmatprep.mubr.f32.mxu0 %v1222
    %1391 = vmatmul.mubr.f32.gmra.mrb[0].mxu0 %v1213
    %v1392 = vpop.f32.mrb[0].mxu0
    %v1393 = vadd.f32 0.0, %v1392
    %v1394 = vpop.f32.mrb[0].mxu0
    %1395 = vdwg.mxu0
    %v1396 = vmul.f32 %v1393, 0.001953125
    %v1397 = vmul.f32 %v1325, %v1325
    %v1398 = vsub.f32 %v1396, %v1397
    %v1399 = vmax.f32 %v1398, 0.0
    %v1400 = vadd.f32 %v1399, 1e-05
    %v1401 = vrsqrt.pop %v1400
    %v1402 = vld [vmem:[%s3] sm:$0x1]
    %v1403 = vmul.f32 %v1402, %v1401
    %v1404 = vld [vmem:[%s4] sm:$0x1]
    %v1405 = vmul.f32 %v1325, %v1403
    %v1406 = vsub.f32 %v1404, %v1405
    %v1407 = vld [vmem:[#allocation3] sm:$0xff]
    %v1408 = vld [vmem:[#allocation3 + $0x8] sm:$0xff]
    %v1409 = vld [vmem:[#allocation3 + $0x10] sm:$0xff]
    %v1410 = vld [vmem:[#allocation3 + $0x18] sm:$0xff]
    %vm1411 = vcmask 130048
    %v1413 = vsel %vm1411, %v1403, 0
    %1415 = vmatprep.subr.mxu0 %v1408
    %1416 = vmatpush1.msra.mxu0 %v1407
    %1417 = vmatprep.subr.mxu0 %v1410
    %1418 = vmatpush1.msra.mxu0 %v1409
    %1419 = vmatprep.subr.mxu0 0.0
    %1420 = vmatpush1.msra.mxu0 0.0
    %1421 = vmatprep.subr.mxu0 0.0
    %1422 = vmatpush1.msra.mxu0 0.0
    %1423 = vmatprep.subr.mxu0 0.0
    %1424 = vmatpush1.msra.mxu0 0.0
    %1425 = vmatprep.subr.mxu0 0.0
    %1426 = vmatpush1.msra.mxu0 0.0
    %1427 = vmatprep.subr.mxu0 0.0
    %1428 = vmatpush1.msra.mxu0 0.0
    %1429 = vmatprep.subr.mxu0 0.0
    %1430 = vmatpush1.msra.mxu0 0.0
    %1431 = vmatprep.subr.mxu0 0.0
    %1432 = vmatpush1.msra.mxu0 0.0
    %1433 = vmatprep.subr.mxu0 0.0
    %1434 = vmatpush1.msra.mxu0 0.0
    %1435 = vmatprep.subr.mxu0 0.0
    %1436 = vmatpush1.msra.mxu0 0.0
    %1437 = vmatprep.subr.mxu0 0.0
    %1438 = vmatpush1.msra.mxu0 0.0
    %1439 = vmatprep.subr.mxu0 0.0
    %1440 = vmatpush1.msra.mxu0 0.0
    %1441 = vmatprep.subr.mxu0 0.0
    %1442 = vmatpush1.msra.mxu0 0.0
    %1443 = vmatprep.subr.mxu0 0.0
    %1444 = vmatpush1.msra.mxu0 0.0
    %1445 = vmatprep.subr.mxu0 0.0
    %1446 = vmatpush1.msra.mxu0 0.0
    %1447 = vmatprep.subr.mxu0 0.0
    %1448 = vmatpush1.msra.mxu0 0.0
    %1449 = vmatprep.subr.mxu0 0.0
    %1450 = vmatpush1.msra.mxu0 0.0
    %1451 = vmatprep.subr.mxu0 0.0
    %1452 = vmatpush1.msra.mxu0 0.0
    %1453 = vmatprep.subr.mxu0 0.0
    %1454 = vmatpush1.msra.mxu0 0.0
    %1455 = vmatprep.subr.mxu0 0.0
    %1456 = vmatpush1.msra.mxu0 0.0
    %1457 = vmatprep.subr.mxu0 0.0
    %1458 = vmatpush1.msra.mxu0 0.0
    %1459 = vmatprep.subr.mxu0 0.0
    %1460 = vmatpush1.msra.mxu0 0.0
    %1461 = vmatprep.subr.mxu0 0.0
    %1462 = vmatpush1.msra.mxu0 0.0
    %1463 = vmatprep.subr.mxu0 0.0
    %1464 = vmatpush1.msra.mxu0 0.0
    %1465 = vmatprep.subr.mxu0 0.0
    %1466 = vmatpush1.msra.mxu0 0.0
    %1467 = vmatprep.subr.mxu0 0.0
    %1468 = vmatpush1.msra.mxu0 0.0
    %1469 = vmatprep.subr.mxu0 0.0
    %1470 = vmatpush1.msra.mxu0 0.0
    %1471 = vmatprep.subr.mxu0 0.0
    %1472 = vmatpush1.msra.mxu0 0.0
    %1473 = vmatprep.subr.mxu0 0.0
    %1474 = vmatpush1.msra.mxu0 0.0
    %1475 = vmatprep.subr.mxu0 0.0
    %1476 = vmatpush1.msra.mxu0 0.0
    %1477 = vmatprep.subr.mxu0 0.0
    %1478 = vmatpush1.msra.mxu0 0.0
    %1479 = vmatprep.mubr.f32.mxu0 0.0
    %1480 = vmatmul.mubr.f32.gmra.mrb[0].mxu0 %v1413
    %v1481 = vpop.f32.mrb[0].mxu0
    %v1482 = vadd.f32 0.0, %v1481
    %v1483 = vpop.f32.mrb[0].mxu0
    %v1484 = vadd.f32 0.0, %v1483
    %1485 = vdwg.mxu0
    %v1487 = vsel %vm1411, %v1406, 0
    %1489 = vmatprep.subr.mxu0 %v1408
    %1490 = vmatpush1.msra.mxu0 %v1407
    %1491 = vmatprep.subr.mxu0 %v1410
    %1492 = vmatpush1.msra.mxu0 %v1409
    %1493 = vmatprep.subr.mxu0 0.0
    %1494 = vmatpush1.msra.mxu0 0.0
    %1495 = vmatprep.subr.mxu0 0.0
    %1496 = vmatpush1.msra.mxu0 0.0
    %1497 = vmatprep.subr.mxu0 0.0
    %1498 = vmatpush1.msra.mxu0 0.0
    %1499 = vmatprep.subr.mxu0 0.0
    %1500 = vmatpush1.msra.mxu0 0.0
    %1501 = vmatprep.subr.mxu0 0.0
    %1502 = vmatpush1.msra.mxu0 0.0
    %1503 = vmatprep.subr.mxu0 0.0
    %1504 = vmatpush1.msra.mxu0 0.0
    %1505 = vmatprep.subr.mxu0 0.0
    %1506 = vmatpush1.msra.mxu0 0.0
    %1507 = vmatprep.subr.mxu0 0.0
    %1508 = vmatpush1.msra.mxu0 0.0
    %1509 = vmatprep.subr.mxu0 0.0
    %1510 = vmatpush1.msra.mxu0 0.0
    %1511 = vmatprep.subr.mxu0 0.0
    %1512 = vmatpush1.msra.mxu0 0.0
    %1513 = vmatprep.subr.mxu0 0.0
    %1514 = vmatpush1.msra.mxu0 0.0
    %1515 = vmatprep.subr.mxu0 0.0
    %1516 = vmatpush1.msra.mxu0 0.0
    %1517 = vmatprep.subr.mxu0 0.0
    %1518 = vmatpush1.msra.mxu0 0.0
    %1519 = vmatprep.subr.mxu0 0.0
    %1520 = vmatpush1.msra.mxu0 0.0
    %1521 = vmatprep.subr.mxu0 0.0
    %1522 = vmatpush1.msra.mxu0 0.0
    %1523 = vmatprep.subr.mxu0 0.0
    %1524 = vmatpush1.msra.mxu0 0.0
    %1525 = vmatprep.subr.mxu0 0.0
    %1526 = vmatpush1.msra.mxu0 0.0
    %1527 = vmatprep.subr.mxu0 0.0
    %1528 = vmatpush1.msra.mxu0 0.0
    %1529 = vmatprep.subr.mxu0 0.0
    %1530 = vmatpush1.msra.mxu0 0.0
    %1531 = vmatprep.subr.mxu0 0.0
    %1532 = vmatpush1.msra.mxu0 0.0
    %1533 = vmatprep.subr.mxu0 0.0
    %1534 = vmatpush1.msra.mxu0 0.0
    %1535 = vmatprep.subr.mxu0 0.0
    %1536 = vmatpush1.msra.mxu0 0.0
    %1537 = vmatprep.subr.mxu0 0.0
    %1538 = vmatpush1.msra.mxu0 0.0
    %1539 = vmatprep.subr.mxu0 0.0
    %1540 = vmatpush1.msra.mxu0 0.0
    %1541 = vmatprep.subr.mxu0 0.0
    %1542 = vmatpush1.msra.mxu0 0.0
    %1543 = vmatprep.subr.mxu0 0.0
    %1544 = vmatpush1.msra.mxu0 0.0
    %1545 = vmatprep.subr.mxu0 0.0
    %1546 = vmatpush1.msra.mxu0 0.0
    %1547 = vmatprep.subr.mxu0 0.0
    %1548 = vmatpush1.msra.mxu0 0.0
    %1549 = vmatprep.subr.mxu0 0.0
    %1550 = vmatpush1.msra.mxu0 0.0
    %1551 = vmatprep.subr.mxu0 0.0
    %1552 = vmatpush1.msra.mxu0 0.0
    %1553 = vmatprep.mubr.f32.mxu0 0.0
    %1554 = vmatmul.mubr.f32.gmra.mrb[0].mxu0 %v1487
    %v1555 = vpop.f32.mrb[0].mxu0
    %v1556 = vadd.f32 0.0, %v1555
    %v1557 = vpop.f32.mrb[0].mxu0
    %v1558 = vadd.f32 0.0, %v1557
    %1559 = vdwg.mxu0
    %v1560 = vlaneseq
    %v1561 = vshrl.u32 %v1560, 7
    %v1562 = vsub.s32 0, %v1561
    %v1563 = vrot.slane %v1482, %v1562
    %v1564 = vlaneseq
    %v1565 = vshrl.u32 %v1564, 7
    %v1566 = vsub.s32 0, %v1565
    %v1567 = vrot.slane %v1484, %v1566
    %v1568 = vmul.f32 %v1171, %v1563
    %v1569 = vmul.f32 %v1172, %v1567
    %v1570 = vmul.f32 %v1173, %v1563
    %v1571 = vmul.f32 %v1174, %v1567
    %v1572 = vmul.f32 %v1175, %v1563
    %v1573 = vmul.f32 %v1176, %v1567
    %v1574 = vmul.f32 %v1177, %v1563
    %v1575 = vmul.f32 %v1178, %v1567
    %v1576 = vlaneseq
    %v1577 = vshrl.u32 %v1576, 7
    %v1578 = vsub.s32 0, %v1577
    %v1579 = vrot.slane %v1556, %v1578
    %v1580 = vlaneseq
    %v1581 = vshrl.u32 %v1580, 7
    %v1582 = vsub.s32 0, %v1581
    %v1583 = vrot.slane %v1558, %v1582
    %v1584 = vadd.f32 %v1568, %v1579
    %v1585 = vadd.f32 %v1569, %v1583
    %v1586 = vadd.f32 %v1570, %v1579
    %v1587 = vadd.f32 %v1571, %v1583
    %v1588 = vadd.f32 %v1572, %v1579
    %v1589 = vadd.f32 %v1573, %v1583
    %v1590 = vadd.f32 %v1574, %v1579
    %v1591 = vadd.f32 %v1575, %v1583
    %v1592 = vmax.f32 %v1584, 0.0
    %v1593 = vmax.f32 %v1585, 0.0
    %v1594 = vmax.f32 %v1586, 0.0
    %v1595 = vmax.f32 %v1587, 0.0
    %v1596 = vmax.f32 %v1588, 0.0
    %v1597 = vmax.f32 %v1589, 0.0
    %v1598 = vmax.f32 %v1590, 0.0
    %v1599 = vmax.f32 %v1591, 0.0
    %v1600 = vld [vmem:[#allocation5] sm:$0xff]
    %v1601 = vld [vmem:[#allocation5 + $0x8] sm:$0xff]
    %vm1602 = vcmask 261120
    %v1604 = vsel %vm1602, %v1600, 0
    %v1607 = vsel %vm1602, %v1601, 0
    %1609 = vmatprep.subr.mxu0 %v1593
    %1610 = vmatpush1.msra.mxu0 %v1592
    %1611 = vmatprep.subr.mxu0 %v1595
    %1612 = vmatpush1.msra.mxu0 %v1594
    %1613 = vmatprep.subr.mxu0 %v1597
    %1614 = vmatpush1.msra.mxu0 %v1596
    %1615 = vmatprep.subr.mxu0 %v1599
    %1616 = vmatpush1.msra.mxu0 %v1598
    %1617 = vmatprep.subr.mxu0 0.0
    %1618 = vmatpush1.msra.mxu0 0.0
    %1619 = vmatprep.subr.mxu0 0.0
    %1620 = vmatpush1.msra.mxu0 0.0
    %1621 = vmatprep.subr.mxu0 0.0
    %1622 = vmatpush1.msra.mxu0 0.0
    %1623 = vmatprep.subr.mxu0 0.0
    %1624 = vmatpush1.msra.mxu0 0.0
    %1625 = vmatprep.subr.mxu0 0.0
    %1626 = vmatpush1.msra.mxu0 0.0
    %1627 = vmatprep.subr.mxu0 0.0
    %1628 = vmatpush1.msra.mxu0 0.0
    %1629 = vmatprep.subr.mxu0 0.0
    %1630 = vmatpush1.msra.mxu0 0.0
    %1631 = vmatprep.subr.mxu0 0.0
    %1632 = vmatpush1.msra.mxu0 0.0
    %1633 = vmatprep.subr.mxu0 0.0
    %1634 = vmatpush1.msra.mxu0 0.0
    %1635 = vmatprep.subr.mxu0 0.0
    %1636 = vmatpush1.msra.mxu0 0.0
    %1637 = vmatprep.subr.mxu0 0.0
    %1638 = vmatpush1.msra.mxu0 0.0
    %1639 = vmatprep.subr.mxu0 0.0
    %1640 = vmatpush1.msra.mxu0 0.0
    %1641 = vmatprep.subr.mxu0 0.0
    %1642 = vmatpush1.msra.mxu0 0.0
    %1643 = vmatprep.subr.mxu0 0.0
    %1644 = vmatpush1.msra.mxu0 0.0
    %1645 = vmatprep.subr.mxu0 0.0
    %1646 = vmatpush1.msra.mxu0 0.0
    %1647 = vmatprep.subr.mxu0 0.0
    %1648 = vmatpush1.msra.mxu0 0.0
    %1649 = vmatprep.subr.mxu0 0.0
    %1650 = vmatpush1.msra.mxu0 0.0
    %1651 = vmatprep.subr.mxu0 0.0
    %1652 = vmatpush1.msra.mxu0 0.0
    %1653 = vmatprep.subr.mxu0 0.0
    %1654 = vmatpush1.msra.mxu0 0.0
    %1655 = vmatprep.subr.mxu0 0.0
    %1656 = vmatpush1.msra.mxu0 0.0
    %1657 = vmatprep.subr.mxu0 0.0
    %1658 = vmatpush1.msra.mxu0 0.0
    %1659 = vmatprep.subr.mxu0 0.0
    %1660 = vmatpush1.msra.mxu0 0.0
    %1661 = vmatprep.subr.mxu0 0.0
    %1662 = vmatpush1.msra.mxu0 0.0
    %1663 = vmatprep.subr.mxu0 0.0
    %1664 = vmatpush1.msra.mxu0 0.0
    %1665 = vmatprep.subr.mxu0 0.0
    %1666 = vmatpush1.msra.mxu0 0.0
    %1667 = vmatprep.subr.mxu0 0.0
    %1668 = vmatpush1.msra.mxu0 0.0
    %1669 = vmatprep.subr.mxu0 0.0
    %1670 = vmatpush1.msra.mxu0 0.0
    %1671 = vmatprep.subr.mxu0 0.0
    %1672 = vmatpush1.msra.mxu0 0.0
    %1673 = vmatprep.mubr.f32.mxu0 0.0
    %1674 = vmatmul.mubr.f32.gmra.mrb[0].mxu0 %v1604
    %v1675 = vpop.f32.mrb[0].mxu0
    %v1676 = vadd.f32 0.0, %v1675
    %v1677 = vpop.f32.mrb[0].mxu0
    %v1678 = vadd.f32 0.0, %v1677
    %1679 = vmatprep.mubr.f32.mxu0 0.0
    %1680 = vmatmul.mubr.f32.gmra.mrb[0].mxu0 %v1607
    %v1681 = vpop.f32.mrb[0].mxu0
    %v1682 = vadd.f32 0.0, %v1681
    %v1683 = vpop.f32.mrb[0].mxu0
    %v1684 = vadd.f32 0.0, %v1683
    %1685 = vdwg.mxu0
    %v1686 = vpack.c.bf16 %v1682, %v1676
    %v1687 = vpack.c.bf16 %v1684, %v1678
    %v1688 = vld [vmem:[%s8] sm:$0xff]
    %v1689 = vld [vmem:[%s8 + $0x8] sm:$0xff]
    %v1690 = vld [vmem:[%s8 + $0x10] sm:$0xff]
    %v1691 = vld [vmem:[%s8 + $0x18] sm:$0xff]
    %v1692 = vld [vmem:[%s8 + $0x20] sm:$0xff]
    %v1693 = vld [vmem:[%s8 + $0x28] sm:$0xff]
    %v1694 = vld [vmem:[%s8 + $0x30] sm:$0xff]
    %v1695 = vld [vmem:[%s8 + $0x38] sm:$0xff]
    %v1696 = vld [vmem:[%s8 + $0x40] sm:$0xff]
    %v1697 = vld [vmem:[%s8 + $0x48] sm:$0xff]
    %v1698 = vld [vmem:[%s8 + $0x50] sm:$0xff]
    %v1699 = vld [vmem:[%s8 + $0x58] sm:$0xff]
    %v1700 = vld [vmem:[%s8 + $0x60] sm:$0xff]
    %v1701 = vld [vmem:[%s8 + $0x68] sm:$0xff]
    %v1702 = vld [vmem:[%s8 + $0x70] sm:$0xff]
    %v1703 = vld [vmem:[%s8 + $0x78] sm:$0xff]
    %v1704 = vld [vmem:[%s8 + $0x80] sm:$0xff]
    %v1705 = vld [vmem:[%s8 + $0x88] sm:$0xff]
    %v1706 = vld [vmem:[%s8 + $0x90] sm:$0xff]
    %v1707 = vld [vmem:[%s8 + $0x98] sm:$0xff]
    %v1708 = vld [vmem:[%s8 + $0xa0] sm:$0xff]
    %v1709 = vld [vmem:[%s8 + $0xa8] sm:$0xff]
    %v1710 = vld [vmem:[%s8 + $0xb0] sm:$0xff]
    %v1711 = vld [vmem:[%s8 + $0xb8] sm:$0xff]
    %v1712 = vld [vmem:[%s8 + $0xc0] sm:$0xff]
    %v1713 = vld [vmem:[%s8 + $0xc8] sm:$0xff]
    %v1714 = vld [vmem:[%s8 + $0xd0] sm:$0xff]
    %v1715 = vld [vmem:[%s8 + $0xd8] sm:$0xff]
    %v1716 = vld [vmem:[%s8 + $0xe0] sm:$0xff]
    %v1717 = vld [vmem:[%s8 + $0xe8] sm:$0xff]
    %v1718 = vld [vmem:[%s8 + $0xf0] sm:$0xff]
    %v1719 = vld [vmem:[%s8 + $0xf8] sm:$0xff]
    %s1720 = scalar_lea.vmem [#allocation5], 16
    %v1721 = vld [vmem:[%s1720] sm:$0xff]
    %v1722 = vld [vmem:[%s1720 + $0x8] sm:$0xff]
    %v1724 = vsel %vm1602, %v1721, 0
    %v1727 = vsel %vm1602, %v1722, 0
    %1729 = vmatprep.subr.mxu0 %v1593
    %1730 = vmatpush1.msra.mxu0 %v1592
    %1731 = vmatprep.subr.mxu0 %v1595
    %1732 = vmatpush1.msra.mxu0 %v1594
    %1733 = vmatprep.subr.mxu0 %v1597
    %1734 = vmatpush1.msra.mxu0 %v1596
    %1735 = vmatprep.subr.mxu0 %v1599
    %1736 = vmatpush1.msra.mxu0 %v1598
    %1737 = vmatprep.subr.mxu0 0.0
    %1738 = vmatpush1.msra.mxu0 0.0
    %1739 = vmatprep.subr.mxu0 0.0
    %1740 = vmatpush1.msra.mxu0 0.0
    %1741 = vmatprep.subr.mxu0 0.0
    %1742 = vmatpush1.msra.mxu0 0.0
    %1743 = vmatprep.subr.mxu0 0.0
    %1744 = vmatpush1.msra.mxu0 0.0
    %1745 = vmatprep.subr.mxu0 0.0
    %1746 = vmatpush1.msra.mxu0 0.0
    %1747 = vmatprep.subr.mxu0 0.0
    %1748 = vmatpush1.msra.mxu0 0.0
    %1749 = vmatprep.subr.mxu0 0.0
    %1750 = vmatpush1.msra.mxu0 0.0
    %1751 = vmatprep.subr.mxu0 0.0
    %1752 = vmatpush1.msra.mxu0 0.0
    %1753 = vmatprep.subr.mxu0 0.0
    %1754 = vmatpush1.msra.mxu0 0.0
    %1755 = vmatprep.subr.mxu0 0.0
    %1756 = vmatpush1.msra.mxu0 0.0
    %1757 = vmatprep.subr.mxu0 0.0
    %1758 = vmatpush1.msra.mxu0 0.0
    %1759 = vmatprep.subr.mxu0 0.0
    %1760 = vmatpush1.msra.mxu0 0.0
    %1761 = vmatprep.subr.mxu0 0.0
    %1762 = vmatpush1.msra.mxu0 0.0
    %1763 = vmatprep.subr.mxu0 0.0
    %1764 = vmatpush1.msra.mxu0 0.0
    %1765 = vmatprep.subr.mxu0 0.0
    %1766 = vmatpush1.msra.mxu0 0.0
    %1767 = vmatprep.subr.mxu0 0.0
    %1768 = vmatpush1.msra.mxu0 0.0
    %1769 = vmatprep.subr.mxu0 0.0
    %1770 = vmatpush1.msra.mxu0 0.0
    %1771 = vmatprep.subr.mxu0 0.0
    %1772 = vmatpush1.msra.mxu0 0.0
    %1773 = vmatprep.subr.mxu0 0.0
    %1774 = vmatpush1.msra.mxu0 0.0
    %1775 = vmatprep.subr.mxu0 0.0
    %1776 = vmatpush1.msra.mxu0 0.0
    %1777 = vmatprep.subr.mxu0 0.0
    %1778 = vmatpush1.msra.mxu0 0.0
    %1779 = vmatprep.subr.mxu0 0.0
    %1780 = vmatpush1.msra.mxu0 0.0
    %1781 = vmatprep.subr.mxu0 0.0
    %1782 = vmatpush1.msra.mxu0 0.0
    %1783 = vmatprep.subr.mxu0 0.0
    %1784 = vmatpush1.msra.mxu0 0.0
    %1785 = vmatprep.subr.mxu0 0.0
    %1786 = vmatpush1.msra.mxu0 0.0
    %1787 = vmatprep.subr.mxu0 0.0
    %1788 = vmatpush1.msra.mxu0 0.0
    %1789 = vmatprep.subr.mxu0 0.0
    %1790 = vmatpush1.msra.mxu0 0.0
    %1791 = vmatprep.subr.mxu0 0.0
    %1792 = vmatpush1.msra.mxu0 0.0
    %1793 = vmatprep.mubr.f32.mxu0 0.0
    %1794 = vmatmul.mubr.f32.gmra.mrb[0].mxu0 %v1724
    %v1795 = vpop.f32.mrb[0].mxu0
    %v1796 = vadd.f32 0.0, %v1795
    %v1797 = vpop.f32.mrb[0].mxu0
    %v1798 = vadd.f32 0.0, %v1797
    %1799 = vmatprep.mubr.f32.mxu0 0.0
    %1800 = vmatmul.mubr.f32.gmra.mrb[0].mxu0 %v1727
    %v1801 = vpop.f32.mrb[0].mxu0
    %v1802 = vadd.f32 0.0, %v1801
    %v1803 = vpop.f32.mrb[0].mxu0
    %v1804 = vadd.f32 0.0, %v1803
    %1805 = vdwg.mxu0
    %v1806 = vpack.c.bf16 %v1802, %v1796
    %v1807 = vpack.c.bf16 %v1804, %v1798
    %s1808 = scalar_lea.vmem %s8, 256
    %v1809 = vld [vmem:[%s1808] sm:$0xff]
    %v1810 = vld [vmem:[%s1808 + $0x8] sm:$0xff]
    %v1811 = vld [vmem:[%s1808 + $0x10] sm:$0xff]
    %v1812 = vld [vmem:[%s1808 + $0x18] sm:$0xff]
    %v1813 = vld [vmem:[%s1808 + $0x20] sm:$0xff]
    %v1814 = vld [vmem:[%s1808 + $0x28] sm:$0xff]
    %v1815 = vld [vmem:[%s1808 + $0x30] sm:$0xff]
    %v1816 = vld [vmem:[%s1808 + $0x38] sm:$0xff]
    %v1817 = vld [vmem:[%s1808 + $0x40] sm:$0xff]
    %v1818 = vld [vmem:[%s1808 + $0x48] sm:$0xff]
    %v1819 = vld [vmem:[%s1808 + $0x50] sm:$0xff]
    %v1820 = vld [vmem:[%s1808 + $0x58] sm:$0xff]
    %v1821 = vld [vmem:[%s1808 + $0x60] sm:$0xff]
    %v1822 = vld [vmem:[%s1808 + $0x68] sm:$0xff]
    %v1823 = vld [vmem:[%s1808 + $0x70] sm:$0xff]
    %v1824 = vld [vmem:[%s1808 + $0x78] sm:$0xff]
    %v1825 = vld [vmem:[%s1808 + $0x80] sm:$0xff]
    %v1826 = vld [vmem:[%s1808 + $0x88] sm:$0xff]
    %v1827 = vld [vmem:[%s1808 + $0x90] sm:$0xff]
    %v1828 = vld [vmem:[%s1808 + $0x98] sm:$0xff]
    %v1829 = vld [vmem:[%s1808 + $0xa0] sm:$0xff]
    %v1830 = vld [vmem:[%s1808 + $0xa8] sm:$0xff]
    %v1831 = vld [vmem:[%s1808 + $0xb0] sm:$0xff]
    %v1832 = vld [vmem:[%s1808 + $0xb8] sm:$0xff]
    %v1833 = vld [vmem:[%s1808 + $0xc0] sm:$0xff]
    %v1834 = vld [vmem:[%s1808 + $0xc8] sm:$0xff]
    %v1835 = vld [vmem:[%s1808 + $0xd0] sm:$0xff]
    %v1836 = vld [vmem:[%s1808 + $0xd8] sm:$0xff]
    %v1837 = vld [vmem:[%s1808 + $0xe0] sm:$0xff]
    %v1838 = vld [vmem:[%s1808 + $0xe8] sm:$0xff]
    %v1839 = vld [vmem:[%s1808 + $0xf0] sm:$0xff]
    %v1840 = vld [vmem:[%s1808 + $0xf8] sm:$0xff]
    %v1873 = vunpack.c.l.b16 %v1809
    %v1874 = vunpack.c.h.b16 %v1809
    %v1875 = vunpack.c.l.b16 %v1810
    %v1876 = vunpack.c.h.b16 %v1810
    %v1877 = vunpack.c.l.b16 %v1811
    %v1878 = vunpack.c.h.b16 %v1811
    %v1879 = vunpack.c.l.b16 %v1812
    %v1880 = vunpack.c.h.b16 %v1812
    %v1881 = vunpack.c.l.b16 %v1813
    %v1882 = vunpack.c.h.b16 %v1813
    %v1883 = vunpack.c.l.b16 %v1814
    %v1884 = vunpack.c.h.b16 %v1814
    %v1885 = vunpack.c.l.b16 %v1815
    %v1886 = vunpack.c.h.b16 %v1815
    %v1887 = vunpack.c.l.b16 %v1816
    %v1888 = vunpack.c.h.b16 %v1816
    %v1889 = vunpack.c.l.b16 %v1817
    %v1890 = vunpack.c.h.b16 %v1817
    %v1891 = vunpack.c.l.b16 %v1818
    %v1892 = vunpack.c.h.b16 %v1818
    %v1893 = vunpack.c.l.b16 %v1819
    %v1894 = vunpack.c.h.b16 %v1819
    %v1895 = vunpack.c.l.b16 %v1820
    %v1896 = vunpack.c.h.b16 %v1820
    %v1897 = vunpack.c.l.b16 %v1821
    %v1898 = vunpack.c.h.b16 %v1821
    %v1899 = vunpack.c.l.b16 %v1822
    %v1900 = vunpack.c.h.b16 %v1822
    %v1901 = vunpack.c.l.b16 %v1823
    %v1902 = vunpack.c.h.b16 %v1823
    %v1903 = vunpack.c.l.b16 %v1824
    %v1904 = vunpack.c.h.b16 %v1824
    %v1905 = vunpack.c.l.b16 %v1825
    %v1906 = vunpack.c.h.b16 %v1825
    %v1907 = vunpack.c.l.b16 %v1826
    %v1908 = vunpack.c.h.b16 %v1826
    %v1909 = vunpack.c.l.b16 %v1827
    %v1910 = vunpack.c.h.b16 %v1827
    %v1911 = vunpack.c.l.b16 %v1828
    %v1912 = vunpack.c.h.b16 %v1828
    %v1913 = vunpack.c.l.b16 %v1829
    %v1914 = vunpack.c.h.b16 %v1829
    %v1915 = vunpack.c.l.b16 %v1830
    %v1916 = vunpack.c.h.b16 %v1830
    %v1917 = vunpack.c.l.b16 %v1831
    %v1918 = vunpack.c.h.b16 %v1831
    %v1919 = vunpack.c.l.b16 %v1832
    %v1920 = vunpack.c.h.b16 %v1832
    %v1921 = vunpack.c.l.b16 %v1833
    %v1922 = vunpack.c.h.b16 %v1833
    %v1923 = vunpack.c.l.b16 %v1834
    %v1924 = vunpack.c.h.b16 %v1834
    %v1925 = vunpack.c.l.b16 %v1835
    %v1926 = vunpack.c.h.b16 %v1835
    %v1927 = vunpack.c.l.b16 %v1836
    %v1928 = vunpack.c.h.b16 %v1836
    %v1929 = vunpack.c.l.b16 %v1837
    %v1930 = vunpack.c.h.b16 %v1837
    %v1931 = vunpack.c.l.b16 %v1838
    %v1932 = vunpack.c.h.b16 %v1838
    %v1933 = vunpack.c.l.b16 %v1839
    %v1934 = vunpack.c.h.b16 %v1839
    %v1935 = vunpack.c.l.b16 %v1840
    %v1936 = vunpack.c.h.b16 %v1840
    %v1937 = vpack.c.b16 %v1875, %v1873
    %v1938 = vpack.c.b16 %v1876, %v1874
    %v1939 = vpack.c.b16 %v1879, %v1877
    %v1940 = vpack.c.b16 %v1880, %v1878
    %v1941 = vpack.c.b16 %v1883, %v1881
    %v1942 = vpack.c.b16 %v1884, %v1882
    %v1943 = vpack.c.b16 %v1887, %v1885
    %v1944 = vpack.c.b16 %v1888, %v1886
    %v1945 = vpack.c.b16 %v1891, %v1889
    %v1946 = vpack.c.b16 %v1892, %v1890
    %v1947 = vpack.c.b16 %v1895, %v1893
    %v1948 = vpack.c.b16 %v1896, %v1894
    %v1949 = vpack.c.b16 %v1899, %v1897
    %v1950 = vpack.c.b16 %v1900, %v1898
    %v1951 = vpack.c.b16 %v1903, %v1901
    %v1952 = vpack.c.b16 %v1904, %v1902
    %v1953 = vpack.c.b16 %v1907, %v1905
    %v1954 = vpack.c.b16 %v1908, %v1906
    %v1955 = vpack.c.b16 %v1911, %v1909
    %v1956 = vpack.c.b16 %v1912, %v1910
    %v1957 = vpack.c.b16 %v1915, %v1913
    %v1958 = vpack.c.b16 %v1916, %v1914
    %v1959 = vpack.c.b16 %v1919, %v1917
    %v1960 = vpack.c.b16 %v1920, %v1918
    %v1961 = vpack.c.b16 %v1923, %v1921
    %v1962 = vpack.c.b16 %v1924, %v1922
    %v1963 = vpack.c.b16 %v1927, %v1925
    %v1964 = vpack.c.b16 %v1928, %v1926
    %v1965 = vpack.c.b16 %v1931, %v1929
    %v1966 = vpack.c.b16 %v1932, %v1930
    %v1967 = vpack.c.b16 %v1935, %v1933
    %v1968 = vpack.c.b16 %v1936, %v1934
    %2001 = vmatprep.subr.bf16.mxu0 %v1938
    %2002 = vmatpush1.bf16.msra.mxu0 %v1937
    %2003 = vmatprep.subr.bf16.mxu0 %v1940
    %2004 = vmatpush1.bf16.msra.mxu0 %v1939
    %2005 = vmatprep.subr.bf16.mxu0 %v1942
    %2006 = vmatpush1.bf16.msra.mxu0 %v1941
    %2007 = vmatprep.subr.bf16.mxu0 %v1944
    %2008 = vmatpush1.bf16.msra.mxu0 %v1943
    %2009 = vmatprep.subr.bf16.mxu0 %v1946
    %2010 = vmatpush1.bf16.msra.mxu0 %v1945
    %2011 = vmatprep.subr.bf16.mxu0 %v1948
    %2012 = vmatpush1.bf16.msra.mxu0 %v1947
    %2013 = vmatprep.subr.bf16.mxu0 %v1950
    %2014 = vmatpush1.bf16.msra.mxu0 %v1949
    %2015 = vmatprep.subr.bf16.mxu0 %v1952
    %2016 = vmatpush1.bf16.msra.mxu0 %v1951
    %2017 = vmatprep.subr.bf16.mxu0 %v1954
    %2018 = vmatpush1.bf16.msra.mxu0 %v1953
    %2019 = vmatprep.subr.bf16.mxu0 %v1956
    %2020 = vmatpush1.bf16.msra.mxu0 %v1955
    %2021 = vmatprep.subr.bf16.mxu0 %v1958
    %2022 = vmatpush1.bf16.msra.mxu0 %v1957
    %2023 = vmatprep.subr.bf16.mxu0 %v1960
    %2024 = vmatpush1.bf16.msra.mxu0 %v1959
    %2025 = vmatprep.subr.bf16.mxu0 %v1962
    %2026 = vmatpush1.bf16.msra.mxu0 %v1961
    %2027 = vmatprep.subr.bf16.mxu0 %v1964
    %2028 = vmatpush1.bf16.msra.mxu0 %v1963
    %2029 = vmatprep.subr.bf16.mxu0 %v1966
    %2030 = vmatpush1.bf16.msra.mxu0 %v1965
    %2031 = vmatprep.subr.bf16.mxu0 %v1968
    %2032 = vmatpush1.bf16.msra.mxu0 %v1967
    %2033 = vmatprep.mubr.bf16.mxu0 %v1807
    %2034 = vmatmul.mubr.bf16.gmra.mrb[0].mxu0 %v1806
    %v2035 = vpop.f32.mrb[0].mxu0
    %v2036 = vadd.f32 0.0, %v2035
    %v2037 = vpop.f32.mrb[0].mxu0
    %v2038 = vadd.f32 0.0, %v2037
    %v2039 = vpop.f32.mrb[0].mxu0
    %v2040 = vadd.f32 0.0, %v2039
    %v2041 = vpop.f32.mrb[0].mxu0
    %v2042 = vadd.f32 0.0, %v2041
    %2043 = vdwg.mxu0
    %v2076 = vunpack.c.l.b16 %v1688
    %v2077 = vunpack.c.h.b16 %v1688
    %v2078 = vunpack.c.l.b16 %v1689
    %v2079 = vunpack.c.h.b16 %v1689
    %v2080 = vunpack.c.l.b16 %v1690
    %v2081 = vunpack.c.h.b16 %v1690
    %v2082 = vunpack.c.l.b16 %v1691
    %v2083 = vunpack.c.h.b16 %v1691
    %v2084 = vunpack.c.l.b16 %v1692
    %v2085 = vunpack.c.h.b16 %v1692
    %v2086 = vunpack.c.l.b16 %v1693
    %v2087 = vunpack.c.h.b16 %v1693
    %v2088 = vunpack.c.l.b16 %v1694
    %v2089 = vunpack.c.h.b16 %v1694
    %v2090 = vunpack.c.l.b16 %v1695
    %v2091 = vunpack.c.h.b16 %v1695
    %v2092 = vunpack.c.l.b16 %v1696
    %v2093 = vunpack.c.h.b16 %v1696
    %v2094 = vunpack.c.l.b16 %v1697
    %v2095 = vunpack.c.h.b16 %v1697
    %v2096 = vunpack.c.l.b16 %v1698
    %v2097 = vunpack.c.h.b16 %v1698
    %v2098 = vunpack.c.l.b16 %v1699
    %v2099 = vunpack.c.h.b16 %v1699
    %v2100 = vunpack.c.l.b16 %v1700
    %v2101 = vunpack.c.h.b16 %v1700
    %v2102 = vunpack.c.l.b16 %v1701
    %v2103 = vunpack.c.h.b16 %v1701
    %v2104 = vunpack.c.l.b16 %v1702
    %v2105 = vunpack.c.h.b16 %v1702
    %v2106 = vunpack.c.l.b16 %v1703
    %v2107 = vunpack.c.h.b16 %v1703
    %v2108 = vunpack.c.l.b16 %v1704
    %v2109 = vunpack.c.h.b16 %v1704
    %v2110 = vunpack.c.l.b16 %v1705
    %v2111 = vunpack.c.h.b16 %v1705
    %v2112 = vunpack.c.l.b16 %v1706
    %v2113 = vunpack.c.h.b16 %v1706
    %v2114 = vunpack.c.l.b16 %v1707
    %v2115 = vunpack.c.h.b16 %v1707
    %v2116 = vunpack.c.l.b16 %v1708
    %v2117 = vunpack.c.h.b16 %v1708
    %v2118 = vunpack.c.l.b16 %v1709
    %v2119 = vunpack.c.h.b16 %v1709
    %v2120 = vunpack.c.l.b16 %v1710
    %v2121 = vunpack.c.h.b16 %v1710
    %v2122 = vunpack.c.l.b16 %v1711
    %v2123 = vunpack.c.h.b16 %v1711
    %v2124 = vunpack.c.l.b16 %v1712
    %v2125 = vunpack.c.h.b16 %v1712
    %v2126 = vunpack.c.l.b16 %v1713
    %v2127 = vunpack.c.h.b16 %v1713
    %v2128 = vunpack.c.l.b16 %v1714
    %v2129 = vunpack.c.h.b16 %v1714
    %v2130 = vunpack.c.l.b16 %v1715
    %v2131 = vunpack.c.h.b16 %v1715
    %v2132 = vunpack.c.l.b16 %v1716
    %v2133 = vunpack.c.h.b16 %v1716
    %v2134 = vunpack.c.l.b16 %v1717
    %v2135 = vunpack.c.h.b16 %v1717
    %v2136 = vunpack.c.l.b16 %v1718
    %v2137 = vunpack.c.h.b16 %v1718
    %v2138 = vunpack.c.l.b16 %v1719
    %v2139 = vunpack.c.h.b16 %v1719
    %v2140 = vpack.c.b16 %v2078, %v2076
    %v2141 = vpack.c.b16 %v2079, %v2077
    %v2142 = vpack.c.b16 %v2082, %v2080
    %v2143 = vpack.c.b16 %v2083, %v2081
    %v2144 = vpack.c.b16 %v2086, %v2084
    %v2145 = vpack.c.b16 %v2087, %v2085
    %v2146 = vpack.c.b16 %v2090, %v2088
    %v2147 = vpack.c.b16 %v2091, %v2089
    %v2148 = vpack.c.b16 %v2094, %v2092
    %v2149 = vpack.c.b16 %v2095, %v2093
    %v2150 = vpack.c.b16 %v2098, %v2096
    %v2151 = vpack.c.b16 %v2099, %v2097
    %v2152 = vpack.c.b16 %v2102, %v2100
    %v2153 = vpack.c.b16 %v2103, %v2101
    %v2154 = vpack.c.b16 %v2106, %v2104
    %v2155 = vpack.c.b16 %v2107, %v2105
    %v2156 = vpack.c.b16 %v2110, %v2108
    %v2157 = vpack.c.b16 %v2111, %v2109
    %v2158 = vpack.c.b16 %v2114, %v2112
    %v2159 = vpack.c.b16 %v2115, %v2113
    %v2160 = vpack.c.b16 %v2118, %v2116
    %v2161 = vpack.c.b16 %v2119, %v2117
    %v2162 = vpack.c.b16 %v2122, %v2120
    %v2163 = vpack.c.b16 %v2123, %v2121
    %v2164 = vpack.c.b16 %v2126, %v2124
    %v2165 = vpack.c.b16 %v2127, %v2125
    %v2166 = vpack.c.b16 %v2130, %v2128
    %v2167 = vpack.c.b16 %v2131, %v2129
    %v2168 = vpack.c.b16 %v2134, %v2132
    %v2169 = vpack.c.b16 %v2135, %v2133
    %v2170 = vpack.c.b16 %v2138, %v2136
    %v2171 = vpack.c.b16 %v2139, %v2137
    %2204 = vmatprep.subr.bf16.mxu0 %v2141
    %2205 = vmatpush1.bf16.msra.mxu0 %v2140
    %2206 = vmatprep.subr.bf16.mxu0 %v2143
    %2207 = vmatpush1.bf16.msra.mxu0 %v2142
    %2208 = vmatprep.subr.bf16.mxu0 %v2145
    %2209 = vmatpush1.bf16.msra.mxu0 %v2144
    %2210 = vmatprep.subr.bf16.mxu0 %v2147
    %2211 = vmatpush1.bf16.msra.mxu0 %v2146
    %2212 = vmatprep.subr.bf16.mxu0 %v2149
    %2213 = vmatpush1.bf16.msra.mxu0 %v2148
    %2214 = vmatprep.subr.bf16.mxu0 %v2151
    %2215 = vmatpush1.bf16.msra.mxu0 %v2150
    %2216 = vmatprep.subr.bf16.mxu0 %v2153
    %2217 = vmatpush1.bf16.msra.mxu0 %v2152
    %2218 = vmatprep.subr.bf16.mxu0 %v2155
    %2219 = vmatpush1.bf16.msra.mxu0 %v2154
    %2220 = vmatprep.subr.bf16.mxu0 %v2157
    %2221 = vmatpush1.bf16.msra.mxu0 %v2156
    %2222 = vmatprep.subr.bf16.mxu0 %v2159
    %2223 = vmatpush1.bf16.msra.mxu0 %v2158
    %2224 = vmatprep.subr.bf16.mxu0 %v2161
    %2225 = vmatpush1.bf16.msra.mxu0 %v2160
    %2226 = vmatprep.subr.bf16.mxu0 %v2163
    %2227 = vmatpush1.bf16.msra.mxu0 %v2162
    %2228 = vmatprep.subr.bf16.mxu0 %v2165
    %2229 = vmatpush1.bf16.msra.mxu0 %v2164
    %2230 = vmatprep.subr.bf16.mxu0 %v2167
    %2231 = vmatpush1.bf16.msra.mxu0 %v2166
    %2232 = vmatprep.subr.bf16.mxu0 %v2169
    %2233 = vmatpush1.bf16.msra.mxu0 %v2168
    %2234 = vmatprep.subr.bf16.mxu0 %v2171
    %2235 = vmatpush1.bf16.msra.mxu0 %v2170
    %2236 = vmatprep.mubr.bf16.mxu0 %v1687
    %2237 = vmatmul.mubr.bf16.gmra.mrb[0].mxu0 %v1686
    %v2238 = vpop.f32.mrb[0].mxu0
    %v2239 = vadd.f32 %v2036, %v2238
    %v2240 = vpop.f32.mrb[0].mxu0
    %v2241 = vadd.f32 %v2038, %v2240
    %v2242 = vpop.f32.mrb[0].mxu0
    %v2243 = vadd.f32 %v2040, %v2242
    %v2244 = vpop.f32.mrb[0].mxu0
    %v2245 = vadd.f32 %v2042, %v2244
    %2246 = vdwg.mxu0
    %s2247 = scalar_lea.vmem [#allocation5], 32
    %v2248 = vld [vmem:[%s2247] sm:$0xff]
    %v2249 = vld [vmem:[%s2247 + $0x8] sm:$0xff]
    %v2251 = vsel %vm1602, %v2248, 0
    %v2254 = vsel %vm1602, %v2249, 0
    %2256 = vmatprep.subr.mxu0 %v1593
    %2257 = vmatpush1.msra.mxu0 %v1592
    %2258 = vmatprep.subr.mxu0 %v1595
    %2259 = vmatpush1.msra.mxu0 %v1594
    %2260 = vmatprep.subr.mxu0 %v1597
    %2261 = vmatpush1.msra.mxu0 %v1596
    %2262 = vmatprep.subr.mxu0 %v1599
    %2263 = vmatpush1.msra.mxu0 %v1598
    %2264 = vmatprep.subr.mxu0 0.0
    %2265 = vmatpush1.msra.mxu0 0.0
    %2266 = vmatprep.subr.mxu0 0.0
    %2267 = vmatpush1.msra.mxu0 0.0
    %2268 = vmatprep.subr.mxu0 0.0
    %2269 = vmatpush1.msra.mxu0 0.0
    %2270 = vmatprep.subr.mxu0 0.0
    %2271 = vmatpush1.msra.mxu0 0.0
    %2272 = vmatprep.subr.mxu0 0.0
    %2273 = vmatpush1.msra.mxu0 0.0
    %2274 = vmatprep.subr.mxu0 0.0
    %2275 = vmatpush1.msra.mxu0 0.0
    %2276 = vmatprep.subr.mxu0 0.0
    %2277 = vmatpush1.msra.mxu0 0.0
    %2278 = vmatprep.subr.mxu0 0.0
    %2279 = vmatpush1.msra.mxu0 0.0
    %2280 = vmatprep.subr.mxu0 0.0
    %2281 = vmatpush1.msra.mxu0 0.0
    %2282 = vmatprep.subr.mxu0 0.0
    %2283 = vmatpush1.msra.mxu0 0.0
    %2284 = vmatprep.subr.mxu0 0.0
    %2285 = vmatpush1.msra.mxu0 0.0
    %2286 = vmatprep.subr.mxu0 0.0
    %2287 = vmatpush1.msra.mxu0 0.0
    %2288 = vmatprep.subr.mxu0 0.0
    %2289 = vmatpush1.msra.mxu0 0.0
    %2290 = vmatprep.subr.mxu0 0.0
    %2291 = vmatpush1.msra.mxu0 0.0
    %2292 = vmatprep.subr.mxu0 0.0
    %2293 = vmatpush1.msra.mxu0 0.0
    %2294 = vmatprep.subr.mxu0 0.0
    %2295 = vmatpush1.msra.mxu0 0.0
    %2296 = vmatprep.subr.mxu0 0.0
    %2297 = vmatpush1.msra.mxu0 0.0
    %2298 = vmatprep.subr.mxu0 0.0
    %2299 = vmatpush1.msra.mxu0 0.0
    %2300 = vmatprep.subr.mxu0 0.0
    %2301 = vmatpush1.msra.mxu0 0.0
    %2302 = vmatprep.subr.mxu0 0.0
    %2303 = vmatpush1.msra.mxu0 0.0
    %2304 = vmatprep.subr.mxu0 0.0
    %2305 = vmatpush1.msra.mxu0 0.0
    %2306 = vmatprep.subr.mxu0 0.0
    %2307 = vmatpush1.msra.mxu0 0.0
    %2308 = vmatprep.subr.mxu0 0.0
    %2309 = vmatpush1.msra.mxu0 0.0
    %2310 = vmatprep.subr.mxu0 0.0
    %2311 = vmatpush1.msra.mxu0 0.0
    %2312 = vmatprep.subr.mxu0 0.0
    %2313 = vmatpush1.msra.mxu0 0.0
    %2314 = vmatprep.subr.mxu0 0.0
    %2315 = vmatpush1.msra.mxu0 0.0
    %2316 = vmatprep.subr.mxu0 0.0
    %2317 = vmatpush1.msra.mxu0 0.0
    %2318 = vmatprep.subr.mxu0 0.0
    %2319 = vmatpush1.msra.mxu0 0.0
    %2320 = vmatprep.mubr.f32.mxu0 0.0
    %2321 = vmatmul.mubr.f32.gmra.mrb[0].mxu0 %v2251
    %v2322 = vpop.f32.mrb[0].mxu0
    %v2323 = vadd.f32 0.0, %v2322
    %v2324 = vpop.f32.mrb[0].mxu0
    %v2325 = vadd.f32 0.0, %v2324
    %2326 = vmatprep.mubr.f32.mxu0 0.0
    %2327 = vmatmul.mubr.f32.gmra.mrb[0].mxu0 %v2254
    %v2328 = vpop.f32.mrb[0].mxu0
    %v2329 = vadd.f32 0.0, %v2328
    %v2330 = vpop.f32.mrb[0].mxu0
    %v2331 = vadd.f32 0.0, %v2330
    %2332 = vdwg.mxu0
    %v2333 = vpack.c.bf16 %v2329, %v2323
    %v2334 = vpack.c.bf16 %v2331, %v2325
    %s2335 = scalar_lea.vmem %s8, 512
    %v2336 = vld [vmem:[%s2335] sm:$0xff]
    %v2337 = vld [vmem:[%s2335 + $0x8] sm:$0xff]
    %v2338 = vld [vmem:[%s2335 + $0x10] sm:$0xff]
    %v2339 = vld [vmem:[%s2335 + $0x18] sm:$0xff]
    %v2340 = vld [vmem:[%s2335 + $0x20] sm:$0xff]
    %v2341 = vld [vmem:[%s2335 + $0x28] sm:$0xff]
    %v2342 = vld [vmem:[%s2335 + $0x30] sm:$0xff]
    %v2343 = vld [vmem:[%s2335 + $0x38] sm:$0xff]
    %v2344 = vld [vmem:[%s2335 + $0x40] sm:$0xff]
    %v2345 = vld [vmem:[%s2335 + $0x48] sm:$0xff]
    %v2346 = vld [vmem:[%s2335 + $0x50] sm:$0xff]
    %v2347 = vld [vmem:[%s2335 + $0x58] sm:$0xff]
    %v2348 = vld [vmem:[%s2335 + $0x60] sm:$0xff]
    %v2349 = vld [vmem:[%s2335 + $0x68] sm:$0xff]
    %v2350 = vld [vmem:[%s2335 + $0x70] sm:$0xff]
    %v2351 = vld [vmem:[%s2335 + $0x78] sm:$0xff]
    %v2352 = vld [vmem:[%s2335 + $0x80] sm:$0xff]
    %v2353 = vld [vmem:[%s2335 + $0x88] sm:$0xff]
    %v2354 = vld [vmem:[%s2335 + $0x90] sm:$0xff]
    %v2355 = vld [vmem:[%s2335 + $0x98] sm:$0xff]
    %v2356 = vld [vmem:[%s2335 + $0xa0] sm:$0xff]
    %v2357 = vld [vmem:[%s2335 + $0xa8] sm:$0xff]
    %v2358 = vld [vmem:[%s2335 + $0xb0] sm:$0xff]
    %v2359 = vld [vmem:[%s2335 + $0xb8] sm:$0xff]
    %v2360 = vld [vmem:[%s2335 + $0xc0] sm:$0xff]
    %v2361 = vld [vmem:[%s2335 + $0xc8] sm:$0xff]
    %v2362 = vld [vmem:[%s2335 + $0xd0] sm:$0xff]
    %v2363 = vld [vmem:[%s2335 + $0xd8] sm:$0xff]
    %v2364 = vld [vmem:[%s2335 + $0xe0] sm:$0xff]
    %v2365 = vld [vmem:[%s2335 + $0xe8] sm:$0xff]
    %v2366 = vld [vmem:[%s2335 + $0xf0] sm:$0xff]
    %v2367 = vld [vmem:[%s2335 + $0xf8] sm:$0xff]
    %v2400 = vunpack.c.l.b16 %v2336
    %v2401 = vunpack.c.h.b16 %v2336
    %v2402 = vunpack.c.l.b16 %v2337
    %v2403 = vunpack.c.h.b16 %v2337
    %v2404 = vunpack.c.l.b16 %v2338
    %v2405 = vunpack.c.h.b16 %v2338
    %v2406 = vunpack.c.l.b16 %v2339
    %v2407 = vunpack.c.h.b16 %v2339
    %v2408 = vunpack.c.l.b16 %v2340
    %v2409 = vunpack.c.h.b16 %v2340
    %v2410 = vunpack.c.l.b16 %v2341
    %v2411 = vunpack.c.h.b16 %v2341
    %v2412 = vunpack.c.l.b16 %v2342
    %v2413 = vunpack.c.h.b16 %v2342
    %v2414 = vunpack.c.l.b16 %v2343
    %v2415 = vunpack.c.h.b16 %v2343
    %v2416 = vunpack.c.l.b16 %v2344
    %v2417 = vunpack.c.h.b16 %v2344
    %v2418 = vunpack.c.l.b16 %v2345
    %v2419 = vunpack.c.h.b16 %v2345
    %v2420 = vunpack.c.l.b16 %v2346
    %v2421 = vunpack.c.h.b16 %v2346
    %v2422 = vunpack.c.l.b16 %v2347
    %v2423 = vunpack.c.h.b16 %v2347
    %v2424 = vunpack.c.l.b16 %v2348
    %v2425 = vunpack.c.h.b16 %v2348
    %v2426 = vunpack.c.l.b16 %v2349
    %v2427 = vunpack.c.h.b16 %v2349
    %v2428 = vunpack.c.l.b16 %v2350
    %v2429 = vunpack.c.h.b16 %v2350
    %v2430 = vunpack.c.l.b16 %v2351
    %v2431 = vunpack.c.h.b16 %v2351
    %v2432 = vunpack.c.l.b16 %v2352
    %v2433 = vunpack.c.h.b16 %v2352
    %v2434 = vunpack.c.l.b16 %v2353
    %v2435 = vunpack.c.h.b16 %v2353
    %v2436 = vunpack.c.l.b16 %v2354
    %v2437 = vunpack.c.h.b16 %v2354
    %v2438 = vunpack.c.l.b16 %v2355
    %v2439 = vunpack.c.h.b16 %v2355
    %v2440 = vunpack.c.l.b16 %v2356
    %v2441 = vunpack.c.h.b16 %v2356
    %v2442 = vunpack.c.l.b16 %v2357
    %v2443 = vunpack.c.h.b16 %v2357
    %v2444 = vunpack.c.l.b16 %v2358
    %v2445 = vunpack.c.h.b16 %v2358
    %v2446 = vunpack.c.l.b16 %v2359
    %v2447 = vunpack.c.h.b16 %v2359
    %v2448 = vunpack.c.l.b16 %v2360
    %v2449 = vunpack.c.h.b16 %v2360
    %v2450 = vunpack.c.l.b16 %v2361
    %v2451 = vunpack.c.h.b16 %v2361
    %v2452 = vunpack.c.l.b16 %v2362
    %v2453 = vunpack.c.h.b16 %v2362
    %v2454 = vunpack.c.l.b16 %v2363
    %v2455 = vunpack.c.h.b16 %v2363
    %v2456 = vunpack.c.l.b16 %v2364
    %v2457 = vunpack.c.h.b16 %v2364
    %v2458 = vunpack.c.l.b16 %v2365
    %v2459 = vunpack.c.h.b16 %v2365
    %v2460 = vunpack.c.l.b16 %v2366
    %v2461 = vunpack.c.h.b16 %v2366
    %v2462 = vunpack.c.l.b16 %v2367
    %v2463 = vunpack.c.h.b16 %v2367
    %v2464 = vpack.c.b16 %v2402, %v2400
    %v2465 = vpack.c.b16 %v2403, %v2401
    %v2466 = vpack.c.b16 %v2406, %v2404
    %v2467 = vpack.c.b16 %v2407, %v2405
    %v2468 = vpack.c.b16 %v2410, %v2408
    %v2469 = vpack.c.b16 %v2411, %v2409
    %v2470 = vpack.c.b16 %v2414, %v2412
    %v2471 = vpack.c.b16 %v2415, %v2413
    %v2472 = vpack.c.b16 %v2418, %v2416
    %v2473 = vpack.c.b16 %v2419, %v2417
    %v2474 = vpack.c.b16 %v2422, %v2420
    %v2475 = vpack.c.b16 %v2423, %v2421
    %v2476 = vpack.c.b16 %v2426, %v2424
    %v2477 = vpack.c.b16 %v2427, %v2425
    %v2478 = vpack.c.b16 %v2430, %v2428
    %v2479 = vpack.c.b16 %v2431, %v2429
    %v2480 = vpack.c.b16 %v2434, %v2432
    %v2481 = vpack.c.b16 %v2435, %v2433
    %v2482 = vpack.c.b16 %v2438, %v2436
    %v2483 = vpack.c.b16 %v2439, %v2437
    %v2484 = vpack.c.b16 %v2442, %v2440
    %v2485 = vpack.c.b16 %v2443, %v2441
    %v2486 = vpack.c.b16 %v2446, %v2444
    %v2487 = vpack.c.b16 %v2447, %v2445
    %v2488 = vpack.c.b16 %v2450, %v2448
    %v2489 = vpack.c.b16 %v2451, %v2449
    %v2490 = vpack.c.b16 %v2454, %v2452
    %v2491 = vpack.c.b16 %v2455, %v2453
    %v2492 = vpack.c.b16 %v2458, %v2456
    %v2493 = vpack.c.b16 %v2459, %v2457
    %v2494 = vpack.c.b16 %v2462, %v2460
    %v2495 = vpack.c.b16 %v2463, %v2461
    %2528 = vmatprep.subr.bf16.mxu0 %v2465
    %2529 = vmatpush1.bf16.msra.mxu0 %v2464
    %2530 = vmatprep.subr.bf16.mxu0 %v2467
    %2531 = vmatpush1.bf16.msra.mxu0 %v2466
    %2532 = vmatprep.subr.bf16.mxu0 %v2469
    %2533 = vmatpush1.bf16.msra.mxu0 %v2468
    %2534 = vmatprep.subr.bf16.mxu0 %v2471
    %2535 = vmatpush1.bf16.msra.mxu0 %v2470
    %2536 = vmatprep.subr.bf16.mxu0 %v2473
    %2537 = vmatpush1.bf16.msra.mxu0 %v2472
    %2538 = vmatprep.subr.bf16.mxu0 %v2475
    %2539 = vmatpush1.bf16.msra.mxu0 %v2474
    %2540 = vmatprep.subr.bf16.mxu0 %v2477
    %2541 = vmatpush1.bf16.msra.mxu0 %v2476
    %2542 = vmatprep.subr.bf16.mxu0 %v2479
    %2543 = vmatpush1.bf16.msra.mxu0 %v2478
    %2544 = vmatprep.subr.bf16.mxu0 %v2481
    %2545 = vmatpush1.bf16.msra.mxu0 %v2480
    %2546 = vmatprep.subr.bf16.mxu0 %v2483
    %2547 = vmatpush1.bf16.msra.mxu0 %v2482
    %2548 = vmatprep.subr.bf16.mxu0 %v2485
    %2549 = vmatpush1.bf16.msra.mxu0 %v2484
    %2550 = vmatprep.subr.bf16.mxu0 %v2487
    %2551 = vmatpush1.bf16.msra.mxu0 %v2486
    %2552 = vmatprep.subr.bf16.mxu0 %v2489
    %2553 = vmatpush1.bf16.msra.mxu0 %v2488
    %2554 = vmatprep.subr.bf16.mxu0 %v2491
    %2555 = vmatpush1.bf16.msra.mxu0 %v2490
    %2556 = vmatprep.subr.bf16.mxu0 %v2493
    %2557 = vmatpush1.bf16.msra.mxu0 %v2492
    %2558 = vmatprep.subr.bf16.mxu0 %v2495
    %2559 = vmatpush1.bf16.msra.mxu0 %v2494
    %2560 = vmatprep.mubr.bf16.mxu0 %v2334
    %2561 = vmatmul.mubr.bf16.gmra.mrb[0].mxu0 %v2333
    %v2562 = vpop.f32.mrb[0].mxu0
    %v2563 = vadd.f32 0.0, %v2562
    %v2564 = vpop.f32.mrb[0].mxu0
    %v2565 = vadd.f32 0.0, %v2564
    %v2566 = vpop.f32.mrb[0].mxu0
    %v2567 = vadd.f32 0.0, %v2566
    %v2568 = vpop.f32.mrb[0].mxu0
    %v2569 = vadd.f32 0.0, %v2568
    %2570 = vdwg.mxu0
    %v2571 = vadd.f32 %v2239, %v2563
    %v2572 = vadd.f32 %v2241, %v2565
    %v2573 = vadd.f32 %v2243, %v2567
    %v2574 = vadd.f32 %v2245, %v2569
    %s2575 = scalar_lea.vmem [#allocation5], 48
    %v2576 = vld [vmem:[%s2575] sm:$0xff]
    %v2577 = vld [vmem:[%s2575 + $0x8] sm:$0xff]
    %v2579 = vsel %vm1602, %v2576, 0
    %v2582 = vsel %vm1602, %v2577, 0
    %2584 = vmatprep.subr.mxu0 %v1593
    %2585 = vmatpush1.msra.mxu0 %v1592
    %2586 = vmatprep.subr.mxu0 %v1595
    %2587 = vmatpush1.msra.mxu0 %v1594
    %2588 = vmatprep.subr.mxu0 %v1597
    %2589 = vmatpush1.msra.mxu0 %v1596
    %2590 = vmatprep.subr.mxu0 %v1599
    %2591 = vmatpush1.msra.mxu0 %v1598
    %2592 = vmatprep.subr.mxu0 0.0
    %2593 = vmatpush1.msra.mxu0 0.0
    %2594 = vmatprep.subr.mxu0 0.0
    %2595 = vmatpush1.msra.mxu0 0.0
    %2596 = vmatprep.subr.mxu0 0.0
    %2597 = vmatpush1.msra.mxu0 0.0
    %2598 = vmatprep.subr.mxu0 0.0
    %2599 = vmatpush1.msra.mxu0 0.0
    %2600 = vmatprep.subr.mxu0 0.0
    %2601 = vmatpush1.msra.mxu0 0.0
    %2602 = vmatprep.subr.mxu0 0.0
    %2603 = vmatpush1.msra.mxu0 0.0
    %2604 = vmatprep.subr.mxu0 0.0
    %2605 = vmatpush1.msra.mxu0 0.0
    %2606 = vmatprep.subr.mxu0 0.0
    %2607 = vmatpush1.msra.mxu0 0.0
    %2608 = vmatprep.subr.mxu0 0.0
    %2609 = vmatpush1.msra.mxu0 0.0
    %2610 = vmatprep.subr.mxu0 0.0
    %2611 = vmatpush1.msra.mxu0 0.0
    %2612 = vmatprep.subr.mxu0 0.0
    %2613 = vmatpush1.msra.mxu0 0.0
    %2614 = vmatprep.subr.mxu0 0.0
    %2615 = vmatpush1.msra.mxu0 0.0
    %2616 = vmatprep.subr.mxu0 0.0
    %2617 = vmatpush1.msra.mxu0 0.0
    %2618 = vmatprep.subr.mxu0 0.0
    %2619 = vmatpush1.msra.mxu0 0.0
    %2620 = vmatprep.subr.mxu0 0.0
    %2621 = vmatpush1.msra.mxu0 0.0
    %2622 = vmatprep.subr.mxu0 0.0
    %2623 = vmatpush1.msra.mxu0 0.0
    %2624 = vmatprep.subr.mxu0 0.0
    %2625 = vmatpush1.msra.mxu0 0.0
    %2626 = vmatprep.subr.mxu0 0.0
    %2627 = vmatpush1.msra.mxu0 0.0
    %2628 = vmatprep.subr.mxu0 0.0
    %2629 = vmatpush1.msra.mxu0 0.0
    %2630 = vmatprep.subr.mxu0 0.0
    %2631 = vmatpush1.msra.mxu0 0.0
    %2632 = vmatprep.subr.mxu0 0.0
    %2633 = vmatpush1.msra.mxu0 0.0
    %2634 = vmatprep.subr.mxu0 0.0
    %2635 = vmatpush1.msra.mxu0 0.0
    %2636 = vmatprep.subr.mxu0 0.0
    %2637 = vmatpush1.msra.mxu0 0.0
    %2638 = vmatprep.subr.mxu0 0.0
    %2639 = vmatpush1.msra.mxu0 0.0
    %2640 = vmatprep.subr.mxu0 0.0
    %2641 = vmatpush1.msra.mxu0 0.0
    %2642 = vmatprep.subr.mxu0 0.0
    %2643 = vmatpush1.msra.mxu0 0.0
    %2644 = vmatprep.subr.mxu0 0.0
    %2645 = vmatpush1.msra.mxu0 0.0
    %2646 = vmatprep.subr.mxu0 0.0
    %2647 = vmatpush1.msra.mxu0 0.0
    %2648 = vmatprep.mubr.f32.mxu0 0.0
    %2649 = vmatmul.mubr.f32.gmra.mrb[0].mxu0 %v2579
    %v2650 = vpop.f32.mrb[0].mxu0
    %v2651 = vadd.f32 0.0, %v2650
    %v2652 = vpop.f32.mrb[0].mxu0
    %v2653 = vadd.f32 0.0, %v2652
    %2654 = vmatprep.mubr.f32.mxu0 0.0
    %2655 = vmatmul.mubr.f32.gmra.mrb[0].mxu0 %v2582
    %v2656 = vpop.f32.mrb[0].mxu0
    %v2657 = vadd.f32 0.0, %v2656
    %v2658 = vpop.f32.mrb[0].mxu0
    %v2659 = vadd.f32 0.0, %v2658
    %2660 = vdwg.mxu0
    %v2661 = vpack.c.bf16 %v2657, %v2651
    %v2662 = vpack.c.bf16 %v2659, %v2653
    %s2663 = scalar_lea.vmem %s8, 768
    %v2664 = vld [vmem:[%s2663] sm:$0xff]
    %v2665 = vld [vmem:[%s2663 + $0x8] sm:$0xff]
    %v2666 = vld [vmem:[%s2663 + $0x10] sm:$0xff]
    %v2667 = vld [vmem:[%s2663 + $0x18] sm:$0xff]
    %v2668 = vld [vmem:[%s2663 + $0x20] sm:$0xff]
    %v2669 = vld [vmem:[%s2663 + $0x28] sm:$0xff]
    %v2670 = vld [vmem:[%s2663 + $0x30] sm:$0xff]
    %v2671 = vld [vmem:[%s2663 + $0x38] sm:$0xff]
    %v2672 = vld [vmem:[%s2663 + $0x40] sm:$0xff]
    %v2673 = vld [vmem:[%s2663 + $0x48] sm:$0xff]
    %v2674 = vld [vmem:[%s2663 + $0x50] sm:$0xff]
    %v2675 = vld [vmem:[%s2663 + $0x58] sm:$0xff]
    %v2676 = vld [vmem:[%s2663 + $0x60] sm:$0xff]
    %v2677 = vld [vmem:[%s2663 + $0x68] sm:$0xff]
    %v2678 = vld [vmem:[%s2663 + $0x70] sm:$0xff]
    %v2679 = vld [vmem:[%s2663 + $0x78] sm:$0xff]
    %v2680 = vld [vmem:[%s2663 + $0x80] sm:$0xff]
    %v2681 = vld [vmem:[%s2663 + $0x88] sm:$0xff]
    %v2682 = vld [vmem:[%s2663 + $0x90] sm:$0xff]
    %v2683 = vld [vmem:[%s2663 + $0x98] sm:$0xff]
    %v2684 = vld [vmem:[%s2663 + $0xa0] sm:$0xff]
    %v2685 = vld [vmem:[%s2663 + $0xa8] sm:$0xff]
    %v2686 = vld [vmem:[%s2663 + $0xb0] sm:$0xff]
    %v2687 = vld [vmem:[%s2663 + $0xb8] sm:$0xff]
    %v2688 = vld [vmem:[%s2663 + $0xc0] sm:$0xff]
    %v2689 = vld [vmem:[%s2663 + $0xc8] sm:$0xff]
    %v2690 = vld [vmem:[%s2663 + $0xd0] sm:$0xff]
    %v2691 = vld [vmem:[%s2663 + $0xd8] sm:$0xff]
    %v2692 = vld [vmem:[%s2663 + $0xe0] sm:$0xff]
    %v2693 = vld [vmem:[%s2663 + $0xe8] sm:$0xff]
    %v2694 = vld [vmem:[%s2663 + $0xf0] sm:$0xff]
    %v2695 = vld [vmem:[%s2663 + $0xf8] sm:$0xff]
    %v2728 = vunpack.c.l.b16 %v2664
    %v2729 = vunpack.c.h.b16 %v2664
    %v2730 = vunpack.c.l.b16 %v2665
    %v2731 = vunpack.c.h.b16 %v2665
    %v2732 = vunpack.c.l.b16 %v2666
    %v2733 = vunpack.c.h.b16 %v2666
    %v2734 = vunpack.c.l.b16 %v2667
    %v2735 = vunpack.c.h.b16 %v2667
    %v2736 = vunpack.c.l.b16 %v2668
    %v2737 = vunpack.c.h.b16 %v2668
    %v2738 = vunpack.c.l.b16 %v2669
    %v2739 = vunpack.c.h.b16 %v2669
    %v2740 = vunpack.c.l.b16 %v2670
    %v2741 = vunpack.c.h.b16 %v2670
    %v2742 = vunpack.c.l.b16 %v2671
    %v2743 = vunpack.c.h.b16 %v2671
    %v2744 = vunpack.c.l.b16 %v2672
    %v2745 = vunpack.c.h.b16 %v2672
    %v2746 = vunpack.c.l.b16 %v2673
    %v2747 = vunpack.c.h.b16 %v2673
    %v2748 = vunpack.c.l.b16 %v2674
    %v2749 = vunpack.c.h.b16 %v2674
    %v2750 = vunpack.c.l.b16 %v2675
    %v2751 = vunpack.c.h.b16 %v2675
    %v2752 = vunpack.c.l.b16 %v2676
    %v2753 = vunpack.c.h.b16 %v2676
    %v2754 = vunpack.c.l.b16 %v2677
    %v2755 = vunpack.c.h.b16 %v2677
    %v2756 = vunpack.c.l.b16 %v2678
    %v2757 = vunpack.c.h.b16 %v2678
    %v2758 = vunpack.c.l.b16 %v2679
    %v2759 = vunpack.c.h.b16 %v2679
    %v2760 = vunpack.c.l.b16 %v2680
    %v2761 = vunpack.c.h.b16 %v2680
    %v2762 = vunpack.c.l.b16 %v2681
    %v2763 = vunpack.c.h.b16 %v2681
    %v2764 = vunpack.c.l.b16 %v2682
    %v2765 = vunpack.c.h.b16 %v2682
    %v2766 = vunpack.c.l.b16 %v2683
    %v2767 = vunpack.c.h.b16 %v2683
    %v2768 = vunpack.c.l.b16 %v2684
    %v2769 = vunpack.c.h.b16 %v2684
    %v2770 = vunpack.c.l.b16 %v2685
    %v2771 = vunpack.c.h.b16 %v2685
    %v2772 = vunpack.c.l.b16 %v2686
    %v2773 = vunpack.c.h.b16 %v2686
    %v2774 = vunpack.c.l.b16 %v2687
    %v2775 = vunpack.c.h.b16 %v2687
    %v2776 = vunpack.c.l.b16 %v2688
    %v2777 = vunpack.c.h.b16 %v2688
    %v2778 = vunpack.c.l.b16 %v2689
    %v2779 = vunpack.c.h.b16 %v2689
    %v2780 = vunpack.c.l.b16 %v2690
    %v2781 = vunpack.c.h.b16 %v2690
    %v2782 = vunpack.c.l.b16 %v2691
    %v2783 = vunpack.c.h.b16 %v2691
    %v2784 = vunpack.c.l.b16 %v2692
    %v2785 = vunpack.c.h.b16 %v2692
    %v2786 = vunpack.c.l.b16 %v2693
    %v2787 = vunpack.c.h.b16 %v2693
    %v2788 = vunpack.c.l.b16 %v2694
    %v2789 = vunpack.c.h.b16 %v2694
    %v2790 = vunpack.c.l.b16 %v2695
    %v2791 = vunpack.c.h.b16 %v2695
    %v2792 = vpack.c.b16 %v2730, %v2728
    %v2793 = vpack.c.b16 %v2731, %v2729
    %v2794 = vpack.c.b16 %v2734, %v2732
    %v2795 = vpack.c.b16 %v2735, %v2733
    %v2796 = vpack.c.b16 %v2738, %v2736
    %v2797 = vpack.c.b16 %v2739, %v2737
    %v2798 = vpack.c.b16 %v2742, %v2740
    %v2799 = vpack.c.b16 %v2743, %v2741
    %v2800 = vpack.c.b16 %v2746, %v2744
    %v2801 = vpack.c.b16 %v2747, %v2745
    %v2802 = vpack.c.b16 %v2750, %v2748
    %v2803 = vpack.c.b16 %v2751, %v2749
    %v2804 = vpack.c.b16 %v2754, %v2752
    %v2805 = vpack.c.b16 %v2755, %v2753
    %v2806 = vpack.c.b16 %v2758, %v2756
    %v2807 = vpack.c.b16 %v2759, %v2757
    %v2808 = vpack.c.b16 %v2762, %v2760
    %v2809 = vpack.c.b16 %v2763, %v2761
    %v2810 = vpack.c.b16 %v2766, %v2764
    %v2811 = vpack.c.b16 %v2767, %v2765
    %v2812 = vpack.c.b16 %v2770, %v2768
    %v2813 = vpack.c.b16 %v2771, %v2769
    %v2814 = vpack.c.b16 %v2774, %v2772
    %v2815 = vpack.c.b16 %v2775, %v2773
    %v2816 = vpack.c.b16 %v2778, %v2776
    %v2817 = vpack.c.b16 %v2779, %v2777
    %v2818 = vpack.c.b16 %v2782, %v2780
    %v2819 = vpack.c.b16 %v2783, %v2781
    %v2820 = vpack.c.b16 %v2786, %v2784
    %v2821 = vpack.c.b16 %v2787, %v2785
    %v2822 = vpack.c.b16 %v2790, %v2788
    %v2823 = vpack.c.b16 %v2791, %v2789
    %2856 = vmatprep.subr.bf16.mxu0 %v2793
    %2857 = vmatpush1.bf16.msra.mxu0 %v2792
    %2858 = vmatprep.subr.bf16.mxu0 %v2795
    %2859 = vmatpush1.bf16.msra.mxu0 %v2794
    %2860 = vmatprep.subr.bf16.mxu0 %v2797
    %2861 = vmatpush1.bf16.msra.mxu0 %v2796
    %2862 = vmatprep.subr.bf16.mxu0 %v2799
    %2863 = vmatpush1.bf16.msra.mxu0 %v2798
    %2864 = vmatprep.subr.bf16.mxu0 %v2801
    %2865 = vmatpush1.bf16.msra.mxu0 %v2800
    %2866 = vmatprep.subr.bf16.mxu0 %v2803
    %2867 = vmatpush1.bf16.msra.mxu0 %v2802
    %2868 = vmatprep.subr.bf16.mxu0 %v2805
    %2869 = vmatpush1.bf16.msra.mxu0 %v2804
    %2870 = vmatprep.subr.bf16.mxu0 %v2807
    %2871 = vmatpush1.bf16.msra.mxu0 %v2806
    %2872 = vmatprep.subr.bf16.mxu0 %v2809
    %2873 = vmatpush1.bf16.msra.mxu0 %v2808
    %2874 = vmatprep.subr.bf16.mxu0 %v2811
    %2875 = vmatpush1.bf16.msra.mxu0 %v2810
    %2876 = vmatprep.subr.bf16.mxu0 %v2813
    %2877 = vmatpush1.bf16.msra.mxu0 %v2812
    %2878 = vmatprep.subr.bf16.mxu0 %v2815
    %2879 = vmatpush1.bf16.msra.mxu0 %v2814
    %2880 = vmatprep.subr.bf16.mxu0 %v2817
    %2881 = vmatpush1.bf16.msra.mxu0 %v2816
    %2882 = vmatprep.subr.bf16.mxu0 %v2819
    %2883 = vmatpush1.bf16.msra.mxu0 %v2818
    %2884 = vmatprep.subr.bf16.mxu0 %v2821
    %2885 = vmatpush1.bf16.msra.mxu0 %v2820
    %2886 = vmatprep.subr.bf16.mxu0 %v2823
    %2887 = vmatpush1.bf16.msra.mxu0 %v2822
    %2888 = vmatprep.mubr.bf16.mxu0 %v2662
    %2889 = vmatmul.mubr.bf16.gmra.mrb[0].mxu0 %v2661
    %v2890 = vpop.f32.mrb[0].mxu0
    %v2891 = vadd.f32 0.0, %v2890
    %v2892 = vpop.f32.mrb[0].mxu0
    %v2893 = vadd.f32 0.0, %v2892
    %v2894 = vpop.f32.mrb[0].mxu0
    %v2895 = vadd.f32 0.0, %v2894
    %v2896 = vpop.f32.mrb[0].mxu0
    %v2897 = vadd.f32 0.0, %v2896
    %2898 = vdwg.mxu0
    %v2899 = vadd.f32 %v2571, %v2891
    %v2900 = vadd.f32 %v2572, %v2893
    %v2901 = vadd.f32 %v2573, %v2895
    %v2902 = vadd.f32 %v2574, %v2897
    %v2903 = vadd.f32 %v2899, %v2901
    %v2904 = vrot.slane %v2903, 4
    %v2905 = vadd.f32 %v2903, %v2904
    %v2906 = vrot.slane %v2905, 2
    %v2907 = vadd.f32 %v2905, %v2906
    %v2908 = vrot.slane %v2907, 1
    %v2909 = vadd.f32 %v2907, %v2908
    %v2910 = vadd.f32 %v2900, %v2902
    %v2911 = vrot.slane %v2910, 4
    %v2912 = vadd.f32 %v2910, %v2911
    %v2913 = vrot.slane %v2912, 2
    %v2914 = vadd.f32 %v2912, %v2913
    %v2915 = vrot.slane %v2914, 1
    %v2916 = vadd.f32 %v2914, %v2915
    %v2917 = vmul.f32 %v2899, %v2899
    %v2918 = vmul.f32 %v2900, %v2900
    %v2919 = vmul.f32 %v2901, %v2901
    %v2920 = vmul.f32 %v2902, %v2902
    %v2921 = vadd.f32 %v2917, %v2919
    %v2922 = vrot.slane %v2921, 4
    %v2923 = vadd.f32 %v2921, %v2922
    %v2924 = vrot.slane %v2923, 2
    %v2925 = vadd.f32 %v2923, %v2924
    %v2926 = vrot.slane %v2925, 1
    %v2927 = vadd.f32 %v2925, %v2926
    %v2928 = vadd.f32 %v2918, %v2920
    %v2929 = vrot.slane %v2928, 4
    %v2930 = vadd.f32 %v2928, %v2929
    %v2931 = vrot.slane %v2930, 2
    %v2932 = vadd.f32 %v2930, %v2931
    %v2933 = vrot.slane %v2932, 1
    %v2934 = vadd.f32 %v2932, %v2933
    %v2935 = vld [vmem:[%s11] sm:$0xff]
    %v2936 = vld [vmem:[%s11 + $0x8] sm:$0xff]
    %v2937 = vld [vmem:[%s11 + $0x10] sm:$0xff]
    %v2938 = vld [vmem:[%s11 + $0x18] sm:$0xff]
    %v2939 = vld [vmem:[%s11 + $0x20] sm:$0xff]
    %v2940 = vld [vmem:[%s11 + $0x28] sm:$0xff]
    %v2941 = vld [vmem:[%s11 + $0x30] sm:$0xff]
    %v2942 = vld [vmem:[%s11 + $0x38] sm:$0xff]
    %v2943 = vld [vmem:[%s11 + $0x40] sm:$0xff]
    %v2944 = vld [vmem:[%s11 + $0x48] sm:$0xff]
    %v2945 = vld [vmem:[%s11 + $0x50] sm:$0xff]
    %v2946 = vld [vmem:[%s11 + $0x58] sm:$0xff]
    %v2947 = vld [vmem:[%s11 + $0x60] sm:$0xff]
    %v2948 = vld [vmem:[%s11 + $0x68] sm:$0xff]
    %v2949 = vld [vmem:[%s11 + $0x70] sm:$0xff]
    %v2950 = vld [vmem:[%s11 + $0x78] sm:$0xff]
    %v2951 = vld [vmem:[%s11 + $0x80] sm:$0xff]
    %v2952 = vld [vmem:[%s11 + $0x88] sm:$0xff]
    %v2953 = vld [vmem:[%s11 + $0x90] sm:$0xff]
    %v2954 = vld [vmem:[%s11 + $0x98] sm:$0xff]
    %v2955 = vld [vmem:[%s11 + $0xa0] sm:$0xff]
    %v2956 = vld [vmem:[%s11 + $0xa8] sm:$0xff]
    %v2957 = vld [vmem:[%s11 + $0xb0] sm:$0xff]
    %v2958 = vld [vmem:[%s11 + $0xb8] sm:$0xff]
    %v2959 = vld [vmem:[%s11 + $0xc0] sm:$0xff]
    %v2960 = vld [vmem:[%s11 + $0xc8] sm:$0xff]
    %v2961 = vld [vmem:[%s11 + $0xd0] sm:$0xff]
    %v2962 = vld [vmem:[%s11 + $0xd8] sm:$0xff]
    %v2963 = vld [vmem:[%s11 + $0xe0] sm:$0xff]
    %v2964 = vld [vmem:[%s11 + $0xe8] sm:$0xff]
    %v2965 = vld [vmem:[%s11 + $0xf0] sm:$0xff]
    %v2966 = vld [vmem:[%s11 + $0xf8] sm:$0xff]
    %2967 = vmatprep.subr.mxu0 0.0
    %2968 = vmatpush1.msra.mxu0 %v2935
    %2969 = vmatprep.subr.mxu0 0.0
    %2970 = vmatpush1.msra.mxu0 %v2936
    %2971 = vmatprep.subr.mxu0 0.0
    %2972 = vmatpush1.msra.mxu0 %v2937
    %2973 = vmatprep.subr.mxu0 0.0
    %2974 = vmatpush1.msra.mxu0 %v2938
    %2975 = vmatprep.subr.mxu0 0.0
    %2976 = vmatpush1.msra.mxu0 %v2939
    %2977 = vmatprep.subr.mxu0 0.0
    %2978 = vmatpush1.msra.mxu0 %v2940
    %2979 = vmatprep.subr.mxu0 0.0
    %2980 = vmatpush1.msra.mxu0 %v2941
    %2981 = vmatprep.subr.mxu0 0.0
    %2982 = vmatpush1.msra.mxu0 %v2942
    %2983 = vmatprep.subr.mxu0 0.0
    %2984 = vmatpush1.msra.mxu0 %v2943
    %2985 = vmatprep.subr.mxu0 0.0
    %2986 = vmatpush1.msra.mxu0 %v2944
    %2987 = vmatprep.subr.mxu0 0.0
    %2988 = vmatpush1.msra.mxu0 %v2945
    %2989 = vmatprep.subr.mxu0 0.0
    %2990 = vmatpush1.msra.mxu0 %v2946
    %2991 = vmatprep.subr.mxu0 0.0
    %2992 = vmatpush1.msra.mxu0 %v2947
    %2993 = vmatprep.subr.mxu0 0.0
    %2994 = vmatpush1.msra.mxu0 %v2948
    %2995 = vmatprep.subr.mxu0 0.0
    %2996 = vmatpush1.msra.mxu0 %v2949
    %2997 = vmatprep.subr.mxu0 0.0
    %2998 = vmatpush1.msra.mxu0 %v2950
    %2999 = vmatprep.subr.mxu0 0.0
    %3000 = vmatpush1.msra.mxu0 %v2951
    %3001 = vmatprep.subr.mxu0 0.0
    %3002 = vmatpush1.msra.mxu0 %v2952
    %3003 = vmatprep.subr.mxu0 0.0
    %3004 = vmatpush1.msra.mxu0 %v2953
    %3005 = vmatprep.subr.mxu0 0.0
    %3006 = vmatpush1.msra.mxu0 %v2954
    %3007 = vmatprep.subr.mxu0 0.0
    %3008 = vmatpush1.msra.mxu0 %v2955
    %3009 = vmatprep.subr.mxu0 0.0
    %3010 = vmatpush1.msra.mxu0 %v2956
    %3011 = vmatprep.subr.mxu0 0.0
    %3012 = vmatpush1.msra.mxu0 %v2957
    %3013 = vmatprep.subr.mxu0 0.0
    %3014 = vmatpush1.msra.mxu0 %v2958
    %3015 = vmatprep.subr.mxu0 0.0
    %3016 = vmatpush1.msra.mxu0 %v2959
    %3017 = vmatprep.subr.mxu0 0.0
    %3018 = vmatpush1.msra.mxu0 %v2960
    %3019 = vmatprep.subr.mxu0 0.0
    %3020 = vmatpush1.msra.mxu0 %v2961
    %3021 = vmatprep.subr.mxu0 0.0
    %3022 = vmatpush1.msra.mxu0 %v2962
    %3023 = vmatprep.subr.mxu0 0.0
    %3024 = vmatpush1.msra.mxu0 %v2963
    %3025 = vmatprep.subr.mxu0 0.0
    %3026 = vmatpush1.msra.mxu0 %v2964
    %3027 = vmatprep.subr.mxu0 0.0
    %3028 = vmatpush1.msra.mxu0 %v2965
    %3029 = vmatprep.subr.mxu0 0.0
    %3030 = vmatpush1.msra.mxu0 %v2966
    %3031 = vmatprep.mubr.f32.mxu0 %v2916
    %3032 = vmatmul.mubr.f32.gmra.mrb[0].mxu0 %v2909
    %v3033 = vpop.f32.mrb[0].mxu0
    %v3034 = vadd.f32 0.0, %v3033
    %v3035 = vpop.f32.mrb[0].mxu0
    %3036 = vdwg.mxu0
    %v3037 = vmul.f32 %v3034, 0.0078125
    %3038 = vmatprep.subr.mxu0 0.0
    %3039 = vmatpush1.msra.mxu0 %v2935
    %3040 = vmatprep.subr.mxu0 0.0
    %3041 = vmatpush1.msra.mxu0 %v2936
    %3042 = vmatprep.subr.mxu0 0.0
    %3043 = vmatpush1.msra.mxu0 %v2937
    %3044 = vmatprep.subr.mxu0 0.0
    %3045 = vmatpush1.msra.mxu0 %v2938
    %3046 = vmatprep.subr.mxu0 0.0
    %3047 = vmatpush1.msra.mxu0 %v2939
    %3048 = vmatprep.subr.mxu0 0.0
    %3049 = vmatpush1.msra.mxu0 %v2940
    %3050 = vmatprep.subr.mxu0 0.0
    %3051 = vmatpush1.msra.mxu0 %v2941
    %3052 = vmatprep.subr.mxu0 0.0
    %3053 = vmatpush1.msra.mxu0 %v2942
    %3054 = vmatprep.subr.mxu0 0.0
    %3055 = vmatpush1.msra.mxu0 %v2943
    %3056 = vmatprep.subr.mxu0 0.0
    %3057 = vmatpush1.msra.mxu0 %v2944
    %3058 = vmatprep.subr.mxu0 0.0
    %3059 = vmatpush1.msra.mxu0 %v2945
    %3060 = vmatprep.subr.mxu0 0.0
    %3061 = vmatpush1.msra.mxu0 %v2946
    %3062 = vmatprep.subr.mxu0 0.0
    %3063 = vmatpush1.msra.mxu0 %v2947
    %3064 = vmatprep.subr.mxu0 0.0
    %3065 = vmatpush1.msra.mxu0 %v2948
    %3066 = vmatprep.subr.mxu0 0.0
    %3067 = vmatpush1.msra.mxu0 %v2949
    %3068 = vmatprep.subr.mxu0 0.0
    %3069 = vmatpush1.msra.mxu0 %v2950
    %3070 = vmatprep.subr.mxu0 0.0
    %3071 = vmatpush1.msra.mxu0 %v2951
    %3072 = vmatprep.subr.mxu0 0.0
    %3073 = vmatpush1.msra.mxu0 %v2952
    %3074 = vmatprep.subr.mxu0 0.0
    %3075 = vmatpush1.msra.mxu0 %v2953
    %3076 = vmatprep.subr.mxu0 0.0
    %3077 = vmatpush1.msra.mxu0 %v2954
    %3078 = vmatprep.subr.mxu0 0.0
    %3079 = vmatpush1.msra.mxu0 %v2955
    %3080 = vmatprep.subr.mxu0 0.0
    %3081 = vmatpush1.msra.mxu0 %v2956
    %3082 = vmatprep.subr.mxu0 0.0
    %3083 = vmatpush1.msra.mxu0 %v2957
    %3084 = vmatprep.subr.mxu0 0.0
    %3085 = vmatpush1.msra.mxu0 %v2958
    %3086 = vmatprep.subr.mxu0 0.0
    %3087 = vmatpush1.msra.mxu0 %v2959
    %3088 = vmatprep.subr.mxu0 0.0
    %3089 = vmatpush1.msra.mxu0 %v2960
    %3090 = vmatprep.subr.mxu0 0.0
    %3091 = vmatpush1.msra.mxu0 %v2961
    %3092 = vmatprep.subr.mxu0 0.0
    %3093 = vmatpush1.msra.mxu0 %v2962
    %3094 = vmatprep.subr.mxu0 0.0
    %3095 = vmatpush1.msra.mxu0 %v2963
    %3096 = vmatprep.subr.mxu0 0.0
    %3097 = vmatpush1.msra.mxu0 %v2964
    %3098 = vmatprep.subr.mxu0 0.0
    %3099 = vmatpush1.msra.mxu0 %v2965
    %3100 = vmatprep.subr.mxu0 0.0
    %3101 = vmatpush1.msra.mxu0 %v2966
    %3102 = vmatprep.mubr.f32.mxu0 %v2934
    %3103 = vmatmul.mubr.f32.gmra.mrb[0].mxu0 %v2927
    %v3104 = vpop.f32.mrb[0].mxu0
    %v3105 = vadd.f32 0.0, %v3104
    %v3106 = vpop.f32.mrb[0].mxu0
    %3107 = vdwg.mxu0
    %v3108 = vmul.f32 %v3105, 0.0078125
    %v3109 = vmul.f32 %v3037, %v3037
    %v3110 = vsub.f32 %v3108, %v3109
    %v3111 = vmax.f32 %v3110, 0.0
    %v3112 = vadd.f32 %v3111, 1e-05
    %v3113 = vrsqrt.pop %v3112
    %v3114 = vld [vmem:[%s9] sm:$0x1]
    %v3115 = vmul.f32 %v3114, %v3113
    %v3116 = vld [vmem:[#allocation7] sm:$0x1]
    %v3117 = vmul.f32 %v3037, %v3115
    %v3118 = vsub.f32 %v3116, %v3117
    %v3119 = vld [vmem:[#allocation8] sm:$0xff]
    %v3120 = vld [vmem:[#allocation8 + $0x8] sm:$0xff]
    %v3121 = vld [vmem:[#allocation8 + $0x10] sm:$0xff]
    %v3122 = vld [vmem:[#allocation8 + $0x18] sm:$0xff]
    %v3123 = vld [vmem:[#allocation8 + $0x20] sm:$0xff]
    %v3124 = vld [vmem:[#allocation8 + $0x28] sm:$0xff]
    %v3125 = vld [vmem:[#allocation8 + $0x30] sm:$0xff]
    %v3126 = vld [vmem:[#allocation8 + $0x38] sm:$0xff]
    %v3128 = vsel %vm1602, %v3115, 0
    %3130 = vmatprep.subr.mxu0 %v3120
    %3131 = vmatpush1.msra.mxu0 %v3119
    %3132 = vmatprep.subr.mxu0 %v3122
    %3133 = vmatpush1.msra.mxu0 %v3121
    %3134 = vmatprep.subr.mxu0 %v3124
    %3135 = vmatpush1.msra.mxu0 %v3123
    %3136 = vmatprep.subr.mxu0 %v3126
    %3137 = vmatpush1.msra.mxu0 %v3125
    %3138 = vmatprep.subr.mxu0 0.0
    %3139 = vmatpush1.msra.mxu0 0.0
    %3140 = vmatprep.subr.mxu0 0.0
    %3141 = vmatpush1.msra.mxu0 0.0
    %3142 = vmatprep.subr.mxu0 0.0
    %3143 = vmatpush1.msra.mxu0 0.0
    %3144 = vmatprep.subr.mxu0 0.0
    %3145 = vmatpush1.msra.mxu0 0.0
    %3146 = vmatprep.subr.mxu0 0.0
    %3147 = vmatpush1.msra.mxu0 0.0
    %3148 = vmatprep.subr.mxu0 0.0
    %3149 = vmatpush1.msra.mxu0 0.0
    %3150 = vmatprep.subr.mxu0 0.0
    %3151 = vmatpush1.msra.mxu0 0.0
    %3152 = vmatprep.subr.mxu0 0.0
    %3153 = vmatpush1.msra.mxu0 0.0
    %3154 = vmatprep.subr.mxu0 0.0
    %3155 = vmatpush1.msra.mxu0 0.0
    %3156 = vmatprep.subr.mxu0 0.0
    %3157 = vmatpush1.msra.mxu0 0.0
    %3158 = vmatprep.subr.mxu0 0.0
    %3159 = vmatpush1.msra.mxu0 0.0
    %3160 = vmatprep.subr.mxu0 0.0
    %3161 = vmatpush1.msra.mxu0 0.0
    %3162 = vmatprep.subr.mxu0 0.0
    %3163 = vmatpush1.msra.mxu0 0.0
    %3164 = vmatprep.subr.mxu0 0.0
    %3165 = vmatpush1.msra.mxu0 0.0
    %3166 = vmatprep.subr.mxu0 0.0
    %3167 = vmatpush1.msra.mxu0 0.0
    %3168 = vmatprep.subr.mxu0 0.0
    %3169 = vmatpush1.msra.mxu0 0.0
    %3170 = vmatprep.subr.mxu0 0.0
    %3171 = vmatpush1.msra.mxu0 0.0
    %3172 = vmatprep.subr.mxu0 0.0
    %3173 = vmatpush1.msra.mxu0 0.0
    %3174 = vmatprep.subr.mxu0 0.0
    %3175 = vmatpush1.msra.mxu0 0.0
    %3176 = vmatprep.subr.mxu0 0.0
    %3177 = vmatpush1.msra.mxu0 0.0
    %3178 = vmatprep.subr.mxu0 0.0
    %3179 = vmatpush1.msra.mxu0 0.0
    %3180 = vmatprep.subr.mxu0 0.0
    %3181 = vmatpush1.msra.mxu0 0.0
    %3182 = vmatprep.subr.mxu0 0.0
    %3183 = vmatpush1.msra.mxu0 0.0
    %3184 = vmatprep.subr.mxu0 0.0
    %3185 = vmatpush1.msra.mxu0 0.0
    %3186 = vmatprep.subr.mxu0 0.0
    %3187 = vmatpush1.msra.mxu0 0.0
    %3188 = vmatprep.subr.mxu0 0.0
    %3189 = vmatpush1.msra.mxu0 0.0
    %3190 = vmatprep.subr.mxu0 0.0
    %3191 = vmatpush1.msra.mxu0 0.0
    %3192 = vmatprep.subr.mxu0 0.0
    %3193 = vmatpush1.msra.mxu0 0.0
    %3194 = vmatprep.mubr.f32.mxu0 0.0
    %3195 = vmatmul.mubr.f32.gmra.mrb[0].mxu0 %v3128
    %v3196 = vpop.f32.mrb[0].mxu0
    %v3197 = vadd.f32 0.0, %v3196
    %v3198 = vpop.f32.mrb[0].mxu0
    %v3199 = vadd.f32 0.0, %v3198
    %3200 = vdwg.mxu0
    %v3202 = vsel %vm1602, %v3118, 0
    %3204 = vmatprep.subr.mxu0 %v3120
    %3205 = vmatpush1.msra.mxu0 %v3119
    %3206 = vmatprep.subr.mxu0 %v3122
    %3207 = vmatpush1.msra.mxu0 %v3121
    %3208 = vmatprep.subr.mxu0 %v3124
    %3209 = vmatpush1.msra.mxu0 %v3123
    %3210 = vmatprep.subr.mxu0 %v3126
    %3211 = vmatpush1.msra.mxu0 %v3125
    %3212 = vmatprep.subr.mxu0 0.0
    %3213 = vmatpush1.msra.mxu0 0.0
    %3214 = vmatprep.subr.mxu0 0.0
    %3215 = vmatpush1.msra.mxu0 0.0
    %3216 = vmatprep.subr.mxu0 0.0
    %3217 = vmatpush1.msra.mxu0 0.0
    %3218 = vmatprep.subr.mxu0 0.0
    %3219 = vmatpush1.msra.mxu0 0.0
    %3220 = vmatprep.subr.mxu0 0.0
    %3221 = vmatpush1.msra.mxu0 0.0
    %3222 = vmatprep.subr.mxu0 0.0
    %3223 = vmatpush1.msra.mxu0 0.0
    %3224 = vmatprep.subr.mxu0 0.0
    %3225 = vmatpush1.msra.mxu0 0.0
    %3226 = vmatprep.subr.mxu0 0.0
    %3227 = vmatpush1.msra.mxu0 0.0
    %3228 = vmatprep.subr.mxu0 0.0
    %3229 = vmatpush1.msra.mxu0 0.0
    %3230 = vmatprep.subr.mxu0 0.0
    %3231 = vmatpush1.msra.mxu0 0.0
    %3232 = vmatprep.subr.mxu0 0.0
    %3233 = vmatpush1.msra.mxu0 0.0
    %3234 = vmatprep.subr.mxu0 0.0
    %3235 = vmatpush1.msra.mxu0 0.0
    %3236 = vmatprep.subr.mxu0 0.0
    %3237 = vmatpush1.msra.mxu0 0.0
    %3238 = vmatprep.subr.mxu0 0.0
    %3239 = vmatpush1.msra.mxu0 0.0
    %3240 = vmatprep.subr.mxu0 0.0
    %3241 = vmatpush1.msra.mxu0 0.0
    %3242 = vmatprep.subr.mxu0 0.0
    %3243 = vmatpush1.msra.mxu0 0.0
    %3244 = vmatprep.subr.mxu0 0.0
    %3245 = vmatpush1.msra.mxu0 0.0
    %3246 = vmatprep.subr.mxu0 0.0
    %3247 = vmatpush1.msra.mxu0 0.0
    %3248 = vmatprep.subr.mxu0 0.0
    %3249 = vmatpush1.msra.mxu0 0.0
    %3250 = vmatprep.subr.mxu0 0.0
    %3251 = vmatpush1.msra.mxu0 0.0
    %3252 = vmatprep.subr.mxu0 0.0
    %3253 = vmatpush1.msra.mxu0 0.0
    %3254 = vmatprep.subr.mxu0 0.0
    %3255 = vmatpush1.msra.mxu0 0.0
    %3256 = vmatprep.subr.mxu0 0.0
    %3257 = vmatpush1.msra.mxu0 0.0
    %3258 = vmatprep.subr.mxu0 0.0
    %3259 = vmatpush1.msra.mxu0 0.0
    %3260 = vmatprep.subr.mxu0 0.0
    %3261 = vmatpush1.msra.mxu0 0.0
    %3262 = vmatprep.subr.mxu0 0.0
    %3263 = vmatpush1.msra.mxu0 0.0
    %3264 = vmatprep.subr.mxu0 0.0
    %3265 = vmatpush1.msra.mxu0 0.0
    %3266 = vmatprep.subr.mxu0 0.0
    %3267 = vmatpush1.msra.mxu0 0.0
    %3268 = vmatprep.mubr.f32.mxu0 0.0
    %3269 = vmatmul.mubr.f32.gmra.mrb[0].mxu0 %v3202
    %v3270 = vpop.f32.mrb[0].mxu0
    %v3271 = vadd.f32 0.0, %v3270
    %v3272 = vpop.f32.mrb[0].mxu0
    %v3273 = vadd.f32 0.0, %v3272
    %3274 = vdwg.mxu0
    %v3275 = vlaneseq
    %v3276 = vshrl.u32 %v3275, 7
    %v3277 = vsub.s32 0, %v3276
    %v3278 = vrot.slane %v3197, %v3277
    %v3279 = vlaneseq
    %v3280 = vshrl.u32 %v3279, 7
    %v3281 = vsub.s32 0, %v3280
    %v3282 = vrot.slane %v3199, %v3281
    %v3283 = vmul.f32 %v2899, %v3278
    %v3284 = vmul.f32 %v2900, %v3282
    %v3285 = vmul.f32 %v2901, %v3278
    %v3286 = vmul.f32 %v2902, %v3282
    %v3287 = vlaneseq
    %v3288 = vshrl.u32 %v3287, 7
    %v3289 = vsub.s32 0, %v3288
    %v3290 = vrot.slane %v3271, %v3289
    %v3291 = vlaneseq
    %v3292 = vshrl.u32 %v3291, 7
    %v3293 = vsub.s32 0, %v3292
    %v3294 = vrot.slane %v3273, %v3293
    %v3295 = vadd.f32 %v3283, %v3290
    %v3296 = vadd.f32 %v3284, %v3294
    %v3297 = vadd.f32 %v3285, %v3290
    %v3298 = vadd.f32 %v3286, %v3294
    %v3299 = vmax.f32 %v3295, 0.0
    %v3300 = vmax.f32 %v3296, 0.0
    %v3301 = vmax.f32 %v3297, 0.0
    %v3302 = vmax.f32 %v3298, 0.0
    %v3303 = vld [vmem:[#allocation10] sm:$0xff]
    %v3305 = vsel %vm1411, %v3303, 0
    %3307 = vmatprep.subr.mxu0 %v3300
    %3308 = vmatpush1.msra.mxu0 %v3299
    %3309 = vmatprep.subr.mxu0 %v3302
    %3310 = vmatpush1.msra.mxu0 %v3301
    %3311 = vmatprep.subr.mxu0 0.0
    %3312 = vmatpush1.msra.mxu0 0.0
    %3313 = vmatprep.subr.mxu0 0.0
    %3314 = vmatpush1.msra.mxu0 0.0
    %3315 = vmatprep.subr.mxu0 0.0
    %3316 = vmatpush1.msra.mxu0 0.0
    %3317 = vmatprep.subr.mxu0 0.0
    %3318 = vmatpush1.msra.mxu0 0.0
    %3319 = vmatprep.subr.mxu0 0.0
    %3320 = vmatpush1.msra.mxu0 0.0
    %3321 = vmatprep.subr.mxu0 0.0
    %3322 = vmatpush1.msra.mxu0 0.0
    %3323 = vmatprep.subr.mxu0 0.0
    %3324 = vmatpush1.msra.mxu0 0.0
    %3325 = vmatprep.subr.mxu0 0.0
    %3326 = vmatpush1.msra.mxu0 0.0
    %3327 = vmatprep.subr.mxu0 0.0
    %3328 = vmatpush1.msra.mxu0 0.0
    %3329 = vmatprep.subr.mxu0 0.0
    %3330 = vmatpush1.msra.mxu0 0.0
    %3331 = vmatprep.subr.mxu0 0.0
    %3332 = vmatpush1.msra.mxu0 0.0
    %3333 = vmatprep.subr.mxu0 0.0
    %3334 = vmatpush1.msra.mxu0 0.0
    %3335 = vmatprep.subr.mxu0 0.0
    %3336 = vmatpush1.msra.mxu0 0.0
    %3337 = vmatprep.subr.mxu0 0.0
    %3338 = vmatpush1.msra.mxu0 0.0
    %3339 = vmatprep.subr.mxu0 0.0
    %3340 = vmatpush1.msra.mxu0 0.0
    %3341 = vmatprep.subr.mxu0 0.0
    %3342 = vmatpush1.msra.mxu0 0.0
    %3343 = vmatprep.subr.mxu0 0.0
    %3344 = vmatpush1.msra.mxu0 0.0
    %3345 = vmatprep.subr.mxu0 0.0
    %3346 = vmatpush1.msra.mxu0 0.0
    %3347 = vmatprep.subr.mxu0 0.0
    %3348 = vmatpush1.msra.mxu0 0.0
    %3349 = vmatprep.subr.mxu0 0.0
    %3350 = vmatpush1.msra.mxu0 0.0
    %3351 = vmatprep.subr.mxu0 0.0
    %3352 = vmatpush1.msra.mxu0 0.0
    %3353 = vmatprep.subr.mxu0 0.0
    %3354 = vmatpush1.msra.mxu0 0.0
    %3355 = vmatprep.subr.mxu0 0.0
    %3356 = vmatpush1.msra.mxu0 0.0
    %3357 = vmatprep.subr.mxu0 0.0
    %3358 = vmatpush1.msra.mxu0 0.0
    %3359 = vmatprep.subr.mxu0 0.0
    %3360 = vmatpush1.msra.mxu0 0.0
    %3361 = vmatprep.subr.mxu0 0.0
    %3362 = vmatpush1.msra.mxu0 0.0
    %3363 = vmatprep.subr.mxu0 0.0
    %3364 = vmatpush1.msra.mxu0 0.0
    %3365 = vmatprep.subr.mxu0 0.0
    %3366 = vmatpush1.msra.mxu0 0.0
    %3367 = vmatprep.subr.mxu0 0.0
    %3368 = vmatpush1.msra.mxu0 0.0
    %3369 = vmatprep.subr.mxu0 0.0
    %3370 = vmatpush1.msra.mxu0 0.0
    %3371 = vmatprep.mubr.f32.mxu0 0.0
    %3372 = vmatmul.mubr.f32.gmra.mrb[0].mxu0 %v3305
    %v3373 = vpop.f32.mrb[0].mxu0
    %v3374 = vadd.f32 0.0, %v3373
    %v3375 = vpop.f32.mrb[0].mxu0
    %v3376 = vadd.f32 0.0, %v3375
    %3377 = vdwg.mxu0
    %v3378 = vpack.c.bf16 %v3374, %v3374
    %v3379 = vpack.c.bf16 %v3376, %v3376
    %v3380 = vld [vmem:[%s14] sm:$0xff]
    %v3381 = vld [vmem:[%s14 + $0x8] sm:$0xff]
    %v3382 = vld [vmem:[%s14 + $0x10] sm:$0xff]
    %v3383 = vld [vmem:[%s14 + $0x18] sm:$0xff]
    %v3384 = vld [vmem:[%s14 + $0x20] sm:$0xff]
    %v3385 = vld [vmem:[%s14 + $0x28] sm:$0xff]
    %v3386 = vld [vmem:[%s14 + $0x30] sm:$0xff]
    %v3387 = vld [vmem:[%s14 + $0x38] sm:$0xff]
    %v3388 = vld [vmem:[%s14 + $0x40] sm:$0xff]
    %v3389 = vld [vmem:[%s14 + $0x48] sm:$0xff]
    %v3390 = vld [vmem:[%s14 + $0x50] sm:$0xff]
    %v3391 = vld [vmem:[%s14 + $0x58] sm:$0xff]
    %v3392 = vld [vmem:[%s14 + $0x60] sm:$0xff]
    %v3393 = vld [vmem:[%s14 + $0x68] sm:$0xff]
    %v3394 = vld [vmem:[%s14 + $0x70] sm:$0xff]
    %v3395 = vld [vmem:[%s14 + $0x78] sm:$0xff]
    %v3396 = vld [vmem:[%s14 + $0x80] sm:$0xff]
    %v3397 = vld [vmem:[%s14 + $0x88] sm:$0xff]
    %v3398 = vld [vmem:[%s14 + $0x90] sm:$0xff]
    %v3399 = vld [vmem:[%s14 + $0x98] sm:$0xff]
    %v3400 = vld [vmem:[%s14 + $0xa0] sm:$0xff]
    %v3401 = vld [vmem:[%s14 + $0xa8] sm:$0xff]
    %v3402 = vld [vmem:[%s14 + $0xb0] sm:$0xff]
    %v3403 = vld [vmem:[%s14 + $0xb8] sm:$0xff]
    %v3404 = vld [vmem:[%s14 + $0xc0] sm:$0xff]
    %v3405 = vld [vmem:[%s14 + $0xc8] sm:$0xff]
    %v3406 = vld [vmem:[%s14 + $0xd0] sm:$0xff]
    %v3407 = vld [vmem:[%s14 + $0xd8] sm:$0xff]
    %v3408 = vld [vmem:[%s14 + $0xe0] sm:$0xff]
    %v3409 = vld [vmem:[%s14 + $0xe8] sm:$0xff]
    %v3410 = vld [vmem:[%s14 + $0xf0] sm:$0xff]
    %v3411 = vld [vmem:[%s14 + $0xf8] sm:$0xff]
    %s3412 = scalar_lea.vmem [#allocation10], 8
    %v3413 = vld [vmem:[%s3412] sm:$0xff]
    %v3415 = vsel %vm1411, %v3413, 0
    %3417 = vmatprep.subr.mxu0 %v3300
    %3418 = vmatpush1.msra.mxu0 %v3299
    %3419 = vmatprep.subr.mxu0 %v3302
    %3420 = vmatpush1.msra.mxu0 %v3301
    %3421 = vmatprep.subr.mxu0 0.0
    %3422 = vmatpush1.msra.mxu0 0.0
    %3423 = vmatprep.subr.mxu0 0.0
    %3424 = vmatpush1.msra.mxu0 0.0
    %3425 = vmatprep.subr.mxu0 0.0
    %3426 = vmatpush1.msra.mxu0 0.0
    %3427 = vmatprep.subr.mxu0 0.0
    %3428 = vmatpush1.msra.mxu0 0.0
    %3429 = vmatprep.subr.mxu0 0.0
    %3430 = vmatpush1.msra.mxu0 0.0
    %3431 = vmatprep.subr.mxu0 0.0
    %3432 = vmatpush1.msra.mxu0 0.0
    %3433 = vmatprep.subr.mxu0 0.0
    %3434 = vmatpush1.msra.mxu0 0.0
    %3435 = vmatprep.subr.mxu0 0.0
    %3436 = vmatpush1.msra.mxu0 0.0
    %3437 = vmatprep.subr.mxu0 0.0
    %3438 = vmatpush1.msra.mxu0 0.0
    %3439 = vmatprep.subr.mxu0 0.0
    %3440 = vmatpush1.msra.mxu0 0.0
    %3441 = vmatprep.subr.mxu0 0.0
    %3442 = vmatpush1.msra.mxu0 0.0
    %3443 = vmatprep.subr.mxu0 0.0
    %3444 = vmatpush1.msra.mxu0 0.0
    %3445 = vmatprep.subr.mxu0 0.0
    %3446 = vmatpush1.msra.mxu0 0.0
    %3447 = vmatprep.subr.mxu0 0.0
    %3448 = vmatpush1.msra.mxu0 0.0
    %3449 = vmatprep.subr.mxu0 0.0
    %3450 = vmatpush1.msra.mxu0 0.0
    %3451 = vmatprep.subr.mxu0 0.0
    %3452 = vmatpush1.msra.mxu0 0.0
    %3453 = vmatprep.subr.mxu0 0.0
    %3454 = vmatpush1.msra.mxu0 0.0
    %3455 = vmatprep.subr.mxu0 0.0
    %3456 = vmatpush1.msra.mxu0 0.0
    %3457 = vmatprep.subr.mxu0 0.0
    %3458 = vmatpush1.msra.mxu0 0.0
    %3459 = vmatprep.subr.mxu0 0.0
    %3460 = vmatpush1.msra.mxu0 0.0
    %3461 = vmatprep.subr.mxu0 0.0
    %3462 = vmatpush1.msra.mxu0 0.0
    %3463 = vmatprep.subr.mxu0 0.0
    %3464 = vmatpush1.msra.mxu0 0.0
    %3465 = vmatprep.subr.mxu0 0.0
    %3466 = vmatpush1.msra.mxu0 0.0
    %3467 = vmatprep.subr.mxu0 0.0
    %3468 = vmatpush1.msra.mxu0 0.0
    %3469 = vmatprep.subr.mxu0 0.0
    %3470 = vmatpush1.msra.mxu0 0.0
    %3471 = vmatprep.subr.mxu0 0.0
    %3472 = vmatpush1.msra.mxu0 0.0
    %3473 = vmatprep.subr.mxu0 0.0
    %3474 = vmatpush1.msra.mxu0 0.0
    %3475 = vmatprep.subr.mxu0 0.0
    %3476 = vmatpush1.msra.mxu0 0.0
    %3477 = vmatprep.subr.mxu0 0.0
    %3478 = vmatpush1.msra.mxu0 0.0
    %3479 = vmatprep.subr.mxu0 0.0
    %3480 = vmatpush1.msra.mxu0 0.0
    %3481 = vmatprep.mubr.f32.mxu0 0.0
    %3482 = vmatmul.mubr.f32.gmra.mrb[0].mxu0 %v3415
    %v3483 = vpop.f32.mrb[0].mxu0
    %v3484 = vadd.f32 0.0, %v3483
    %v3485 = vpop.f32.mrb[0].mxu0
    %v3486 = vadd.f32 0.0, %v3485
    %3487 = vdwg.mxu0
    %v3488 = vpack.c.bf16 %v3484, %v3484
    %v3489 = vpack.c.bf16 %v3486, %v3486
    %s3490 = scalar_lea.vmem %s14, 256
    %v3491 = vld [vmem:[%s3490] sm:$0xff]
    %v3492 = vld [vmem:[%s3490 + $0x8] sm:$0xff]
    %v3493 = vld [vmem:[%s3490 + $0x10] sm:$0xff]
    %v3494 = vld [vmem:[%s3490 + $0x18] sm:$0xff]
    %v3495 = vld [vmem:[%s3490 + $0x20] sm:$0xff]
    %v3496 = vld [vmem:[%s3490 + $0x28] sm:$0xff]
    %v3497 = vld [vmem:[%s3490 + $0x30] sm:$0xff]
    %v3498 = vld [vmem:[%s3490 + $0x38] sm:$0xff]
    %v3499 = vld [vmem:[%s3490 + $0x40] sm:$0xff]
    %v3500 = vld [vmem:[%s3490 + $0x48] sm:$0xff]
    %v3501 = vld [vmem:[%s3490 + $0x50] sm:$0xff]
    %v3502 = vld [vmem:[%s3490 + $0x58] sm:$0xff]
    %v3503 = vld [vmem:[%s3490 + $0x60] sm:$0xff]
    %v3504 = vld [vmem:[%s3490 + $0x68] sm:$0xff]
    %v3505 = vld [vmem:[%s3490 + $0x70] sm:$0xff]
    %v3506 = vld [vmem:[%s3490 + $0x78] sm:$0xff]
    %v3507 = vld [vmem:[%s3490 + $0x80] sm:$0xff]
    %v3508 = vld [vmem:[%s3490 + $0x88] sm:$0xff]
    %v3509 = vld [vmem:[%s3490 + $0x90] sm:$0xff]
    %v3510 = vld [vmem:[%s3490 + $0x98] sm:$0xff]
    %v3511 = vld [vmem:[%s3490 + $0xa0] sm:$0xff]
    %v3512 = vld [vmem:[%s3490 + $0xa8] sm:$0xff]
    %v3513 = vld [vmem:[%s3490 + $0xb0] sm:$0xff]
    %v3514 = vld [vmem:[%s3490 + $0xb8] sm:$0xff]
    %v3515 = vld [vmem:[%s3490 + $0xc0] sm:$0xff]
    %v3516 = vld [vmem:[%s3490 + $0xc8] sm:$0xff]
    %v3517 = vld [vmem:[%s3490 + $0xd0] sm:$0xff]
    %v3518 = vld [vmem:[%s3490 + $0xd8] sm:$0xff]
    %v3519 = vld [vmem:[%s3490 + $0xe0] sm:$0xff]
    %v3520 = vld [vmem:[%s3490 + $0xe8] sm:$0xff]
    %v3521 = vld [vmem:[%s3490 + $0xf0] sm:$0xff]
    %v3522 = vld [vmem:[%s3490 + $0xf8] sm:$0xff]
    %v3555 = vunpack.c.l.b16 %v3491
    %v3556 = vunpack.c.h.b16 %v3491
    %v3557 = vunpack.c.l.b16 %v3492
    %v3558 = vunpack.c.h.b16 %v3492
    %v3559 = vunpack.c.l.b16 %v3493
    %v3560 = vunpack.c.h.b16 %v3493
    %v3561 = vunpack.c.l.b16 %v3494
    %v3562 = vunpack.c.h.b16 %v3494
    %v3563 = vunpack.c.l.b16 %v3495
    %v3564 = vunpack.c.h.b16 %v3495
    %v3565 = vunpack.c.l.b16 %v3496
    %v3566 = vunpack.c.h.b16 %v3496
    %v3567 = vunpack.c.l.b16 %v3497
    %v3568 = vunpack.c.h.b16 %v3497
    %v3569 = vunpack.c.l.b16 %v3498
    %v3570 = vunpack.c.h.b16 %v3498
    %v3571 = vunpack.c.l.b16 %v3499
    %v3572 = vunpack.c.h.b16 %v3499
    %v3573 = vunpack.c.l.b16 %v3500
    %v3574 = vunpack.c.h.b16 %v3500
    %v3575 = vunpack.c.l.b16 %v3501
    %v3576 = vunpack.c.h.b16 %v3501
    %v3577 = vunpack.c.l.b16 %v3502
    %v3578 = vunpack.c.h.b16 %v3502
    %v3579 = vunpack.c.l.b16 %v3503
    %v3580 = vunpack.c.h.b16 %v3503
    %v3581 = vunpack.c.l.b16 %v3504
    %v3582 = vunpack.c.h.b16 %v3504
    %v3583 = vunpack.c.l.b16 %v3505
    %v3584 = vunpack.c.h.b16 %v3505
    %v3585 = vunpack.c.l.b16 %v3506
    %v3586 = vunpack.c.h.b16 %v3506
    %v3587 = vunpack.c.l.b16 %v3507
    %v3588 = vunpack.c.h.b16 %v3507
    %v3589 = vunpack.c.l.b16 %v3508
    %v3590 = vunpack.c.h.b16 %v3508
    %v3591 = vunpack.c.l.b16 %v3509
    %v3592 = vunpack.c.h.b16 %v3509
    %v3593 = vunpack.c.l.b16 %v3510
    %v3594 = vunpack.c.h.b16 %v3510
    %v3595 = vunpack.c.l.b16 %v3511
    %v3596 = vunpack.c.h.b16 %v3511
    %v3597 = vunpack.c.l.b16 %v3512
    %v3598 = vunpack.c.h.b16 %v3512
    %v3599 = vunpack.c.l.b16 %v3513
    %v3600 = vunpack.c.h.b16 %v3513
    %v3601 = vunpack.c.l.b16 %v3514
    %v3602 = vunpack.c.h.b16 %v3514
    %v3603 = vunpack.c.l.b16 %v3515
    %v3604 = vunpack.c.h.b16 %v3515
    %v3605 = vunpack.c.l.b16 %v3516
    %v3606 = vunpack.c.h.b16 %v3516
    %v3607 = vunpack.c.l.b16 %v3517
    %v3608 = vunpack.c.h.b16 %v3517
    %v3609 = vunpack.c.l.b16 %v3518
    %v3610 = vunpack.c.h.b16 %v3518
    %v3611 = vunpack.c.l.b16 %v3519
    %v3612 = vunpack.c.h.b16 %v3519
    %v3613 = vunpack.c.l.b16 %v3520
    %v3614 = vunpack.c.h.b16 %v3520
    %v3615 = vunpack.c.l.b16 %v3521
    %v3616 = vunpack.c.h.b16 %v3521
    %v3617 = vunpack.c.l.b16 %v3522
    %v3618 = vunpack.c.h.b16 %v3522
    %v3619 = vpack.c.b16 %v3557, %v3555
    %v3620 = vpack.c.b16 %v3558, %v3556
    %v3621 = vpack.c.b16 %v3561, %v3559
    %v3622 = vpack.c.b16 %v3562, %v3560
    %v3623 = vpack.c.b16 %v3565, %v3563
    %v3624 = vpack.c.b16 %v3566, %v3564
    %v3625 = vpack.c.b16 %v3569, %v3567
    %v3626 = vpack.c.b16 %v3570, %v3568
    %v3627 = vpack.c.b16 %v3573, %v3571
    %v3628 = vpack.c.b16 %v3574, %v3572
    %v3629 = vpack.c.b16 %v3577, %v3575
    %v3630 = vpack.c.b16 %v3578, %v3576
    %v3631 = vpack.c.b16 %v3581, %v3579
    %v3632 = vpack.c.b16 %v3582, %v3580
    %v3633 = vpack.c.b16 %v3585, %v3583
    %v3634 = vpack.c.b16 %v3586, %v3584
    %v3635 = vpack.c.b16 %v3589, %v3587
    %v3636 = vpack.c.b16 %v3590, %v3588
    %v3637 = vpack.c.b16 %v3593, %v3591
    %v3638 = vpack.c.b16 %v3594, %v3592
    %v3639 = vpack.c.b16 %v3597, %v3595
    %v3640 = vpack.c.b16 %v3598, %v3596
    %v3641 = vpack.c.b16 %v3601, %v3599
    %v3642 = vpack.c.b16 %v3602, %v3600
    %v3643 = vpack.c.b16 %v3605, %v3603
    %v3644 = vpack.c.b16 %v3606, %v3604
    %v3645 = vpack.c.b16 %v3609, %v3607
    %v3646 = vpack.c.b16 %v3610, %v3608
    %v3647 = vpack.c.b16 %v3613, %v3611
    %v3648 = vpack.c.b16 %v3614, %v3612
    %v3649 = vpack.c.b16 %v3617, %v3615
    %v3650 = vpack.c.b16 %v3618, %v3616
    %3683 = vmatprep.subr.bf16.mxu0 %v3620
    %3684 = vmatpush1.bf16.msra.mxu0 %v3619
    %3685 = vmatprep.subr.bf16.mxu0 %v3622
    %3686 = vmatpush1.bf16.msra.mxu0 %v3621
    %3687 = vmatprep.subr.bf16.mxu0 %v3624
    %3688 = vmatpush1.bf16.msra.mxu0 %v3623
    %3689 = vmatprep.subr.bf16.mxu0 %v3626
    %3690 = vmatpush1.bf16.msra.mxu0 %v3625
    %3691 = vmatprep.subr.bf16.mxu0 %v3628
    %3692 = vmatpush1.bf16.msra.mxu0 %v3627
    %3693 = vmatprep.subr.bf16.mxu0 %v3630
    %3694 = vmatpush1.bf16.msra.mxu0 %v3629
    %3695 = vmatprep.subr.bf16.mxu0 %v3632
    %3696 = vmatpush1.bf16.msra.mxu0 %v3631
    %3697 = vmatprep.subr.bf16.mxu0 %v3634
    %3698 = vmatpush1.bf16.msra.mxu0 %v3633
    %3699 = vmatprep.subr.bf16.mxu0 %v3636
    %3700 = vmatpush1.bf16.msra.mxu0 %v3635
    %3701 = vmatprep.subr.bf16.mxu0 %v3638
    %3702 = vmatpush1.bf16.msra.mxu0 %v3637
    %3703 = vmatprep.subr.bf16.mxu0 %v3640
    %3704 = vmatpush1.bf16.msra.mxu0 %v3639
    %3705 = vmatprep.subr.bf16.mxu0 %v3642
    %3706 = vmatpush1.bf16.msra.mxu0 %v3641
    %3707 = vmatprep.subr.bf16.mxu0 %v3644
    %3708 = vmatpush1.bf16.msra.mxu0 %v3643
    %3709 = vmatprep.subr.bf16.mxu0 %v3646
    %3710 = vmatpush1.bf16.msra.mxu0 %v3645
    %3711 = vmatprep.subr.bf16.mxu0 %v3648
    %3712 = vmatpush1.bf16.msra.mxu0 %v3647
    %3713 = vmatprep.subr.bf16.mxu0 %v3650
    %3714 = vmatpush1.bf16.msra.mxu0 %v3649
    %3715 = vmatprep.mubr.bf16.mxu0 %v3489
    %3716 = vmatmul.mubr.bf16.gmra.mrb[0].mxu0 %v3488
    %v3717 = vpop.f32.mrb[0].mxu0
    %v3718 = vadd.f32 0.0, %v3717
    %v3719 = vpop.f32.mrb[0].mxu0
    %v3720 = vadd.f32 0.0, %v3719
    %v3721 = vpop.f32.mrb[0].mxu0
    %v3722 = vpop.f32.mrb[0].mxu0
    %3723 = vdwg.mxu0
    %v3756 = vunpack.c.l.b16 %v3380
    %v3757 = vunpack.c.h.b16 %v3380
    %v3758 = vunpack.c.l.b16 %v3381
    %v3759 = vunpack.c.h.b16 %v3381
    %v3760 = vunpack.c.l.b16 %v3382
    %v3761 = vunpack.c.h.b16 %v3382
    %v3762 = vunpack.c.l.b16 %v3383
    %v3763 = vunpack.c.h.b16 %v3383
    %v3764 = vunpack.c.l.b16 %v3384
    %v3765 = vunpack.c.h.b16 %v3384
    %v3766 = vunpack.c.l.b16 %v3385
    %v3767 = vunpack.c.h.b16 %v3385
    %v3768 = vunpack.c.l.b16 %v3386
    %v3769 = vunpack.c.h.b16 %v3386
    %v3770 = vunpack.c.l.b16 %v3387
    %v3771 = vunpack.c.h.b16 %v3387
    %v3772 = vunpack.c.l.b16 %v3388
    %v3773 = vunpack.c.h.b16 %v3388
    %v3774 = vunpack.c.l.b16 %v3389
    %v3775 = vunpack.c.h.b16 %v3389
    %v3776 = vunpack.c.l.b16 %v3390
    %v3777 = vunpack.c.h.b16 %v3390
    %v3778 = vunpack.c.l.b16 %v3391
    %v3779 = vunpack.c.h.b16 %v3391
    %v3780 = vunpack.c.l.b16 %v3392
    %v3781 = vunpack.c.h.b16 %v3392
    %v3782 = vunpack.c.l.b16 %v3393
    %v3783 = vunpack.c.h.b16 %v3393
    %v3784 = vunpack.c.l.b16 %v3394
    %v3785 = vunpack.c.h.b16 %v3394
    %v3786 = vunpack.c.l.b16 %v3395
    %v3787 = vunpack.c.h.b16 %v3395
    %v3788 = vunpack.c.l.b16 %v3396
    %v3789 = vunpack.c.h.b16 %v3396
    %v3790 = vunpack.c.l.b16 %v3397
    %v3791 = vunpack.c.h.b16 %v3397
    %v3792 = vunpack.c.l.b16 %v3398
    %v3793 = vunpack.c.h.b16 %v3398
    %v3794 = vunpack.c.l.b16 %v3399
    %v3795 = vunpack.c.h.b16 %v3399
    %v3796 = vunpack.c.l.b16 %v3400
    %v3797 = vunpack.c.h.b16 %v3400
    %v3798 = vunpack.c.l.b16 %v3401
    %v3799 = vunpack.c.h.b16 %v3401
    %v3800 = vunpack.c.l.b16 %v3402
    %v3801 = vunpack.c.h.b16 %v3402
    %v3802 = vunpack.c.l.b16 %v3403
    %v3803 = vunpack.c.h.b16 %v3403
    %v3804 = vunpack.c.l.b16 %v3404
    %v3805 = vunpack.c.h.b16 %v3404
    %v3806 = vunpack.c.l.b16 %v3405
    %v3807 = vunpack.c.h.b16 %v3405
    %v3808 = vunpack.c.l.b16 %v3406
    %v3809 = vunpack.c.h.b16 %v3406
    %v3810 = vunpack.c.l.b16 %v3407
    %v3811 = vunpack.c.h.b16 %v3407
    %v3812 = vunpack.c.l.b16 %v3408
    %v3813 = vunpack.c.h.b16 %v3408
    %v3814 = vunpack.c.l.b16 %v3409
    %v3815 = vunpack.c.h.b16 %v3409
    %v3816 = vunpack.c.l.b16 %v3410
    %v3817 = vunpack.c.h.b16 %v3410
    %v3818 = vunpack.c.l.b16 %v3411
    %v3819 = vunpack.c.h.b16 %v3411
    %v3820 = vpack.c.b16 %v3758, %v3756
    %v3821 = vpack.c.b16 %v3759, %v3757
    %v3822 = vpack.c.b16 %v3762, %v3760
    %v3823 = vpack.c.b16 %v3763, %v3761
    %v3824 = vpack.c.b16 %v3766, %v3764
    %v3825 = vpack.c.b16 %v3767, %v3765
    %v3826 = vpack.c.b16 %v3770, %v3768
    %v3827 = vpack.c.b16 %v3771, %v3769
    %v3828 = vpack.c.b16 %v3774, %v3772
    %v3829 = vpack.c.b16 %v3775, %v3773
    %v3830 = vpack.c.b16 %v3778, %v3776
    %v3831 = vpack.c.b16 %v3779, %v3777
    %v3832 = vpack.c.b16 %v3782, %v3780
    %v3833 = vpack.c.b16 %v3783, %v3781
    %v3834 = vpack.c.b16 %v3786, %v3784
    %v3835 = vpack.c.b16 %v3787, %v3785
    %v3836 = vpack.c.b16 %v3790, %v3788
    %v3837 = vpack.c.b16 %v3791, %v3789
    %v3838 = vpack.c.b16 %v3794, %v3792
    %v3839 = vpack.c.b16 %v3795, %v3793
    %v3840 = vpack.c.b16 %v3798, %v3796
    %v3841 = vpack.c.b16 %v3799, %v3797
    %v3842 = vpack.c.b16 %v3802, %v3800
    %v3843 = vpack.c.b16 %v3803, %v3801
    %v3844 = vpack.c.b16 %v3806, %v3804
    %v3845 = vpack.c.b16 %v3807, %v3805
    %v3846 = vpack.c.b16 %v3810, %v3808
    %v3847 = vpack.c.b16 %v3811, %v3809
    %v3848 = vpack.c.b16 %v3814, %v3812
    %v3849 = vpack.c.b16 %v3815, %v3813
    %v3850 = vpack.c.b16 %v3818, %v3816
    %v3851 = vpack.c.b16 %v3819, %v3817
    %3884 = vmatprep.subr.bf16.mxu0 %v3821
    %3885 = vmatpush1.bf16.msra.mxu0 %v3820
    %3886 = vmatprep.subr.bf16.mxu0 %v3823
    %3887 = vmatpush1.bf16.msra.mxu0 %v3822
    %3888 = vmatprep.subr.bf16.mxu0 %v3825
    %3889 = vmatpush1.bf16.msra.mxu0 %v3824
    %3890 = vmatprep.subr.bf16.mxu0 %v3827
    %3891 = vmatpush1.bf16.msra.mxu0 %v3826
    %3892 = vmatprep.subr.bf16.mxu0 %v3829
    %3893 = vmatpush1.bf16.msra.mxu0 %v3828
    %3894 = vmatprep.subr.bf16.mxu0 %v3831
    %3895 = vmatpush1.bf16.msra.mxu0 %v3830
    %3896 = vmatprep.subr.bf16.mxu0 %v3833
    %3897 = vmatpush1.bf16.msra.mxu0 %v3832
    %3898 = vmatprep.subr.bf16.mxu0 %v3835
    %3899 = vmatpush1.bf16.msra.mxu0 %v3834
    %3900 = vmatprep.subr.bf16.mxu0 %v3837
    %3901 = vmatpush1.bf16.msra.mxu0 %v3836
    %3902 = vmatprep.subr.bf16.mxu0 %v3839
    %3903 = vmatpush1.bf16.msra.mxu0 %v3838
    %3904 = vmatprep.subr.bf16.mxu0 %v3841
    %3905 = vmatpush1.bf16.msra.mxu0 %v3840
    %3906 = vmatprep.subr.bf16.mxu0 %v3843
    %3907 = vmatpush1.bf16.msra.mxu0 %v3842
    %3908 = vmatprep.subr.bf16.mxu0 %v3845
    %3909 = vmatpush1.bf16.msra.mxu0 %v3844
    %3910 = vmatprep.subr.bf16.mxu0 %v3847
    %3911 = vmatpush1.bf16.msra.mxu0 %v3846
    %3912 = vmatprep.subr.bf16.mxu0 %v3849
    %3913 = vmatpush1.bf16.msra.mxu0 %v3848
    %3914 = vmatprep.subr.bf16.mxu0 %v3851
    %3915 = vmatpush1.bf16.msra.mxu0 %v3850
    %3916 = vmatprep.mubr.bf16.mxu0 %v3379
    %3917 = vmatmul.mubr.bf16.gmra.mrb[0].mxu0 %v3378
    %v3918 = vpop.f32.mrb[0].mxu0
    %v3919 = vadd.f32 %v3718, %v3918
    %v3920 = vpop.f32.mrb[0].mxu0
    %v3921 = vadd.f32 %v3720, %v3920
    %v3922 = vpop.f32.mrb[0].mxu0
    %v3923 = vpop.f32.mrb[0].mxu0
    %3924 = vdwg.mxu0
    %s3925 = scalar_lea.vmem [#allocation10], 16
    %v3926 = vld [vmem:[%s3925] sm:$0xff]
    %v3928 = vsel %vm1411, %v3926, 0
    %3930 = vmatprep.subr.mxu0 %v3300
    %3931 = vmatpush1.msra.mxu0 %v3299
    %3932 = vmatprep.subr.mxu0 %v3302
    %3933 = vmatpush1.msra.mxu0 %v3301
    %3934 = vmatprep.subr.mxu0 0.0
    %3935 = vmatpush1.msra.mxu0 0.0
    %3936 = vmatprep.subr.mxu0 0.0
    %3937 = vmatpush1.msra.mxu0 0.0
    %3938 = vmatprep.subr.mxu0 0.0
    %3939 = vmatpush1.msra.mxu0 0.0
    %3940 = vmatprep.subr.mxu0 0.0
    %3941 = vmatpush1.msra.mxu0 0.0
    %3942 = vmatprep.subr.mxu0 0.0
    %3943 = vmatpush1.msra.mxu0 0.0
    %3944 = vmatprep.subr.mxu0 0.0
    %3945 = vmatpush1.msra.mxu0 0.0
    %3946 = vmatprep.subr.mxu0 0.0
    %3947 = vmatpush1.msra.mxu0 0.0
    %3948 = vmatprep.subr.mxu0 0.0
    %3949 = vmatpush1.msra.mxu0 0.0
    %3950 = vmatprep.subr.mxu0 0.0
    %3951 = vmatpush1.msra.mxu0 0.0
    %3952 = vmatprep.subr.mxu0 0.0
    %3953 = vmatpush1.msra.mxu0 0.0
    %3954 = vmatprep.subr.mxu0 0.0
    %3955 = vmatpush1.msra.mxu0 0.0
    %3956 = vmatprep.subr.mxu0 0.0
    %3957 = vmatpush1.msra.mxu0 0.0
    %3958 = vmatprep.subr.mxu0 0.0
    %3959 = vmatpush1.msra.mxu0 0.0
    %3960 = vmatprep.subr.mxu0 0.0
    %3961 = vmatpush1.msra.mxu0 0.0
    %3962 = vmatprep.subr.mxu0 0.0
    %3963 = vmatpush1.msra.mxu0 0.0
    %3964 = vmatprep.subr.mxu0 0.0
    %3965 = vmatpush1.msra.mxu0 0.0
    %3966 = vmatprep.subr.mxu0 0.0
    %3967 = vmatpush1.msra.mxu0 0.0
    %3968 = vmatprep.subr.mxu0 0.0
    %3969 = vmatpush1.msra.mxu0 0.0
    %3970 = vmatprep.subr.mxu0 0.0
    %3971 = vmatpush1.msra.mxu0 0.0
    %3972 = vmatprep.subr.mxu0 0.0
    %3973 = vmatpush1.msra.mxu0 0.0
    %3974 = vmatprep.subr.mxu0 0.0
    %3975 = vmatpush1.msra.mxu0 0.0
    %3976 = vmatprep.subr.mxu0 0.0
    %3977 = vmatpush1.msra.mxu0 0.0
    %3978 = vmatprep.subr.mxu0 0.0
    %3979 = vmatpush1.msra.mxu0 0.0
    %3980 = vmatprep.subr.mxu0 0.0
    %3981 = vmatpush1.msra.mxu0 0.0
    %3982 = vmatprep.subr.mxu0 0.0
    %3983 = vmatpush1.msra.mxu0 0.0
    %3984 = vmatprep.subr.mxu0 0.0
    %3985 = vmatpush1.msra.mxu0 0.0
    %3986 = vmatprep.subr.mxu0 0.0
    %3987 = vmatpush1.msra.mxu0 0.0
    %3988 = vmatprep.subr.mxu0 0.0
    %3989 = vmatpush1.msra.mxu0 0.0
    %3990 = vmatprep.subr.mxu0 0.0
    %3991 = vmatpush1.msra.mxu0 0.0
    %3992 = vmatprep.subr.mxu0 0.0
    %3993 = vmatpush1.msra.mxu0 0.0
    %3994 = vmatprep.mubr.f32.mxu0 0.0
    %3995 = vmatmul.mubr.f32.gmra.mrb[0].mxu0 %v3928
    %v3996 = vpop.f32.mrb[0].mxu0
    %v3997 = vadd.f32 0.0, %v3996
    %v3998 = vpop.f32.mrb[0].mxu0
    %v3999 = vadd.f32 0.0, %v3998
    %4000 = vdwg.mxu0
    %v4001 = vpack.c.bf16 %v3997, %v3997
    %v4002 = vpack.c.bf16 %v3999, %v3999
    %s4003 = scalar_lea.vmem %s14, 512
    %v4004 = vld [vmem:[%s4003] sm:$0xff]
    %v4005 = vld [vmem:[%s4003 + $0x8] sm:$0xff]
    %v4006 = vld [vmem:[%s4003 + $0x10] sm:$0xff]
    %v4007 = vld [vmem:[%s4003 + $0x18] sm:$0xff]
    %v4008 = vld [vmem:[%s4003 + $0x20] sm:$0xff]
    %v4009 = vld [vmem:[%s4003 + $0x28] sm:$0xff]
    %v4010 = vld [vmem:[%s4003 + $0x30] sm:$0xff]
    %v4011 = vld [vmem:[%s4003 + $0x38] sm:$0xff]
    %v4012 = vld [vmem:[%s4003 + $0x40] sm:$0xff]
    %v4013 = vld [vmem:[%s4003 + $0x48] sm:$0xff]
    %v4014 = vld [vmem:[%s4003 + $0x50] sm:$0xff]
    %v4015 = vld [vmem:[%s4003 + $0x58] sm:$0xff]
    %v4016 = vld [vmem:[%s4003 + $0x60] sm:$0xff]
    %v4017 = vld [vmem:[%s4003 + $0x68] sm:$0xff]
    %v4018 = vld [vmem:[%s4003 + $0x70] sm:$0xff]
    %v4019 = vld [vmem:[%s4003 + $0x78] sm:$0xff]
    %v4020 = vld [vmem:[%s4003 + $0x80] sm:$0xff]
    %v4021 = vld [vmem:[%s4003 + $0x88] sm:$0xff]
    %v4022 = vld [vmem:[%s4003 + $0x90] sm:$0xff]
    %v4023 = vld [vmem:[%s4003 + $0x98] sm:$0xff]
    %v4024 = vld [vmem:[%s4003 + $0xa0] sm:$0xff]
    %v4025 = vld [vmem:[%s4003 + $0xa8] sm:$0xff]
    %v4026 = vld [vmem:[%s4003 + $0xb0] sm:$0xff]
    %v4027 = vld [vmem:[%s4003 + $0xb8] sm:$0xff]
    %v4028 = vld [vmem:[%s4003 + $0xc0] sm:$0xff]
    %v4029 = vld [vmem:[%s4003 + $0xc8] sm:$0xff]
    %v4030 = vld [vmem:[%s4003 + $0xd0] sm:$0xff]
    %v4031 = vld [vmem:[%s4003 + $0xd8] sm:$0xff]
    %v4032 = vld [vmem:[%s4003 + $0xe0] sm:$0xff]
    %v4033 = vld [vmem:[%s4003 + $0xe8] sm:$0xff]
    %v4034 = vld [vmem:[%s4003 + $0xf0] sm:$0xff]
    %v4035 = vld [vmem:[%s4003 + $0xf8] sm:$0xff]
    %v4068 = vunpack.c.l.b16 %v4004
    %v4069 = vunpack.c.h.b16 %v4004
    %v4070 = vunpack.c.l.b16 %v4005
    %v4071 = vunpack.c.h.b16 %v4005
    %v4072 = vunpack.c.l.b16 %v4006
    %v4073 = vunpack.c.h.b16 %v4006
    %v4074 = vunpack.c.l.b16 %v4007
    %v4075 = vunpack.c.h.b16 %v4007
    %v4076 = vunpack.c.l.b16 %v4008
    %v4077 = vunpack.c.h.b16 %v4008
    %v4078 = vunpack.c.l.b16 %v4009
    %v4079 = vunpack.c.h.b16 %v4009
    %v4080 = vunpack.c.l.b16 %v4010
    %v4081 = vunpack.c.h.b16 %v4010
    %v4082 = vunpack.c.l.b16 %v4011
    %v4083 = vunpack.c.h.b16 %v4011
    %v4084 = vunpack.c.l.b16 %v4012
    %v4085 = vunpack.c.h.b16 %v4012
    %v4086 = vunpack.c.l.b16 %v4013
    %v4087 = vunpack.c.h.b16 %v4013
    %v4088 = vunpack.c.l.b16 %v4014
    %v4089 = vunpack.c.h.b16 %v4014
    %v4090 = vunpack.c.l.b16 %v4015
    %v4091 = vunpack.c.h.b16 %v4015
    %v4092 = vunpack.c.l.b16 %v4016
    %v4093 = vunpack.c.h.b16 %v4016
    %v4094 = vunpack.c.l.b16 %v4017
    %v4095 = vunpack.c.h.b16 %v4017
    %v4096 = vunpack.c.l.b16 %v4018
    %v4097 = vunpack.c.h.b16 %v4018
    %v4098 = vunpack.c.l.b16 %v4019
    %v4099 = vunpack.c.h.b16 %v4019
    %v4100 = vunpack.c.l.b16 %v4020
    %v4101 = vunpack.c.h.b16 %v4020
    %v4102 = vunpack.c.l.b16 %v4021
    %v4103 = vunpack.c.h.b16 %v4021
    %v4104 = vunpack.c.l.b16 %v4022
    %v4105 = vunpack.c.h.b16 %v4022
    %v4106 = vunpack.c.l.b16 %v4023
    %v4107 = vunpack.c.h.b16 %v4023
    %v4108 = vunpack.c.l.b16 %v4024
    %v4109 = vunpack.c.h.b16 %v4024
    %v4110 = vunpack.c.l.b16 %v4025
    %v4111 = vunpack.c.h.b16 %v4025
    %v4112 = vunpack.c.l.b16 %v4026
    %v4113 = vunpack.c.h.b16 %v4026
    %v4114 = vunpack.c.l.b16 %v4027
    %v4115 = vunpack.c.h.b16 %v4027
    %v4116 = vunpack.c.l.b16 %v4028
    %v4117 = vunpack.c.h.b16 %v4028
    %v4118 = vunpack.c.l.b16 %v4029
    %v4119 = vunpack.c.h.b16 %v4029
    %v4120 = vunpack.c.l.b16 %v4030
    %v4121 = vunpack.c.h.b16 %v4030
    %v4122 = vunpack.c.l.b16 %v4031
    %v4123 = vunpack.c.h.b16 %v4031
    %v4124 = vunpack.c.l.b16 %v4032
    %v4125 = vunpack.c.h.b16 %v4032
    %v4126 = vunpack.c.l.b16 %v4033
    %v4127 = vunpack.c.h.b16 %v4033
    %v4128 = vunpack.c.l.b16 %v4034
    %v4129 = vunpack.c.h.b16 %v4034
    %v4130 = vunpack.c.l.b16 %v4035
    %v4131 = vunpack.c.h.b16 %v4035
    %v4132 = vpack.c.b16 %v4070, %v4068
    %v4133 = vpack.c.b16 %v4071, %v4069
    %v4134 = vpack.c.b16 %v4074, %v4072
    %v4135 = vpack.c.b16 %v4075, %v4073
    %v4136 = vpack.c.b16 %v4078, %v4076
    %v4137 = vpack.c.b16 %v4079, %v4077
    %v4138 = vpack.c.b16 %v4082, %v4080
    %v4139 = vpack.c.b16 %v4083, %v4081
    %v4140 = vpack.c.b16 %v4086, %v4084
    %v4141 = vpack.c.b16 %v4087, %v4085
    %v4142 = vpack.c.b16 %v4090, %v4088
    %v4143 = vpack.c.b16 %v4091, %v4089
    %v4144 = vpack.c.b16 %v4094, %v4092
    %v4145 = vpack.c.b16 %v4095, %v4093
    %v4146 = vpack.c.b16 %v4098, %v4096
    %v4147 = vpack.c.b16 %v4099, %v4097
    %v4148 = vpack.c.b16 %v4102, %v4100
    %v4149 = vpack.c.b16 %v4103, %v4101
    %v4150 = vpack.c.b16 %v4106, %v4104
    %v4151 = vpack.c.b16 %v4107, %v4105
    %v4152 = vpack.c.b16 %v4110, %v4108
    %v4153 = vpack.c.b16 %v4111, %v4109
    %v4154 = vpack.c.b16 %v4114, %v4112
    %v4155 = vpack.c.b16 %v4115, %v4113
    %v4156 = vpack.c.b16 %v4118, %v4116
    %v4157 = vpack.c.b16 %v4119, %v4117
    %v4158 = vpack.c.b16 %v4122, %v4120
    %v4159 = vpack.c.b16 %v4123, %v4121
    %v4160 = vpack.c.b16 %v4126, %v4124
    %v4161 = vpack.c.b16 %v4127, %v4125
    %v4162 = vpack.c.b16 %v4130, %v4128
    %v4163 = vpack.c.b16 %v4131, %v4129
    %4196 = vmatprep.subr.bf16.mxu0 %v4133
    %4197 = vmatpush1.bf16.msra.mxu0 %v4132
    %4198 = vmatprep.subr.bf16.mxu0 %v4135
    %4199 = vmatpush1.bf16.msra.mxu0 %v4134
    %4200 = vmatprep.subr.bf16.mxu0 %v4137
    %4201 = vmatpush1.bf16.msra.mxu0 %v4136
    %4202 = vmatprep.subr.bf16.mxu0 %v4139
    %4203 = vmatpush1.bf16.msra.mxu0 %v4138
    %4204 = vmatprep.subr.bf16.mxu0 %v4141
    %4205 = vmatpush1.bf16.msra.mxu0 %v4140
    %4206 = vmatprep.subr.bf16.mxu0 %v4143
    %4207 = vmatpush1.bf16.msra.mxu0 %v4142
    %4208 = vmatprep.subr.bf16.mxu0 %v4145
    %4209 = vmatpush1.bf16.msra.mxu0 %v4144
    %4210 = vmatprep.subr.bf16.mxu0 %v4147
    %4211 = vmatpush1.bf16.msra.mxu0 %v4146
    %4212 = vmatprep.subr.bf16.mxu0 %v4149
    %4213 = vmatpush1.bf16.msra.mxu0 %v4148
    %4214 = vmatprep.subr.bf16.mxu0 %v4151
    %4215 = vmatpush1.bf16.msra.mxu0 %v4150
    %4216 = vmatprep.subr.bf16.mxu0 %v4153
    %4217 = vmatpush1.bf16.msra.mxu0 %v4152
    %4218 = vmatprep.subr.bf16.mxu0 %v4155
    %4219 = vmatpush1.bf16.msra.mxu0 %v4154
    %4220 = vmatprep.subr.bf16.mxu0 %v4157
    %4221 = vmatpush1.bf16.msra.mxu0 %v4156
    %4222 = vmatprep.subr.bf16.mxu0 %v4159
    %4223 = vmatpush1.bf16.msra.mxu0 %v4158
    %4224 = vmatprep.subr.bf16.mxu0 %v4161
    %4225 = vmatpush1.bf16.msra.mxu0 %v4160
    %4226 = vmatprep.subr.bf16.mxu0 %v4163
    %4227 = vmatpush1.bf16.msra.mxu0 %v4162
    %4228 = vmatprep.mubr.bf16.mxu0 %v4002
    %4229 = vmatmul.mubr.bf16.gmra.mrb[0].mxu0 %v4001
    %v4230 = vpop.f32.mrb[0].mxu0
    %v4231 = vadd.f32 0.0, %v4230
    %v4232 = vpop.f32.mrb[0].mxu0
    %v4233 = vadd.f32 0.0, %v4232
    %v4234 = vpop.f32.mrb[0].mxu0
    %v4235 = vpop.f32.mrb[0].mxu0
    %4236 = vdwg.mxu0
    %v4237 = vadd.f32 %v3919, %v4231
    %v4238 = vadd.f32 %v3921, %v4233
    %s4239 = scalar_lea.vmem [#allocation10], 24
    %v4240 = vld [vmem:[%s4239] sm:$0xff]
    %v4242 = vsel %vm1411, %v4240, 0
    %4244 = vmatprep.subr.mxu0 %v3300
    %4245 = vmatpush1.msra.mxu0 %v3299
    %4246 = vmatprep.subr.mxu0 %v3302
    %4247 = vmatpush1.msra.mxu0 %v3301
    %4248 = vmatprep.subr.mxu0 0.0
    %4249 = vmatpush1.msra.mxu0 0.0
    %4250 = vmatprep.subr.mxu0 0.0
    %4251 = vmatpush1.msra.mxu0 0.0
    %4252 = vmatprep.subr.mxu0 0.0
    %4253 = vmatpush1.msra.mxu0 0.0
    %4254 = vmatprep.subr.mxu0 0.0
    %4255 = vmatpush1.msra.mxu0 0.0
    %4256 = vmatprep.subr.mxu0 0.0
    %4257 = vmatpush1.msra.mxu0 0.0
    %4258 = vmatprep.subr.mxu0 0.0
    %4259 = vmatpush1.msra.mxu0 0.0
    %4260 = vmatprep.subr.mxu0 0.0
    %4261 = vmatpush1.msra.mxu0 0.0
    %4262 = vmatprep.subr.mxu0 0.0
    %4263 = vmatpush1.msra.mxu0 0.0
    %4264 = vmatprep.subr.mxu0 0.0
    %4265 = vmatpush1.msra.mxu0 0.0
    %4266 = vmatprep.subr.mxu0 0.0
    %4267 = vmatpush1.msra.mxu0 0.0
    %4268 = vmatprep.subr.mxu0 0.0
    %4269 = vmatpush1.msra.mxu0 0.0
    %4270 = vmatprep.subr.mxu0 0.0
    %4271 = vmatpush1.msra.mxu0 0.0
    %4272 = vmatprep.subr.mxu0 0.0
    %4273 = vmatpush1.msra.mxu0 0.0
    %4274 = vmatprep.subr.mxu0 0.0
    %4275 = vmatpush1.msra.mxu0 0.0
    %4276 = vmatprep.subr.mxu0 0.0
    %4277 = vmatpush1.msra.mxu0 0.0
    %4278 = vmatprep.subr.mxu0 0.0
    %4279 = vmatpush1.msra.mxu0 0.0
    %4280 = vmatprep.subr.mxu0 0.0
    %4281 = vmatpush1.msra.mxu0 0.0
    %4282 = vmatprep.subr.mxu0 0.0
    %4283 = vmatpush1.msra.mxu0 0.0
    %4284 = vmatprep.subr.mxu0 0.0
    %4285 = vmatpush1.msra.mxu0 0.0
    %4286 = vmatprep.subr.mxu0 0.0
    %4287 = vmatpush1.msra.mxu0 0.0
    %4288 = vmatprep.subr.mxu0 0.0
    %4289 = vmatpush1.msra.mxu0 0.0
    %4290 = vmatprep.subr.mxu0 0.0
    %4291 = vmatpush1.msra.mxu0 0.0
    %4292 = vmatprep.subr.mxu0 0.0
    %4293 = vmatpush1.msra.mxu0 0.0
    %4294 = vmatprep.subr.mxu0 0.0
    %4295 = vmatpush1.msra.mxu0 0.0
    %4296 = vmatprep.subr.mxu0 0.0
    %4297 = vmatpush1.msra.mxu0 0.0
    %4298 = vmatprep.subr.mxu0 0.0
    %4299 = vmatpush1.msra.mxu0 0.0
    %4300 = vmatprep.subr.mxu0 0.0
    %4301 = vmatpush1.msra.mxu0 0.0
    %4302 = vmatprep.subr.mxu0 0.0
    %4303 = vmatpush1.msra.mxu0 0.0
    %4304 = vmatprep.subr.mxu0 0.0
    %4305 = vmatpush1.msra.mxu0 0.0
    %4306 = vmatprep.subr.mxu0 0.0
    %4307 = vmatpush1.msra.mxu0 0.0
    %4308 = vmatprep.mubr.f32.mxu0 0.0
    %4309 = vmatmul.mubr.f32.gmra.mrb[0].mxu0 %v4242
    %v4310 = vpop.f32.mrb[0].mxu0
    %v4311 = vadd.f32 0.0, %v4310
    %v4312 = vpop.f32.mrb[0].mxu0
    %v4313 = vadd.f32 0.0, %v4312
    %4314 = vdwg.mxu0
    %v4315 = vpack.c.bf16 %v4311, %v4311
    %v4316 = vpack.c.bf16 %v4313, %v4313
    %s4317 = scalar_lea.vmem %s14, 768
    %v4318 = vld [vmem:[%s4317] sm:$0xff]
    %v4319 = vld [vmem:[%s4317 + $0x8] sm:$0xff]
    %v4320 = vld [vmem:[%s4317 + $0x10] sm:$0xff]
    %v4321 = vld [vmem:[%s4317 + $0x18] sm:$0xff]
    %v4322 = vld [vmem:[%s4317 + $0x20] sm:$0xff]
    %v4323 = vld [vmem:[%s4317 + $0x28] sm:$0xff]
    %v4324 = vld [vmem:[%s4317 + $0x30] sm:$0xff]
    %v4325 = vld [vmem:[%s4317 + $0x38] sm:$0xff]
    %v4326 = vld [vmem:[%s4317 + $0x40] sm:$0xff]
    %v4327 = vld [vmem:[%s4317 + $0x48] sm:$0xff]
    %v4328 = vld [vmem:[%s4317 + $0x50] sm:$0xff]
    %v4329 = vld [vmem:[%s4317 + $0x58] sm:$0xff]
    %v4330 = vld [vmem:[%s4317 + $0x60] sm:$0xff]
    %v4331 = vld [vmem:[%s4317 + $0x68] sm:$0xff]
    %v4332 = vld [vmem:[%s4317 + $0x70] sm:$0xff]
    %v4333 = vld [vmem:[%s4317 + $0x78] sm:$0xff]
    %v4334 = vld [vmem:[%s4317 + $0x80] sm:$0xff]
    %v4335 = vld [vmem:[%s4317 + $0x88] sm:$0xff]
    %v4336 = vld [vmem:[%s4317 + $0x90] sm:$0xff]
    %v4337 = vld [vmem:[%s4317 + $0x98] sm:$0xff]
    %v4338 = vld [vmem:[%s4317 + $0xa0] sm:$0xff]
    %v4339 = vld [vmem:[%s4317 + $0xa8] sm:$0xff]
    %v4340 = vld [vmem:[%s4317 + $0xb0] sm:$0xff]
    %v4341 = vld [vmem:[%s4317 + $0xb8] sm:$0xff]
    %v4342 = vld [vmem:[%s4317 + $0xc0] sm:$0xff]
    %v4343 = vld [vmem:[%s4317 + $0xc8] sm:$0xff]
    %v4344 = vld [vmem:[%s4317 + $0xd0] sm:$0xff]
    %v4345 = vld [vmem:[%s4317 + $0xd8] sm:$0xff]
    %v4346 = vld [vmem:[%s4317 + $0xe0] sm:$0xff]
    %v4347 = vld [vmem:[%s4317 + $0xe8] sm:$0xff]
    %v4348 = vld [vmem:[%s4317 + $0xf0] sm:$0xff]
    %v4349 = vld [vmem:[%s4317 + $0xf8] sm:$0xff]
    %v4382 = vunpack.c.l.b16 %v4318
    %v4383 = vunpack.c.h.b16 %v4318
    %v4384 = vunpack.c.l.b16 %v4319
    %v4385 = vunpack.c.h.b16 %v4319
    %v4386 = vunpack.c.l.b16 %v4320
    %v4387 = vunpack.c.h.b16 %v4320
    %v4388 = vunpack.c.l.b16 %v4321
    %v4389 = vunpack.c.h.b16 %v4321
    %v4390 = vunpack.c.l.b16 %v4322
    %v4391 = vunpack.c.h.b16 %v4322
    %v4392 = vunpack.c.l.b16 %v4323
    %v4393 = vunpack.c.h.b16 %v4323
    %v4394 = vunpack.c.l.b16 %v4324
    %v4395 = vunpack.c.h.b16 %v4324
    %v4396 = vunpack.c.l.b16 %v4325
    %v4397 = vunpack.c.h.b16 %v4325
    %v4398 = vunpack.c.l.b16 %v4326
    %v4399 = vunpack.c.h.b16 %v4326
    %v4400 = vunpack.c.l.b16 %v4327
    %v4401 = vunpack.c.h.b16 %v4327
    %v4402 = vunpack.c.l.b16 %v4328
    %v4403 = vunpack.c.h.b16 %v4328
    %v4404 = vunpack.c.l.b16 %v4329
    %v4405 = vunpack.c.h.b16 %v4329
    %v4406 = vunpack.c.l.b16 %v4330
    %v4407 = vunpack.c.h.b16 %v4330
    %v4408 = vunpack.c.l.b16 %v4331
    %v4409 = vunpack.c.h.b16 %v4331
    %v4410 = vunpack.c.l.b16 %v4332
    %v4411 = vunpack.c.h.b16 %v4332
    %v4412 = vunpack.c.l.b16 %v4333
    %v4413 = vunpack.c.h.b16 %v4333
    %v4414 = vunpack.c.l.b16 %v4334
    %v4415 = vunpack.c.h.b16 %v4334
    %v4416 = vunpack.c.l.b16 %v4335
    %v4417 = vunpack.c.h.b16 %v4335
    %v4418 = vunpack.c.l.b16 %v4336
    %v4419 = vunpack.c.h.b16 %v4336
    %v4420 = vunpack.c.l.b16 %v4337
    %v4421 = vunpack.c.h.b16 %v4337
    %v4422 = vunpack.c.l.b16 %v4338
    %v4423 = vunpack.c.h.b16 %v4338
    %v4424 = vunpack.c.l.b16 %v4339
    %v4425 = vunpack.c.h.b16 %v4339
    %v4426 = vunpack.c.l.b16 %v4340
    %v4427 = vunpack.c.h.b16 %v4340
    %v4428 = vunpack.c.l.b16 %v4341
    %v4429 = vunpack.c.h.b16 %v4341
    %v4430 = vunpack.c.l.b16 %v4342
    %v4431 = vunpack.c.h.b16 %v4342
    %v4432 = vunpack.c.l.b16 %v4343
    %v4433 = vunpack.c.h.b16 %v4343
    %v4434 = vunpack.c.l.b16 %v4344
    %v4435 = vunpack.c.h.b16 %v4344
    %v4436 = vunpack.c.l.b16 %v4345
    %v4437 = vunpack.c.h.b16 %v4345
    %v4438 = vunpack.c.l.b16 %v4346
    %v4439 = vunpack.c.h.b16 %v4346
    %v4440 = vunpack.c.l.b16 %v4347
    %v4441 = vunpack.c.h.b16 %v4347
    %v4442 = vunpack.c.l.b16 %v4348
    %v4443 = vunpack.c.h.b16 %v4348
    %v4444 = vunpack.c.l.b16 %v4349
    %v4445 = vunpack.c.h.b16 %v4349
    %v4446 = vpack.c.b16 %v4384, %v4382
    %v4447 = vpack.c.b16 %v4385, %v4383
    %v4448 = vpack.c.b16 %v4388, %v4386
    %v4449 = vpack.c.b16 %v4389, %v4387
    %v4450 = vpack.c.b16 %v4392, %v4390
    %v4451 = vpack.c.b16 %v4393, %v4391
    %v4452 = vpack.c.b16 %v4396, %v4394
    %v4453 = vpack.c.b16 %v4397, %v4395
    %v4454 = vpack.c.b16 %v4400, %v4398
    %v4455 = vpack.c.b16 %v4401, %v4399
    %v4456 = vpack.c.b16 %v4404, %v4402
    %v4457 = vpack.c.b16 %v4405, %v4403
    %v4458 = vpack.c.b16 %v4408, %v4406
    %v4459 = vpack.c.b16 %v4409, %v4407
    %v4460 = vpack.c.b16 %v4412, %v4410
    %v4461 = vpack.c.b16 %v4413, %v4411
    %v4462 = vpack.c.b16 %v4416, %v4414
    %v4463 = vpack.c.b16 %v4417, %v4415
    %v4464 = vpack.c.b16 %v4420, %v4418
    %v4465 = vpack.c.b16 %v4421, %v4419
    %v4466 = vpack.c.b16 %v4424, %v4422
    %v4467 = vpack.c.b16 %v4425, %v4423
    %v4468 = vpack.c.b16 %v4428, %v4426
    %v4469 = vpack.c.b16 %v4429, %v4427
    %v4470 = vpack.c.b16 %v4432, %v4430
    %v4471 = vpack.c.b16 %v4433, %v4431
    %v4472 = vpack.c.b16 %v4436, %v4434
    %v4473 = vpack.c.b16 %v4437, %v4435
    %v4474 = vpack.c.b16 %v4440, %v4438
    %v4475 = vpack.c.b16 %v4441, %v4439
    %v4476 = vpack.c.b16 %v4444, %v4442
    %v4477 = vpack.c.b16 %v4445, %v4443
    %4510 = vmatprep.subr.bf16.mxu0 %v4447
    %4511 = vmatpush1.bf16.msra.mxu0 %v4446
    %4512 = vmatprep.subr.bf16.mxu0 %v4449
    %4513 = vmatpush1.bf16.msra.mxu0 %v4448
    %4514 = vmatprep.subr.bf16.mxu0 %v4451
    %4515 = vmatpush1.bf16.msra.mxu0 %v4450
    %4516 = vmatprep.subr.bf16.mxu0 %v4453
    %4517 = vmatpush1.bf16.msra.mxu0 %v4452
    %4518 = vmatprep.subr.bf16.mxu0 %v4455
    %4519 = vmatpush1.bf16.msra.mxu0 %v4454
    %4520 = vmatprep.subr.bf16.mxu0 %v4457
    %4521 = vmatpush1.bf16.msra.mxu0 %v4456
    %4522 = vmatprep.subr.bf16.mxu0 %v4459
    %4523 = vmatpush1.bf16.msra.mxu0 %v4458
    %4524 = vmatprep.subr.bf16.mxu0 %v4461
    %4525 = vmatpush1.bf16.msra.mxu0 %v4460
    %4526 = vmatprep.subr.bf16.mxu0 %v4463
    %4527 = vmatpush1.bf16.msra.mxu0 %v4462
    %4528 = vmatprep.subr.bf16.mxu0 %v4465
    %4529 = vmatpush1.bf16.msra.mxu0 %v4464
    %4530 = vmatprep.subr.bf16.mxu0 %v4467
    %4531 = vmatpush1.bf16.msra.mxu0 %v4466
    %4532 = vmatprep.subr.bf16.mxu0 %v4469
    %4533 = vmatpush1.bf16.msra.mxu0 %v4468
    %4534 = vmatprep.subr.bf16.mxu0 %v4471
    %4535 = vmatpush1.bf16.msra.mxu0 %v4470
    %4536 = vmatprep.subr.bf16.mxu0 %v4473
    %4537 = vmatpush1.bf16.msra.mxu0 %v4472
    %4538 = vmatprep.subr.bf16.mxu0 %v4475
    %4539 = vmatpush1.bf16.msra.mxu0 %v4474
    %4540 = vmatprep.subr.bf16.mxu0 %v4477
    %4541 = vmatpush1.bf16.msra.mxu0 %v4476
    %4542 = vmatprep.mubr.bf16.mxu0 %v4316
    %4543 = vmatmul.mubr.bf16.gmra.mrb[0].mxu0 %v4315
    %v4544 = vpop.f32.mrb[0].mxu0
    %v4545 = vadd.f32 0.0, %v4544
    %v4546 = vpop.f32.mrb[0].mxu0
    %v4547 = vadd.f32 0.0, %v4546
    %v4548 = vpop.f32.mrb[0].mxu0
    %v4549 = vpop.f32.mrb[0].mxu0
    %4550 = vdwg.mxu0
    %v4551 = vadd.f32 %v4237, %v4545
    %v4552 = vadd.f32 %v4238, %v4547
    %v4553 = vrot.slane %v4551, 4
    %v4554 = vadd.f32 %v4551, %v4553
    %v4555 = vrot.slane %v4554, 2
    %v4556 = vadd.f32 %v4554, %v4555
    %v4557 = vrot.slane %v4556, 1
    %v4558 = vadd.f32 %v4556, %v4557
    %v4559 = vrot.slane %v4552, 4
    %v4560 = vadd.f32 %v4552, %v4559
    %v4561 = vrot.slane %v4560, 2
    %v4562 = vadd.f32 %v4560, %v4561
    %v4563 = vrot.slane %v4562, 1
    %v4564 = vadd.f32 %v4562, %v4563
    %v4565 = vmul.f32 %v4551, %v4551
    %v4566 = vmul.f32 %v4552, %v4552
    %v4567 = vrot.slane %v4565, 4
    %v4568 = vadd.f32 %v4565, %v4567
    %v4569 = vrot.slane %v4568, 2
    %v4570 = vadd.f32 %v4568, %v4569
    %v4571 = vrot.slane %v4570, 1
    %v4572 = vadd.f32 %v4570, %v4571
    %v4573 = vrot.slane %v4566, 4
    %v4574 = vadd.f32 %v4566, %v4573
    %v4575 = vrot.slane %v4574, 2
    %v4576 = vadd.f32 %v4574, %v4575
    %v4577 = vrot.slane %v4576, 1
    %v4578 = vadd.f32 %v4576, %v4577
    %v4579 = vld [vmem:[%s17] sm:$0xff]
    %v4580 = vld [vmem:[%s17 + $0x8] sm:$0xff]
    %v4581 = vld [vmem:[%s17 + $0x10] sm:$0xff]
    %v4582 = vld [vmem:[%s17 + $0x18] sm:$0xff]
    %v4583 = vld [vmem:[%s17 + $0x20] sm:$0xff]
    %v4584 = vld [vmem:[%s17 + $0x28] sm:$0xff]
    %v4585 = vld [vmem:[%s17 + $0x30] sm:$0xff]
    %v4586 = vld [vmem:[%s17 + $0x38] sm:$0xff]
    %v4587 = vld [vmem:[%s17 + $0x40] sm:$0xff]
    %v4588 = vld [vmem:[%s17 + $0x48] sm:$0xff]
    %v4589 = vld [vmem:[%s17 + $0x50] sm:$0xff]
    %v4590 = vld [vmem:[%s17 + $0x58] sm:$0xff]
    %v4591 = vld [vmem:[%s17 + $0x60] sm:$0xff]
    %v4592 = vld [vmem:[%s17 + $0x68] sm:$0xff]
    %v4593 = vld [vmem:[%s17 + $0x70] sm:$0xff]
    %v4594 = vld [vmem:[%s17 + $0x78] sm:$0xff]
    %v4595 = vld [vmem:[%s17 + $0x80] sm:$0xff]
    %v4596 = vld [vmem:[%s17 + $0x88] sm:$0xff]
    %v4597 = vld [vmem:[%s17 + $0x90] sm:$0xff]
    %v4598 = vld [vmem:[%s17 + $0x98] sm:$0xff]
    %v4599 = vld [vmem:[%s17 + $0xa0] sm:$0xff]
    %v4600 = vld [vmem:[%s17 + $0xa8] sm:$0xff]
    %v4601 = vld [vmem:[%s17 + $0xb0] sm:$0xff]
    %v4602 = vld [vmem:[%s17 + $0xb8] sm:$0xff]
    %v4603 = vld [vmem:[%s17 + $0xc0] sm:$0xff]
    %v4604 = vld [vmem:[%s17 + $0xc8] sm:$0xff]
    %v4605 = vld [vmem:[%s17 + $0xd0] sm:$0xff]
    %v4606 = vld [vmem:[%s17 + $0xd8] sm:$0xff]
    %v4607 = vld [vmem:[%s17 + $0xe0] sm:$0xff]
    %v4608 = vld [vmem:[%s17 + $0xe8] sm:$0xff]
    %v4609 = vld [vmem:[%s17 + $0xf0] sm:$0xff]
    %v4610 = vld [vmem:[%s17 + $0xf8] sm:$0xff]
    %4611 = vmatprep.subr.mxu0 0.0
    %4612 = vmatpush1.msra.mxu0 %v4579
    %4613 = vmatprep.subr.mxu0 0.0
    %4614 = vmatpush1.msra.mxu0 %v4580
    %4615 = vmatprep.subr.mxu0 0.0
    %4616 = vmatpush1.msra.mxu0 %v4581
    %4617 = vmatprep.subr.mxu0 0.0
    %4618 = vmatpush1.msra.mxu0 %v4582
    %4619 = vmatprep.subr.mxu0 0.0
    %4620 = vmatpush1.msra.mxu0 %v4583
    %4621 = vmatprep.subr.mxu0 0.0
    %4622 = vmatpush1.msra.mxu0 %v4584
    %4623 = vmatprep.subr.mxu0 0.0
    %4624 = vmatpush1.msra.mxu0 %v4585
    %4625 = vmatprep.subr.mxu0 0.0
    %4626 = vmatpush1.msra.mxu0 %v4586
    %4627 = vmatprep.subr.mxu0 0.0
    %4628 = vmatpush1.msra.mxu0 %v4587
    %4629 = vmatprep.subr.mxu0 0.0
    %4630 = vmatpush1.msra.mxu0 %v4588
    %4631 = vmatprep.subr.mxu0 0.0
    %4632 = vmatpush1.msra.mxu0 %v4589
    %4633 = vmatprep.subr.mxu0 0.0
    %4634 = vmatpush1.msra.mxu0 %v4590
    %4635 = vmatprep.subr.mxu0 0.0
    %4636 = vmatpush1.msra.mxu0 %v4591
    %4637 = vmatprep.subr.mxu0 0.0
    %4638 = vmatpush1.msra.mxu0 %v4592
    %4639 = vmatprep.subr.mxu0 0.0
    %4640 = vmatpush1.msra.mxu0 %v4593
    %4641 = vmatprep.subr.mxu0 0.0
    %4642 = vmatpush1.msra.mxu0 %v4594
    %4643 = vmatprep.subr.mxu0 0.0
    %4644 = vmatpush1.msra.mxu0 %v4595
    %4645 = vmatprep.subr.mxu0 0.0
    %4646 = vmatpush1.msra.mxu0 %v4596
    %4647 = vmatprep.subr.mxu0 0.0
    %4648 = vmatpush1.msra.mxu0 %v4597
    %4649 = vmatprep.subr.mxu0 0.0
    %4650 = vmatpush1.msra.mxu0 %v4598
    %4651 = vmatprep.subr.mxu0 0.0
    %4652 = vmatpush1.msra.mxu0 %v4599
    %4653 = vmatprep.subr.mxu0 0.0
    %4654 = vmatpush1.msra.mxu0 %v4600
    %4655 = vmatprep.subr.mxu0 0.0
    %4656 = vmatpush1.msra.mxu0 %v4601
    %4657 = vmatprep.subr.mxu0 0.0
    %4658 = vmatpush1.msra.mxu0 %v4602
    %4659 = vmatprep.subr.mxu0 0.0
    %4660 = vmatpush1.msra.mxu0 %v4603
    %4661 = vmatprep.subr.mxu0 0.0
    %4662 = vmatpush1.msra.mxu0 %v4604
    %4663 = vmatprep.subr.mxu0 0.0
    %4664 = vmatpush1.msra.mxu0 %v4605
    %4665 = vmatprep.subr.mxu0 0.0
    %4666 = vmatpush1.msra.mxu0 %v4606
    %4667 = vmatprep.subr.mxu0 0.0
    %4668 = vmatpush1.msra.mxu0 %v4607
    %4669 = vmatprep.subr.mxu0 0.0
    %4670 = vmatpush1.msra.mxu0 %v4608
    %4671 = vmatprep.subr.mxu0 0.0
    %4672 = vmatpush1.msra.mxu0 %v4609
    %4673 = vmatprep.subr.mxu0 0.0
    %4674 = vmatpush1.msra.mxu0 %v4610
    %4675 = vmatprep.mubr.f32.mxu0 %v4564
    %4676 = vmatmul.mubr.f32.gmra.mrb[0].mxu0 %v4558
    %v4677 = vpop.f32.mrb[0].mxu0
    %v4678 = vadd.f32 0.0, %v4677
    %v4679 = vpop.f32.mrb[0].mxu0
    %4680 = vdwg.mxu0
    %v4681 = vmul.f32 %v4678, 0.03125
    %4682 = vmatprep.subr.mxu0 0.0
    %4683 = vmatpush1.msra.mxu0 %v4579
    %4684 = vmatprep.subr.mxu0 0.0
    %4685 = vmatpush1.msra.mxu0 %v4580
    %4686 = vmatprep.subr.mxu0 0.0
    %4687 = vmatpush1.msra.mxu0 %v4581
    %4688 = vmatprep.subr.mxu0 0.0
    %4689 = vmatpush1.msra.mxu0 %v4582
    %4690 = vmatprep.subr.mxu0 0.0
    %4691 = vmatpush1.msra.mxu0 %v4583
    %4692 = vmatprep.subr.mxu0 0.0
    %4693 = vmatpush1.msra.mxu0 %v4584
    %4694 = vmatprep.subr.mxu0 0.0
    %4695 = vmatpush1.msra.mxu0 %v4585
    %4696 = vmatprep.subr.mxu0 0.0
    %4697 = vmatpush1.msra.mxu0 %v4586
    %4698 = vmatprep.subr.mxu0 0.0
    %4699 = vmatpush1.msra.mxu0 %v4587
    %4700 = vmatprep.subr.mxu0 0.0
    %4701 = vmatpush1.msra.mxu0 %v4588
    %4702 = vmatprep.subr.mxu0 0.0
    %4703 = vmatpush1.msra.mxu0 %v4589
    %4704 = vmatprep.subr.mxu0 0.0
    %4705 = vmatpush1.msra.mxu0 %v4590
    %4706 = vmatprep.subr.mxu0 0.0
    %4707 = vmatpush1.msra.mxu0 %v4591
    %4708 = vmatprep.subr.mxu0 0.0
    %4709 = vmatpush1.msra.mxu0 %v4592
    %4710 = vmatprep.subr.mxu0 0.0
    %4711 = vmatpush1.msra.mxu0 %v4593
    %4712 = vmatprep.subr.mxu0 0.0
    %4713 = vmatpush1.msra.mxu0 %v4594
    %4714 = vmatprep.subr.mxu0 0.0
    %4715 = vmatpush1.msra.mxu0 %v4595
    %4716 = vmatprep.subr.mxu0 0.0
    %4717 = vmatpush1.msra.mxu0 %v4596
    %4718 = vmatprep.subr.mxu0 0.0
    %4719 = vmatpush1.msra.mxu0 %v4597
    %4720 = vmatprep.subr.mxu0 0.0
    %4721 = vmatpush1.msra.mxu0 %v4598
    %4722 = vmatprep.subr.mxu0 0.0
    %4723 = vmatpush1.msra.mxu0 %v4599
    %4724 = vmatprep.subr.mxu0 0.0
    %4725 = vmatpush1.msra.mxu0 %v4600
    %4726 = vmatprep.subr.mxu0 0.0
    %4727 = vmatpush1.msra.mxu0 %v4601
    %4728 = vmatprep.subr.mxu0 0.0
    %4729 = vmatpush1.msra.mxu0 %v4602
    %4730 = vmatprep.subr.mxu0 0.0
    %4731 = vmatpush1.msra.mxu0 %v4603
    %4732 = vmatprep.subr.mxu0 0.0
    %4733 = vmatpush1.msra.mxu0 %v4604
    %4734 = vmatprep.subr.mxu0 0.0
    %4735 = vmatpush1.msra.mxu0 %v4605
    %4736 = vmatprep.subr.mxu0 0.0
    %4737 = vmatpush1.msra.mxu0 %v4606
    %4738 = vmatprep.subr.mxu0 0.0
    %4739 = vmatpush1.msra.mxu0 %v4607
    %4740 = vmatprep.subr.mxu0 0.0
    %4741 = vmatpush1.msra.mxu0 %v4608
    %4742 = vmatprep.subr.mxu0 0.0
    %4743 = vmatpush1.msra.mxu0 %v4609
    %4744 = vmatprep.subr.mxu0 0.0
    %4745 = vmatpush1.msra.mxu0 %v4610
    %4746 = vmatprep.mubr.f32.mxu0 %v4578
    %4747 = vmatmul.mubr.f32.gmra.mrb[0].mxu0 %v4572
    %v4748 = vpop.f32.mrb[0].mxu0
    %v4749 = vadd.f32 0.0, %v4748
    %v4750 = vpop.f32.mrb[0].mxu0
    %4751 = vdwg.mxu0
    %v4752 = vmul.f32 %v4749, 0.03125
    %v4753 = vmul.f32 %v4681, %v4681
    %v4754 = vsub.f32 %v4752, %v4753
    %v4755 = vmax.f32 %v4754, 0.0
    %v4756 = vadd.f32 %v4755, 1e-05
    %v4757 = vrsqrt.pop %v4756
    %v4758 = vld [vmem:[%s15] sm:$0x1]
    %v4759 = vmul.f32 %v4758, %v4757
    %v4760 = vld [vmem:[%s16] sm:$0x1]
    %v4761 = vmul.f32 %v4681, %v4759
    %v4762 = vsub.f32 %v4760, %v4761
    %v4763 = vld [vmem:[%s18] sm:$0xff]
    %v4764 = vld [vmem:[%s18 + $0x8] sm:$0xff]
    %v4765 = vld [vmem:[%s18 + $0x10] sm:$0xff]
    %v4766 = vld [vmem:[%s18 + $0x18] sm:$0xff]
    %v4767 = vld [vmem:[%s18 + $0x20] sm:$0xff]
    %v4768 = vld [vmem:[%s18 + $0x28] sm:$0xff]
    %v4769 = vld [vmem:[%s18 + $0x30] sm:$0xff]
    %v4770 = vld [vmem:[%s18 + $0x38] sm:$0xff]
    %v4771 = vld [vmem:[%s18 + $0x40] sm:$0xff]
    %v4772 = vld [vmem:[%s18 + $0x48] sm:$0xff]
    %v4773 = vld [vmem:[%s18 + $0x50] sm:$0xff]
    %v4774 = vld [vmem:[%s18 + $0x58] sm:$0xff]
    %v4775 = vld [vmem:[%s18 + $0x60] sm:$0xff]
    %v4776 = vld [vmem:[%s18 + $0x68] sm:$0xff]
    %v4777 = vld [vmem:[%s18 + $0x70] sm:$0xff]
    %v4778 = vld [vmem:[%s18 + $0x78] sm:$0xff]
    %v4780 = vsel %vm152, %v4759, 0
    %4782 = vmatprep.subr.mxu0 %v4764
    %4783 = vmatpush1.msra.mxu0 %v4763
    %4784 = vmatprep.subr.mxu0 %v4766
    %4785 = vmatpush1.msra.mxu0 %v4765
    %4786 = vmatprep.subr.mxu0 %v4768
    %4787 = vmatpush1.msra.mxu0 %v4767
    %4788 = vmatprep.subr.mxu0 %v4770
    %4789 = vmatpush1.msra.mxu0 %v4769
    %4790 = vmatprep.subr.mxu0 %v4772
    %4791 = vmatpush1.msra.mxu0 %v4771
    %4792 = vmatprep.subr.mxu0 %v4774
    %4793 = vmatpush1.msra.mxu0 %v4773
    %4794 = vmatprep.subr.mxu0 %v4776
    %4795 = vmatpush1.msra.mxu0 %v4775
    %4796 = vmatprep.subr.mxu0 %v4778
    %4797 = vmatpush1.msra.mxu0 %v4777
    %4798 = vmatprep.subr.mxu0 0.0
    %4799 = vmatpush1.msra.mxu0 0.0
    %4800 = vmatprep.subr.mxu0 0.0
    %4801 = vmatpush1.msra.mxu0 0.0
    %4802 = vmatprep.subr.mxu0 0.0
    %4803 = vmatpush1.msra.mxu0 0.0
    %4804 = vmatprep.subr.mxu0 0.0
    %4805 = vmatpush1.msra.mxu0 0.0
    %4806 = vmatprep.subr.mxu0 0.0
    %4807 = vmatpush1.msra.mxu0 0.0
    %4808 = vmatprep.subr.mxu0 0.0
    %4809 = vmatpush1.msra.mxu0 0.0
    %4810 = vmatprep.subr.mxu0 0.0
    %4811 = vmatpush1.msra.mxu0 0.0
    %4812 = vmatprep.subr.mxu0 0.0
    %4813 = vmatpush1.msra.mxu0 0.0
    %4814 = vmatprep.subr.mxu0 0.0
    %4815 = vmatpush1.msra.mxu0 0.0
    %4816 = vmatprep.subr.mxu0 0.0
    %4817 = vmatpush1.msra.mxu0 0.0
    %4818 = vmatprep.subr.mxu0 0.0
    %4819 = vmatpush1.msra.mxu0 0.0
    %4820 = vmatprep.subr.mxu0 0.0
    %4821 = vmatpush1.msra.mxu0 0.0
    %4822 = vmatprep.subr.mxu0 0.0
    %4823 = vmatpush1.msra.mxu0 0.0
    %4824 = vmatprep.subr.mxu0 0.0
    %4825 = vmatpush1.msra.mxu0 0.0
    %4826 = vmatprep.subr.mxu0 0.0
    %4827 = vmatpush1.msra.mxu0 0.0
    %4828 = vmatprep.subr.mxu0 0.0
    %4829 = vmatpush1.msra.mxu0 0.0
    %4830 = vmatprep.subr.mxu0 0.0
    %4831 = vmatpush1.msra.mxu0 0.0
    %4832 = vmatprep.subr.mxu0 0.0
    %4833 = vmatpush1.msra.mxu0 0.0
    %4834 = vmatprep.subr.mxu0 0.0
    %4835 = vmatpush1.msra.mxu0 0.0
    %4836 = vmatprep.subr.mxu0 0.0
    %4837 = vmatpush1.msra.mxu0 0.0
    %4838 = vmatprep.subr.mxu0 0.0
    %4839 = vmatpush1.msra.mxu0 0.0
    %4840 = vmatprep.subr.mxu0 0.0
    %4841 = vmatpush1.msra.mxu0 0.0
    %4842 = vmatprep.subr.mxu0 0.0
    %4843 = vmatpush1.msra.mxu0 0.0
    %4844 = vmatprep.subr.mxu0 0.0
    %4845 = vmatpush1.msra.mxu0 0.0
    %4846 = vmatprep.mubr.f32.mxu0 0.0
    %4847 = vmatmul.mubr.f32.gmra.mrb[0].mxu0 %v4780
    %v4848 = vpop.f32.mrb[0].mxu0
    %v4849 = vadd.f32 0.0, %v4848
    %v4850 = vpop.f32.mrb[0].mxu0
    %v4851 = vadd.f32 0.0, %v4850
    %4852 = vdwg.mxu0
    %v4854 = vsel %vm152, %v4762, 0
    %4856 = vmatprep.subr.mxu0 %v4764
    %4857 = vmatpush1.msra.mxu0 %v4763
    %4858 = vmatprep.subr.mxu0 %v4766
    %4859 = vmatpush1.msra.mxu0 %v4765
    %4860 = vmatprep.subr.mxu0 %v4768
    %4861 = vmatpush1.msra.mxu0 %v4767
    %4862 = vmatprep.subr.mxu0 %v4770
    %4863 = vmatpush1.msra.mxu0 %v4769
    %4864 = vmatprep.subr.mxu0 %v4772
    %4865 = vmatpush1.msra.mxu0 %v4771
    %4866 = vmatprep.subr.mxu0 %v4774
    %4867 = vmatpush1.msra.mxu0 %v4773
    %4868 = vmatprep.subr.mxu0 %v4776
    %4869 = vmatpush1.msra.mxu0 %v4775
    %4870 = vmatprep.subr.mxu0 %v4778
    %4871 = vmatpush1.msra.mxu0 %v4777
    %4872 = vmatprep.subr.mxu0 0.0
    %4873 = vmatpush1.msra.mxu0 0.0
    %4874 = vmatprep.subr.mxu0 0.0
    %4875 = vmatpush1.msra.mxu0 0.0
    %4876 = vmatprep.subr.mxu0 0.0
    %4877 = vmatpush1.msra.mxu0 0.0
    %4878 = vmatprep.subr.mxu0 0.0
    %4879 = vmatpush1.msra.mxu0 0.0
    %4880 = vmatprep.subr.mxu0 0.0
    %4881 = vmatpush1.msra.mxu0 0.0
    %4882 = vmatprep.subr.mxu0 0.0
    %4883 = vmatpush1.msra.mxu0 0.0
    %4884 = vmatprep.subr.mxu0 0.0
    %4885 = vmatpush1.msra.mxu0 0.0
    %4886 = vmatprep.subr.mxu0 0.0
    %4887 = vmatpush1.msra.mxu0 0.0
    %4888 = vmatprep.subr.mxu0 0.0
    %4889 = vmatpush1.msra.mxu0 0.0
    %4890 = vmatprep.subr.mxu0 0.0
    %4891 = vmatpush1.msra.mxu0 0.0
    %4892 = vmatprep.subr.mxu0 0.0
    %4893 = vmatpush1.msra.mxu0 0.0
    %4894 = vmatprep.subr.mxu0 0.0
    %4895 = vmatpush1.msra.mxu0 0.0
    %4896 = vmatprep.subr.mxu0 0.0
    %4897 = vmatpush1.msra.mxu0 0.0
    %4898 = vmatprep.subr.mxu0 0.0
    %4899 = vmatpush1.msra.mxu0 0.0
    %4900 = vmatprep.subr.mxu0 0.0
    %4901 = vmatpush1.msra.mxu0 0.0
    %4902 = vmatprep.subr.mxu0 0.0
    %4903 = vmatpush1.msra.mxu0 0.0
    %4904 = vmatprep.subr.mxu0 0.0
    %4905 = vmatpush1.msra.mxu0 0.0
    %4906 = vmatprep.subr.mxu0 0.0
    %4907 = vmatpush1.msra.mxu0 0.0
    %4908 = vmatprep.subr.mxu0 0.0
    %4909 = vmatpush1.msra.mxu0 0.0
    %4910 = vmatprep.subr.mxu0 0.0
    %4911 = vmatpush1.msra.mxu0 0.0
    %4912 = vmatprep.subr.mxu0 0.0
    %4913 = vmatpush1.msra.mxu0 0.0
    %4914 = vmatprep.subr.mxu0 0.0
    %4915 = vmatpush1.msra.mxu0 0.0
    %4916 = vmatprep.subr.mxu0 0.0
    %4917 = vmatpush1.msra.mxu0 0.0
    %4918 = vmatprep.subr.mxu0 0.0
    %4919 = vmatpush1.msra.mxu0 0.0
    %4920 = vmatprep.mubr.f32.mxu0 0.0
    %4921 = vmatmul.mubr.f32.gmra.mrb[0].mxu0 %v4854
    %v4922 = vpop.f32.mrb[0].mxu0
    %v4923 = vadd.f32 0.0, %v4922
    %v4924 = vpop.f32.mrb[0].mxu0
    %v4925 = vadd.f32 0.0, %v4924
    %4926 = vdwg.mxu0
    %v4927 = vlaneseq
    %v4928 = vshrl.u32 %v4927, 7
    %v4929 = vsub.s32 0, %v4928
    %v4930 = vrot.slane %v4849, %v4929
    %v4931 = vlaneseq
    %v4932 = vshrl.u32 %v4931, 7
    %v4933 = vsub.s32 0, %v4932
    %v4934 = vrot.slane %v4851, %v4933
    %v4935 = vmul.f32 %v4551, %v4930
    %v4936 = vmul.f32 %v4552, %v4934
    %v4937 = vlaneseq
    %v4938 = vshrl.u32 %v4937, 7
    %v4939 = vsub.s32 0, %v4938
    %v4940 = vrot.slane %v4923, %v4939
    %v4941 = vlaneseq
    %v4942 = vshrl.u32 %v4941, 7
    %v4943 = vsub.s32 0, %v4942
    %v4944 = vrot.slane %v4925, %v4943
    %v4945 = vadd.f32 %v4935, %v4940
    %v4946 = vadd.f32 %v4936, %v4944
    %v4947 = vmax.f32 %v4945, 0.0
    %v4948 = vmax.f32 %v4946, 0.0
    %v4949 = vld [vmem:[%s19] sm:$0x3]
    %vm4950 = vcmask 64512
    %v4952 = vsel %vm4950, %v4949, 0
    %4954 = vmatprep.subr.mxu0 %v4948
    %4955 = vmatpush1.msra.mxu0 %v4947
    %4956 = vmatprep.subr.mxu0 0.0
    %4957 = vmatpush1.msra.mxu0 0.0
    %4958 = vmatprep.subr.mxu0 0.0
    %4959 = vmatpush1.msra.mxu0 0.0
    %4960 = vmatprep.subr.mxu0 0.0
    %4961 = vmatpush1.msra.mxu0 0.0
    %4962 = vmatprep.subr.mxu0 0.0
    %4963 = vmatpush1.msra.mxu0 0.0
    %4964 = vmatprep.subr.mxu0 0.0
    %4965 = vmatpush1.msra.mxu0 0.0
    %4966 = vmatprep.subr.mxu0 0.0
    %4967 = vmatpush1.msra.mxu0 0.0
    %4968 = vmatprep.subr.mxu0 0.0
    %4969 = vmatpush1.msra.mxu0 0.0
    %4970 = vmatprep.subr.mxu0 0.0
    %4971 = vmatpush1.msra.mxu0 0.0
    %4972 = vmatprep.subr.mxu0 0.0
    %4973 = vmatpush1.msra.mxu0 0.0
    %4974 = vmatprep.subr.mxu0 0.0
    %4975 = vmatpush1.msra.mxu0 0.0
    %4976 = vmatprep.subr.mxu0 0.0
    %4977 = vmatpush1.msra.mxu0 0.0
    %4978 = vmatprep.subr.mxu0 0.0
    %4979 = vmatpush1.msra.mxu0 0.0
    %4980 = vmatprep.subr.mxu0 0.0
    %4981 = vmatpush1.msra.mxu0 0.0
    %4982 = vmatprep.subr.mxu0 0.0
    %4983 = vmatpush1.msra.mxu0 0.0
    %4984 = vmatprep.subr.mxu0 0.0
    %4985 = vmatpush1.msra.mxu0 0.0
    %4986 = vmatprep.subr.mxu0 0.0
    %4987 = vmatpush1.msra.mxu0 0.0
    %4988 = vmatprep.subr.mxu0 0.0
    %4989 = vmatpush1.msra.mxu0 0.0
    %4990 = vmatprep.subr.mxu0 0.0
    %4991 = vmatpush1.msra.mxu0 0.0
    %4992 = vmatprep.subr.mxu0 0.0
    %4993 = vmatpush1.msra.mxu0 0.0
    %4994 = vmatprep.subr.mxu0 0.0
    %4995 = vmatpush1.msra.mxu0 0.0
    %4996 = vmatprep.subr.mxu0 0.0
    %4997 = vmatpush1.msra.mxu0 0.0
    %4998 = vmatprep.subr.mxu0 0.0
    %4999 = vmatpush1.msra.mxu0 0.0
    %5000 = vmatprep.subr.mxu0 0.0
    %5001 = vmatpush1.msra.mxu0 0.0
    %5002 = vmatprep.subr.mxu0 0.0
    %5003 = vmatpush1.msra.mxu0 0.0
    %5004 = vmatprep.subr.mxu0 0.0
    %5005 = vmatpush1.msra.mxu0 0.0
    %5006 = vmatprep.subr.mxu0 0.0
    %5007 = vmatpush1.msra.mxu0 0.0
    %5008 = vmatprep.subr.mxu0 0.0
    %5009 = vmatpush1.msra.mxu0 0.0
    %5010 = vmatprep.subr.mxu0 0.0
    %5011 = vmatpush1.msra.mxu0 0.0
    %5012 = vmatprep.subr.mxu0 0.0
    %5013 = vmatpush1.msra.mxu0 0.0
    %5014 = vmatprep.subr.mxu0 0.0
    %5015 = vmatpush1.msra.mxu0 0.0
    %5016 = vmatprep.subr.mxu0 0.0
    %5017 = vmatpush1.msra.mxu0 0.0
    %5018 = vmatprep.mubr.f32.mxu0 0.0
    %5019 = vmatmul.mubr.f32.gmra.mrb[0].mxu0 %v4952
    %v5020 = vpop.f32.mrb[0].mxu0
    %v5021 = vadd.f32 0.0, %v5020
    %v5022 = vpop.f32.mrb[0].mxu0
    %v5023 = vadd.f32 0.0, %v5022
    %5024 = vdwg.mxu0
    %v5025 = vpack.c.bf16 %v5021, %v5021
    %v5026 = vpack.c.bf16 %v5023, %v5023
    %v5027 = vld [vmem:[%s20] sm:$0xf]
    %v5028 = vld [vmem:[%s20 + $0x4] sm:$0xf]
    %v5029 = vld [vmem:[%s20 + $0x8] sm:$0xf]
    %v5030 = vld [vmem:[%s20 + $0xc] sm:$0xf]
    %v5031 = vld [vmem:[%s20 + $0x10] sm:$0xf]
    %v5032 = vld [vmem:[%s20 + $0x14] sm:$0xf]
    %v5033 = vld [vmem:[%s20 + $0x18] sm:$0xf]
    %v5034 = vld [vmem:[%s20 + $0x1c] sm:$0xf]
    %v5035 = vld [vmem:[%s20 + $0x20] sm:$0xf]
    %v5036 = vld [vmem:[%s20 + $0x24] sm:$0xf]
    %v5037 = vld [vmem:[%s20 + $0x28] sm:$0xf]
    %v5038 = vld [vmem:[%s20 + $0x2c] sm:$0xf]
    %v5039 = vld [vmem:[%s20 + $0x30] sm:$0xf]
    %v5040 = vld [vmem:[%s20 + $0x34] sm:$0xf]
    %v5041 = vld [vmem:[%s20 + $0x38] sm:$0xf]
    %v5042 = vld [vmem:[%s20 + $0x3c] sm:$0xf]
    %v5043 = vld [vmem:[%s20 + $0x40] sm:$0xf]
    %v5044 = vld [vmem:[%s20 + $0x44] sm:$0xf]
    %v5045 = vld [vmem:[%s20 + $0x48] sm:$0xf]
    %v5046 = vld [vmem:[%s20 + $0x4c] sm:$0xf]
    %v5047 = vld [vmem:[%s20 + $0x50] sm:$0xf]
    %v5048 = vld [vmem:[%s20 + $0x54] sm:$0xf]
    %v5049 = vld [vmem:[%s20 + $0x58] sm:$0xf]
    %v5050 = vld [vmem:[%s20 + $0x5c] sm:$0xf]
    %v5051 = vld [vmem:[%s20 + $0x60] sm:$0xf]
    %v5052 = vld [vmem:[%s20 + $0x64] sm:$0xf]
    %v5053 = vld [vmem:[%s20 + $0x68] sm:$0xf]
    %v5054 = vld [vmem:[%s20 + $0x6c] sm:$0xf]
    %v5055 = vld [vmem:[%s20 + $0x70] sm:$0xf]
    %v5056 = vld [vmem:[%s20 + $0x74] sm:$0xf]
    %v5057 = vld [vmem:[%s20 + $0x78] sm:$0xf]
    %v5058 = vld [vmem:[%s20 + $0x7c] sm:$0xf]
    %s5059 = scalar_lea.vmem %s19, 2
    %v5060 = vld [vmem:[%s5059] sm:$0x3]
    %v5062 = vsel %vm4950, %v5060, 0
    %5064 = vmatprep.subr.mxu0 %v4948
    %5065 = vmatpush1.msra.mxu0 %v4947
    %5066 = vmatprep.subr.mxu0 0.0
    %5067 = vmatpush1.msra.mxu0 0.0
    %5068 = vmatprep.subr.mxu0 0.0
    %5069 = vmatpush1.msra.mxu0 0.0
    %5070 = vmatprep.subr.mxu0 0.0
    %5071 = vmatpush1.msra.mxu0 0.0
    %5072 = vmatprep.subr.mxu0 0.0
    %5073 = vmatpush1.msra.mxu0 0.0
    %5074 = vmatprep.subr.mxu0 0.0
    %5075 = vmatpush1.msra.mxu0 0.0
    %5076 = vmatprep.subr.mxu0 0.0
    %5077 = vmatpush1.msra.mxu0 0.0
    %5078 = vmatprep.subr.mxu0 0.0
    %5079 = vmatpush1.msra.mxu0 0.0
    %5080 = vmatprep.subr.mxu0 0.0
    %5081 = vmatpush1.msra.mxu0 0.0
    %5082 = vmatprep.subr.mxu0 0.0
    %5083 = vmatpush1.msra.mxu0 0.0
    %5084 = vmatprep.subr.mxu0 0.0
    %5085 = vmatpush1.msra.mxu0 0.0
    %5086 = vmatprep.subr.mxu0 0.0
    %5087 = vmatpush1.msra.mxu0 0.0
    %5088 = vmatprep.subr.mxu0 0.0
    %5089 = vmatpush1.msra.mxu0 0.0
    %5090 = vmatprep.subr.mxu0 0.0
    %5091 = vmatpush1.msra.mxu0 0.0
    %5092 = vmatprep.subr.mxu0 0.0
    %5093 = vmatpush1.msra.mxu0 0.0
    %5094 = vmatprep.subr.mxu0 0.0
    %5095 = vmatpush1.msra.mxu0 0.0
    %5096 = vmatprep.subr.mxu0 0.0
    %5097 = vmatpush1.msra.mxu0 0.0
    %5098 = vmatprep.subr.mxu0 0.0
    %5099 = vmatpush1.msra.mxu0 0.0
    %5100 = vmatprep.subr.mxu0 0.0
    %5101 = vmatpush1.msra.mxu0 0.0
    %5102 = vmatprep.subr.mxu0 0.0
    %5103 = vmatpush1.msra.mxu0 0.0
    %5104 = vmatprep.subr.mxu0 0.0
    %5105 = vmatpush1.msra.mxu0 0.0
    %5106 = vmatprep.subr.mxu0 0.0
    %5107 = vmatpush1.msra.mxu0 0.0
    %5108 = vmatprep.subr.mxu0 0.0
    %5109 = vmatpush1.msra.mxu0 0.0
    %5110 = vmatprep.subr.mxu0 0.0
    %5111 = vmatpush1.msra.mxu0 0.0
    %5112 = vmatprep.subr.mxu0 0.0
    %5113 = vmatpush1.msra.mxu0 0.0
    %5114 = vmatprep.subr.mxu0 0.0
    %5115 = vmatpush1.msra.mxu0 0.0
    %5116 = vmatprep.subr.mxu0 0.0
    %5117 = vmatpush1.msra.mxu0 0.0
    %5118 = vmatprep.subr.mxu0 0.0
    %5119 = vmatpush1.msra.mxu0 0.0
    %5120 = vmatprep.subr.mxu0 0.0
    %5121 = vmatpush1.msra.mxu0 0.0
    %5122 = vmatprep.subr.mxu0 0.0
    %5123 = vmatpush1.msra.mxu0 0.0
    %5124 = vmatprep.subr.mxu0 0.0
    %5125 = vmatpush1.msra.mxu0 0.0
    %5126 = vmatprep.subr.mxu0 0.0
    %5127 = vmatpush1.msra.mxu0 0.0
    %5128 = vmatprep.mubr.f32.mxu0 0.0
    %5129 = vmatmul.mubr.f32.gmra.mrb[0].mxu0 %v5062
    %v5130 = vpop.f32.mrb[0].mxu0
    %v5131 = vadd.f32 0.0, %v5130
    %v5132 = vpop.f32.mrb[0].mxu0
    %v5133 = vadd.f32 0.0, %v5132
    %5134 = vdwg.mxu0
    %v5135 = vpack.c.bf16 %v5131, %v5131
    %v5136 = vpack.c.bf16 %v5133, %v5133
    %s5137 = scalar_lea.vmem %s20, 128
    %v5138 = vld [vmem:[%s5137] sm:$0xf]
    %v5139 = vld [vmem:[%s5137 + $0x4] sm:$0xf]
    %v5140 = vld [vmem:[%s5137 + $0x8] sm:$0xf]
    %v5141 = vld [vmem:[%s5137 + $0xc] sm:$0xf]
    %v5142 = vld [vmem:[%s5137 + $0x10] sm:$0xf]
    %v5143 = vld [vmem:[%s5137 + $0x14] sm:$0xf]
    %v5144 = vld [vmem:[%s5137 + $0x18] sm:$0xf]
    %v5145 = vld [vmem:[%s5137 + $0x1c] sm:$0xf]
    %v5146 = vld [vmem:[%s5137 + $0x20] sm:$0xf]
    %v5147 = vld [vmem:[%s5137 + $0x24] sm:$0xf]
    %v5148 = vld [vmem:[%s5137 + $0x28] sm:$0xf]
    %v5149 = vld [vmem:[%s5137 + $0x2c] sm:$0xf]
    %v5150 = vld [vmem:[%s5137 + $0x30] sm:$0xf]
    %v5151 = vld [vmem:[%s5137 + $0x34] sm:$0xf]
    %v5152 = vld [vmem:[%s5137 + $0x38] sm:$0xf]
    %v5153 = vld [vmem:[%s5137 + $0x3c] sm:$0xf]
    %v5154 = vld [vmem:[%s5137 + $0x40] sm:$0xf]
    %v5155 = vld [vmem:[%s5137 + $0x44] sm:$0xf]
    %v5156 = vld [vmem:[%s5137 + $0x48] sm:$0xf]
    %v5157 = vld [vmem:[%s5137 + $0x4c] sm:$0xf]
    %v5158 = vld [vmem:[%s5137 + $0x50] sm:$0xf]
    %v5159 = vld [vmem:[%s5137 + $0x54] sm:$0xf]
    %v5160 = vld [vmem:[%s5137 + $0x58] sm:$0xf]
    %v5161 = vld [vmem:[%s5137 + $0x5c] sm:$0xf]
    %v5162 = vld [vmem:[%s5137 + $0x60] sm:$0xf]
    %v5163 = vld [vmem:[%s5137 + $0x64] sm:$0xf]
    %v5164 = vld [vmem:[%s5137 + $0x68] sm:$0xf]
    %v5165 = vld [vmem:[%s5137 + $0x6c] sm:$0xf]
    %v5166 = vld [vmem:[%s5137 + $0x70] sm:$0xf]
    %v5167 = vld [vmem:[%s5137 + $0x74] sm:$0xf]
    %v5168 = vld [vmem:[%s5137 + $0x78] sm:$0xf]
    %v5169 = vld [vmem:[%s5137 + $0x7c] sm:$0xf]
    %v5202 = vunpack.c.l.b16 %v5138
    %v5203 = vunpack.c.l.b16 %v5139
    %v5204 = vunpack.c.l.b16 %v5140
    %v5205 = vunpack.c.l.b16 %v5141
    %v5206 = vunpack.c.l.b16 %v5142
    %v5207 = vunpack.c.l.b16 %v5143
    %v5208 = vunpack.c.l.b16 %v5144
    %v5209 = vunpack.c.l.b16 %v5145
    %v5210 = vunpack.c.l.b16 %v5146
    %v5211 = vunpack.c.l.b16 %v5147
    %v5212 = vunpack.c.l.b16 %v5148
    %v5213 = vunpack.c.l.b16 %v5149
    %v5214 = vunpack.c.l.b16 %v5150
    %v5215 = vunpack.c.l.b16 %v5151
    %v5216 = vunpack.c.l.b16 %v5152
    %v5217 = vunpack.c.l.b16 %v5153
    %v5218 = vunpack.c.l.b16 %v5154
    %v5219 = vunpack.c.l.b16 %v5155
    %v5220 = vunpack.c.l.b16 %v5156
    %v5221 = vunpack.c.l.b16 %v5157
    %v5222 = vunpack.c.l.b16 %v5158
    %v5223 = vunpack.c.l.b16 %v5159
    %v5224 = vunpack.c.l.b16 %v5160
    %v5225 = vunpack.c.l.b16 %v5161
    %v5226 = vunpack.c.l.b16 %v5162
    %v5227 = vunpack.c.l.b16 %v5163
    %v5228 = vunpack.c.l.b16 %v5164
    %v5229 = vunpack.c.l.b16 %v5165
    %v5230 = vunpack.c.l.b16 %v5166
    %v5231 = vunpack.c.l.b16 %v5167
    %v5232 = vunpack.c.l.b16 %v5168
    %v5233 = vunpack.c.l.b16 %v5169
    %v5234 = vpack.c.b16 %v5203, %v5202
    %v5235 = vpack.c.b16 %v5205, %v5204
    %v5236 = vpack.c.b16 %v5207, %v5206
    %v5237 = vpack.c.b16 %v5209, %v5208
    %v5238 = vpack.c.b16 %v5211, %v5210
    %v5239 = vpack.c.b16 %v5213, %v5212
    %v5240 = vpack.c.b16 %v5215, %v5214
    %v5241 = vpack.c.b16 %v5217, %v5216
    %v5242 = vpack.c.b16 %v5219, %v5218
    %v5243 = vpack.c.b16 %v5221, %v5220
    %v5244 = vpack.c.b16 %v5223, %v5222
    %v5245 = vpack.c.b16 %v5225, %v5224
    %v5246 = vpack.c.b16 %v5227, %v5226
    %v5247 = vpack.c.b16 %v5229, %v5228
    %v5248 = vpack.c.b16 %v5231, %v5230
    %v5249 = vpack.c.b16 %v5233, %v5232
    %5266 = vmatprep.subr.bf16.mxu0 0
    %5267 = vmatpush1.bf16.msra.mxu0 %v5234
    %5268 = vmatprep.subr.bf16.mxu0 0
    %5269 = vmatpush1.bf16.msra.mxu0 %v5235
    %5270 = vmatprep.subr.bf16.mxu0 0
    %5271 = vmatpush1.bf16.msra.mxu0 %v5236
    %5272 = vmatprep.subr.bf16.mxu0 0
    %5273 = vmatpush1.bf16.msra.mxu0 %v5237
    %5274 = vmatprep.subr.bf16.mxu0 0
    %5275 = vmatpush1.bf16.msra.mxu0 %v5238
    %5276 = vmatprep.subr.bf16.mxu0 0
    %5277 = vmatpush1.bf16.msra.mxu0 %v5239
    %5278 = vmatprep.subr.bf16.mxu0 0
    %5279 = vmatpush1.bf16.msra.mxu0 %v5240
    %5280 = vmatprep.subr.bf16.mxu0 0
    %5281 = vmatpush1.bf16.msra.mxu0 %v5241
    %5282 = vmatprep.subr.bf16.mxu0 0
    %5283 = vmatpush1.bf16.msra.mxu0 %v5242
    %5284 = vmatprep.subr.bf16.mxu0 0
    %5285 = vmatpush1.bf16.msra.mxu0 %v5243
    %5286 = vmatprep.subr.bf16.mxu0 0
    %5287 = vmatpush1.bf16.msra.mxu0 %v5244
    %5288 = vmatprep.subr.bf16.mxu0 0
    %5289 = vmatpush1.bf16.msra.mxu0 %v5245
    %5290 = vmatprep.subr.bf16.mxu0 0
    %5291 = vmatpush1.bf16.msra.mxu0 %v5246
    %5292 = vmatprep.subr.bf16.mxu0 0
    %5293 = vmatpush1.bf16.msra.mxu0 %v5247
    %5294 = vmatprep.subr.bf16.mxu0 0
    %5295 = vmatpush1.bf16.msra.mxu0 %v5248
    %5296 = vmatprep.subr.bf16.mxu0 0
    %5297 = vmatpush1.bf16.msra.mxu0 %v5249
    %5298 = vmatprep.mubr.bf16.mxu0 %v5136
    %5299 = vmatmul.mubr.bf16.gmra.mrb[0].mxu0 %v5135
    %v5300 = vpop.f32.mrb[0].mxu0
    %v5301 = vadd.f32 0.0, %v5300
    %v5302 = vpop.f32.mrb[0].mxu0
    %v5303 = vpop.f32.mrb[0].mxu0
    %v5304 = vpop.f32.mrb[0].mxu0
    %5305 = vdwg.mxu0
    %v5338 = vunpack.c.l.b16 %v5027
    %v5339 = vunpack.c.l.b16 %v5028
    %v5340 = vunpack.c.l.b16 %v5029
    %v5341 = vunpack.c.l.b16 %v5030
    %v5342 = vunpack.c.l.b16 %v5031
    %v5343 = vunpack.c.l.b16 %v5032
    %v5344 = vunpack.c.l.b16 %v5033
    %v5345 = vunpack.c.l.b16 %v5034
    %v5346 = vunpack.c.l.b16 %v5035
    %v5347 = vunpack.c.l.b16 %v5036
    %v5348 = vunpack.c.l.b16 %v5037
    %v5349 = vunpack.c.l.b16 %v5038
    %v5350 = vunpack.c.l.b16 %v5039
    %v5351 = vunpack.c.l.b16 %v5040
    %v5352 = vunpack.c.l.b16 %v5041
    %v5353 = vunpack.c.l.b16 %v5042
    %v5354 = vunpack.c.l.b16 %v5043
    %v5355 = vunpack.c.l.b16 %v5044
    %v5356 = vunpack.c.l.b16 %v5045
    %v5357 = vunpack.c.l.b16 %v5046
    %v5358 = vunpack.c.l.b16 %v5047
    %v5359 = vunpack.c.l.b16 %v5048
    %v5360 = vunpack.c.l.b16 %v5049
    %v5361 = vunpack.c.l.b16 %v5050
    %v5362 = vunpack.c.l.b16 %v5051
    %v5363 = vunpack.c.l.b16 %v5052
    %v5364 = vunpack.c.l.b16 %v5053
    %v5365 = vunpack.c.l.b16 %v5054
    %v5366 = vunpack.c.l.b16 %v5055
    %v5367 = vunpack.c.l.b16 %v5056
    %v5368 = vunpack.c.l.b16 %v5057
    %v5369 = vunpack.c.l.b16 %v5058
    %v5370 = vpack.c.b16 %v5339, %v5338
    %v5371 = vpack.c.b16 %v5341, %v5340
    %v5372 = vpack.c.b16 %v5343, %v5342
    %v5373 = vpack.c.b16 %v5345, %v5344
    %v5374 = vpack.c.b16 %v5347, %v5346
    %v5375 = vpack.c.b16 %v5349, %v5348
    %v5376 = vpack.c.b16 %v5351, %v5350
    %v5377 = vpack.c.b16 %v5353, %v5352
    %v5378 = vpack.c.b16 %v5355, %v5354
    %v5379 = vpack.c.b16 %v5357, %v5356
    %v5380 = vpack.c.b16 %v5359, %v5358
    %v5381 = vpack.c.b16 %v5361, %v5360
    %v5382 = vpack.c.b16 %v5363, %v5362
    %v5383 = vpack.c.b16 %v5365, %v5364
    %v5384 = vpack.c.b16 %v5367, %v5366
    %v5385 = vpack.c.b16 %v5369, %v5368
    %5402 = vmatprep.subr.bf16.mxu0 0
    %5403 = vmatpush1.bf16.msra.mxu0 %v5370
    %5404 = vmatprep.subr.bf16.mxu0 0
    %5405 = vmatpush1.bf16.msra.mxu0 %v5371
    %5406 = vmatprep.subr.bf16.mxu0 0
    %5407 = vmatpush1.bf16.msra.mxu0 %v5372
    %5408 = vmatprep.subr.bf16.mxu0 0
    %5409 = vmatpush1.bf16.msra.mxu0 %v5373
    %5410 = vmatprep.subr.bf16.mxu0 0
    %5411 = vmatpush1.bf16.msra.mxu0 %v5374
    %5412 = vmatprep.subr.bf16.mxu0 0
    %5413 = vmatpush1.bf16.msra.mxu0 %v5375
    %5414 = vmatprep.subr.bf16.mxu0 0
    %5415 = vmatpush1.bf16.msra.mxu0 %v5376
    %5416 = vmatprep.subr.bf16.mxu0 0
    %5417 = vmatpush1.bf16.msra.mxu0 %v5377
    %5418 = vmatprep.subr.bf16.mxu0 0
    %5419 = vmatpush1.bf16.msra.mxu0 %v5378
    %5420 = vmatprep.subr.bf16.mxu0 0
    %5421 = vmatpush1.bf16.msra.mxu0 %v5379
    %5422 = vmatprep.subr.bf16.mxu0 0
    %5423 = vmatpush1.bf16.msra.mxu0 %v5380
    %5424 = vmatprep.subr.bf16.mxu0 0
    %5425 = vmatpush1.bf16.msra.mxu0 %v5381
    %5426 = vmatprep.subr.bf16.mxu0 0
    %5427 = vmatpush1.bf16.msra.mxu0 %v5382
    %5428 = vmatprep.subr.bf16.mxu0 0
    %5429 = vmatpush1.bf16.msra.mxu0 %v5383
    %5430 = vmatprep.subr.bf16.mxu0 0
    %5431 = vmatpush1.bf16.msra.mxu0 %v5384
    %5432 = vmatprep.subr.bf16.mxu0 0
    %5433 = vmatpush1.bf16.msra.mxu0 %v5385
    %5434 = vmatprep.mubr.bf16.mxu0 %v5026
    %5435 = vmatmul.mubr.bf16.gmra.mrb[0].mxu0 %v5025
    %v5436 = vpop.f32.mrb[0].mxu0
    %v5437 = vadd.f32 %v5301, %v5436
    %v5438 = vpop.f32.mrb[0].mxu0
    %v5439 = vpop.f32.mrb[0].mxu0
    %v5440 = vpop.f32.mrb[0].mxu0
    %5441 = vdwg.mxu0
    %s5442 = scalar_lea.vmem %s19, 4
    %v5443 = vld [vmem:[%s5442] sm:$0x3]
    %v5445 = vsel %vm4950, %v5443, 0
    %5447 = vmatprep.subr.mxu0 %v4948
    %5448 = vmatpush1.msra.mxu0 %v4947
    %5449 = vmatprep.subr.mxu0 0.0
    %5450 = vmatpush1.msra.mxu0 0.0
    %5451 = vmatprep.subr.mxu0 0.0
    %5452 = vmatpush1.msra.mxu0 0.0
    %5453 = vmatprep.subr.mxu0 0.0
    %5454 = vmatpush1.msra.mxu0 0.0
    %5455 = vmatprep.subr.mxu0 0.0
    %5456 = vmatpush1.msra.mxu0 0.0
    %5457 = vmatprep.subr.mxu0 0.0
    %5458 = vmatpush1.msra.mxu0 0.0
    %5459 = vmatprep.subr.mxu0 0.0
    %5460 = vmatpush1.msra.mxu0 0.0
    %5461 = vmatprep.subr.mxu0 0.0
    %5462 = vmatpush1.msra.mxu0 0.0
    %5463 = vmatprep.subr.mxu0 0.0
    %5464 = vmatpush1.msra.mxu0 0.0
    %5465 = vmatprep.subr.mxu0 0.0
    %5466 = vmatpush1.msra.mxu0 0.0
    %5467 = vmatprep.subr.mxu0 0.0
    %5468 = vmatpush1.msra.mxu0 0.0
    %5469 = vmatprep.subr.mxu0 0.0
    %5470 = vmatpush1.msra.mxu0 0.0
    %5471 = vmatprep.subr.mxu0 0.0
    %5472 = vmatpush1.msra.mxu0 0.0
    %5473 = vmatprep.subr.mxu0 0.0
    %5474 = vmatpush1.msra.mxu0 0.0
    %5475 = vmatprep.subr.mxu0 0.0
    %5476 = vmatpush1.msra.mxu0 0.0
    %5477 = vmatprep.subr.mxu0 0.0
    %5478 = vmatpush1.msra.mxu0 0.0
    %5479 = vmatprep.subr.mxu0 0.0
    %5480 = vmatpush1.msra.mxu0 0.0
    %5481 = vmatprep.subr.mxu0 0.0
    %5482 = vmatpush1.msra.mxu0 0.0
    %5483 = vmatprep.subr.mxu0 0.0
    %5484 = vmatpush1.msra.mxu0 0.0
    %5485 = vmatprep.subr.mxu0 0.0
    %5486 = vmatpush1.msra.mxu0 0.0
    %5487 = vmatprep.subr.mxu0 0.0
    %5488 = vmatpush1.msra.mxu0 0.0
    %5489 = vmatprep.subr.mxu0 0.0
    %5490 = vmatpush1.msra.mxu0 0.0
    %5491 = vmatprep.subr.mxu0 0.0
    %5492 = vmatpush1.msra.mxu0 0.0
    %5493 = vmatprep.subr.mxu0 0.0
    %5494 = vmatpush1.msra.mxu0 0.0
    %5495 = vmatprep.subr.mxu0 0.0
    %5496 = vmatpush1.msra.mxu0 0.0
    %5497 = vmatprep.subr.mxu0 0.0
    %5498 = vmatpush1.msra.mxu0 0.0
    %5499 = vmatprep.subr.mxu0 0.0
    %5500 = vmatpush1.msra.mxu0 0.0
    %5501 = vmatprep.subr.mxu0 0.0
    %5502 = vmatpush1.msra.mxu0 0.0
    %5503 = vmatprep.subr.mxu0 0.0
    %5504 = vmatpush1.msra.mxu0 0.0
    %5505 = vmatprep.subr.mxu0 0.0
    %5506 = vmatpush1.msra.mxu0 0.0
    %5507 = vmatprep.subr.mxu0 0.0
    %5508 = vmatpush1.msra.mxu0 0.0
    %5509 = vmatprep.subr.mxu0 0.0
    %5510 = vmatpush1.msra.mxu0 0.0
    %5511 = vmatprep.mubr.f32.mxu0 0.0
    %5512 = vmatmul.mubr.f32.gmra.mrb[0].mxu0 %v5445
    %v5513 = vpop.f32.mrb[0].mxu0
    %v5514 = vadd.f32 0.0, %v5513
    %v5515 = vpop.f32.mrb[0].mxu0
    %v5516 = vadd.f32 0.0, %v5515
    %5517 = vdwg.mxu0
    %v5518 = vpack.c.bf16 %v5514, %v5514
    %v5519 = vpack.c.bf16 %v5516, %v5516
    %s5520 = scalar_lea.vmem %s20, 256
    %v5521 = vld [vmem:[%s5520] sm:$0xf]
    %v5522 = vld [vmem:[%s5520 + $0x4] sm:$0xf]
    %v5523 = vld [vmem:[%s5520 + $0x8] sm:$0xf]
    %v5524 = vld [vmem:[%s5520 + $0xc] sm:$0xf]
    %v5525 = vld [vmem:[%s5520 + $0x10] sm:$0xf]
    %v5526 = vld [vmem:[%s5520 + $0x14] sm:$0xf]
    %v5527 = vld [vmem:[%s5520 + $0x18] sm:$0xf]
    %v5528 = vld [vmem:[%s5520 + $0x1c] sm:$0xf]
    %v5529 = vld [vmem:[%s5520 + $0x20] sm:$0xf]
    %v5530 = vld [vmem:[%s5520 + $0x24] sm:$0xf]
    %v5531 = vld [vmem:[%s5520 + $0x28] sm:$0xf]
    %v5532 = vld [vmem:[%s5520 + $0x2c] sm:$0xf]
    %v5533 = vld [vmem:[%s5520 + $0x30] sm:$0xf]
    %v5534 = vld [vmem:[%s5520 + $0x34] sm:$0xf]
    %v5535 = vld [vmem:[%s5520 + $0x38] sm:$0xf]
    %v5536 = vld [vmem:[%s5520 + $0x3c] sm:$0xf]
    %v5537 = vld [vmem:[%s5520 + $0x40] sm:$0xf]
    %v5538 = vld [vmem:[%s5520 + $0x44] sm:$0xf]
    %v5539 = vld [vmem:[%s5520 + $0x48] sm:$0xf]
    %v5540 = vld [vmem:[%s5520 + $0x4c] sm:$0xf]
    %v5541 = vld [vmem:[%s5520 + $0x50] sm:$0xf]
    %v5542 = vld [vmem:[%s5520 + $0x54] sm:$0xf]
    %v5543 = vld [vmem:[%s5520 + $0x58] sm:$0xf]
    %v5544 = vld [vmem:[%s5520 + $0x5c] sm:$0xf]
    %v5545 = vld [vmem:[%s5520 + $0x60] sm:$0xf]
    %v5546 = vld [vmem:[%s5520 + $0x64] sm:$0xf]
    %v5547 = vld [vmem:[%s5520 + $0x68] sm:$0xf]
    %v5548 = vld [vmem:[%s5520 + $0x6c] sm:$0xf]
    %v5549 = vld [vmem:[%s5520 + $0x70] sm:$0xf]
    %v5550 = vld [vmem:[%s5520 + $0x74] sm:$0xf]
    %v5551 = vld [vmem:[%s5520 + $0x78] sm:$0xf]
    %v5552 = vld [vmem:[%s5520 + $0x7c] sm:$0xf]
    %v5585 = vunpack.c.l.b16 %v5521
    %v5586 = vunpack.c.l.b16 %v5522
    %v5587 = vunpack.c.l.b16 %v5523
    %v5588 = vunpack.c.l.b16 %v5524
    %v5589 = vunpack.c.l.b16 %v5525
    %v5590 = vunpack.c.l.b16 %v5526
    %v5591 = vunpack.c.l.b16 %v5527
    %v5592 = vunpack.c.l.b16 %v5528
    %v5593 = vunpack.c.l.b16 %v5529
    %v5594 = vunpack.c.l.b16 %v5530
    %v5595 = vunpack.c.l.b16 %v5531
    %v5596 = vunpack.c.l.b16 %v5532
    %v5597 = vunpack.c.l.b16 %v5533
    %v5598 = vunpack.c.l.b16 %v5534
    %v5599 = vunpack.c.l.b16 %v5535
    %v5600 = vunpack.c.l.b16 %v5536
    %v5601 = vunpack.c.l.b16 %v5537
    %v5602 = vunpack.c.l.b16 %v5538
    %v5603 = vunpack.c.l.b16 %v5539
    %v5604 = vunpack.c.l.b16 %v5540
    %v5605 = vunpack.c.l.b16 %v5541
    %v5606 = vunpack.c.l.b16 %v5542
    %v5607 = vunpack.c.l.b16 %v5543
    %v5608 = vunpack.c.l.b16 %v5544
    %v5609 = vunpack.c.l.b16 %v5545
    %v5610 = vunpack.c.l.b16 %v5546
    %v5611 = vunpack.c.l.b16 %v5547
    %v5612 = vunpack.c.l.b16 %v5548
    %v5613 = vunpack.c.l.b16 %v5549
    %v5614 = vunpack.c.l.b16 %v5550
    %v5615 = vunpack.c.l.b16 %v5551
    %v5616 = vunpack.c.l.b16 %v5552
    %v5617 = vpack.c.b16 %v5586, %v5585
    %v5618 = vpack.c.b16 %v5588, %v5587
    %v5619 = vpack.c.b16 %v5590, %v5589
    %v5620 = vpack.c.b16 %v5592, %v5591
    %v5621 = vpack.c.b16 %v5594, %v5593
    %v5622 = vpack.c.b16 %v5596, %v5595
    %v5623 = vpack.c.b16 %v5598, %v5597
    %v5624 = vpack.c.b16 %v5600, %v5599
    %v5625 = vpack.c.b16 %v5602, %v5601
    %v5626 = vpack.c.b16 %v5604, %v5603
    %v5627 = vpack.c.b16 %v5606, %v5605
    %v5628 = vpack.c.b16 %v5608, %v5607
    %v5629 = vpack.c.b16 %v5610, %v5609
    %v5630 = vpack.c.b16 %v5612, %v5611
    %v5631 = vpack.c.b16 %v5614, %v5613
    %v5632 = vpack.c.b16 %v5616, %v5615
    %5649 = vmatprep.subr.bf16.mxu0 0
    %5650 = vmatpush1.bf16.msra.mxu0 %v5617
    %5651 = vmatprep.subr.bf16.mxu0 0
    %5652 = vmatpush1.bf16.msra.mxu0 %v5618
    %5653 = vmatprep.subr.bf16.mxu0 0
    %5654 = vmatpush1.bf16.msra.mxu0 %v5619
    %5655 = vmatprep.subr.bf16.mxu0 0
    %5656 = vmatpush1.bf16.msra.mxu0 %v5620
    %5657 = vmatprep.subr.bf16.mxu0 0
    %5658 = vmatpush1.bf16.msra.mxu0 %v5621
    %5659 = vmatprep.subr.bf16.mxu0 0
    %5660 = vmatpush1.bf16.msra.mxu0 %v5622
    %5661 = vmatprep.subr.bf16.mxu0 0
    %5662 = vmatpush1.bf16.msra.mxu0 %v5623
    %5663 = vmatprep.subr.bf16.mxu0 0
    %5664 = vmatpush1.bf16.msra.mxu0 %v5624
    %5665 = vmatprep.subr.bf16.mxu0 0
    %5666 = vmatpush1.bf16.msra.mxu0 %v5625
    %5667 = vmatprep.subr.bf16.mxu0 0
    %5668 = vmatpush1.bf16.msra.mxu0 %v5626
    %5669 = vmatprep.subr.bf16.mxu0 0
    %5670 = vmatpush1.bf16.msra.mxu0 %v5627
    %5671 = vmatprep.subr.bf16.mxu0 0
    %5672 = vmatpush1.bf16.msra.mxu0 %v5628
    %5673 = vmatprep.subr.bf16.mxu0 0
    %5674 = vmatpush1.bf16.msra.mxu0 %v5629
    %5675 = vmatprep.subr.bf16.mxu0 0
    %5676 = vmatpush1.bf16.msra.mxu0 %v5630
    %5677 = vmatprep.subr.bf16.mxu0 0
    %5678 = vmatpush1.bf16.msra.mxu0 %v5631
    %5679 = vmatprep.subr.bf16.mxu0 0
    %5680 = vmatpush1.bf16.msra.mxu0 %v5632
    %5681 = vmatprep.mubr.bf16.mxu0 %v5519
    %5682 = vmatmul.mubr.bf16.gmra.mrb[0].mxu0 %v5518
    %v5683 = vpop.f32.mrb[0].mxu0
    %v5684 = vadd.f32 0.0, %v5683
    %v5685 = vpop.f32.mrb[0].mxu0
    %v5686 = vpop.f32.mrb[0].mxu0
    %v5687 = vpop.f32.mrb[0].mxu0
    %5688 = vdwg.mxu0
    %v5689 = vadd.f32 %v5437, %v5684
    %s5690 = scalar_lea.vmem %s19, 6
    %v5691 = vld [vmem:[%s5690] sm:$0x3]
    %v5693 = vsel %vm4950, %v5691, 0
    %5695 = vmatprep.subr.mxu0 %v4948
    %5696 = vmatpush1.msra.mxu0 %v4947
    %5697 = vmatprep.subr.mxu0 0.0
    %5698 = vmatpush1.msra.mxu0 0.0
    %5699 = vmatprep.subr.mxu0 0.0
    %5700 = vmatpush1.msra.mxu0 0.0
    %5701 = vmatprep.subr.mxu0 0.0
    %5702 = vmatpush1.msra.mxu0 0.0
    %5703 = vmatprep.subr.mxu0 0.0
    %5704 = vmatpush1.msra.mxu0 0.0
    %5705 = vmatprep.subr.mxu0 0.0
    %5706 = vmatpush1.msra.mxu0 0.0
    %5707 = vmatprep.subr.mxu0 0.0
    %5708 = vmatpush1.msra.mxu0 0.0
    %5709 = vmatprep.subr.mxu0 0.0
    %5710 = vmatpush1.msra.mxu0 0.0
    %5711 = vmatprep.subr.mxu0 0.0
    %5712 = vmatpush1.msra.mxu0 0.0
    %5713 = vmatprep.subr.mxu0 0.0
    %5714 = vmatpush1.msra.mxu0 0.0
    %5715 = vmatprep.subr.mxu0 0.0
    %5716 = vmatpush1.msra.mxu0 0.0
    %5717 = vmatprep.subr.mxu0 0.0
    %5718 = vmatpush1.msra.mxu0 0.0
    %5719 = vmatprep.subr.mxu0 0.0
    %5720 = vmatpush1.msra.mxu0 0.0
    %5721 = vmatprep.subr.mxu0 0.0
    %5722 = vmatpush1.msra.mxu0 0.0
    %5723 = vmatprep.subr.mxu0 0.0
    %5724 = vmatpush1.msra.mxu0 0.0
    %5725 = vmatprep.subr.mxu0 0.0
    %5726 = vmatpush1.msra.mxu0 0.0
    %5727 = vmatprep.subr.mxu0 0.0
    %5728 = vmatpush1.msra.mxu0 0.0
    %5729 = vmatprep.subr.mxu0 0.0
    %5730 = vmatpush1.msra.mxu0 0.0
    %5731 = vmatprep.subr.mxu0 0.0
    %5732 = vmatpush1.msra.mxu0 0.0
    %5733 = vmatprep.subr.mxu0 0.0
    %5734 = vmatpush1.msra.mxu0 0.0
    %5735 = vmatprep.subr.mxu0 0.0
    %5736 = vmatpush1.msra.mxu0 0.0
    %5737 = vmatprep.subr.mxu0 0.0
    %5738 = vmatpush1.msra.mxu0 0.0
    %5739 = vmatprep.subr.mxu0 0.0
    %5740 = vmatpush1.msra.mxu0 0.0
    %5741 = vmatprep.subr.mxu0 0.0
    %5742 = vmatpush1.msra.mxu0 0.0
    %5743 = vmatprep.subr.mxu0 0.0
    %5744 = vmatpush1.msra.mxu0 0.0
    %5745 = vmatprep.subr.mxu0 0.0
    %5746 = vmatpush1.msra.mxu0 0.0
    %5747 = vmatprep.subr.mxu0 0.0
    %5748 = vmatpush1.msra.mxu0 0.0
    %5749 = vmatprep.subr.mxu0 0.0
    %5750 = vmatpush1.msra.mxu0 0.0
    %5751 = vmatprep.subr.mxu0 0.0
    %5752 = vmatpush1.msra.mxu0 0.0
    %5753 = vmatprep.subr.mxu0 0.0
    %5754 = vmatpush1.msra.mxu0 0.0
    %5755 = vmatprep.subr.mxu0 0.0
    %5756 = vmatpush1.msra.mxu0 0.0
    %5757 = vmatprep.subr.mxu0 0.0
    %5758 = vmatpush1.msra.mxu0 0.0
    %5759 = vmatprep.mubr.f32.mxu0 0.0
    %5760 = vmatmul.mubr.f32.gmra.mrb[0].mxu0 %v5693
    %v5761 = vpop.f32.mrb[0].mxu0
    %v5762 = vadd.f32 0.0, %v5761
    %v5763 = vpop.f32.mrb[0].mxu0
    %v5764 = vadd.f32 0.0, %v5763
    %5765 = vdwg.mxu0
    %v5766 = vpack.c.bf16 %v5762, %v5762
    %v5767 = vpack.c.bf16 %v5764, %v5764
    %s5768 = scalar_lea.vmem %s20, 384
    %v5769 = vld [vmem:[%s5768] sm:$0xf]
    %v5770 = vld [vmem:[%s5768 + $0x4] sm:$0xf]
    %v5771 = vld [vmem:[%s5768 + $0x8] sm:$0xf]
    %v5772 = vld [vmem:[%s5768 + $0xc] sm:$0xf]
    %v5773 = vld [vmem:[%s5768 + $0x10] sm:$0xf]
    %v5774 = vld [vmem:[%s5768 + $0x14] sm:$0xf]
    %v5775 = vld [vmem:[%s5768 + $0x18] sm:$0xf]
    %v5776 = vld [vmem:[%s5768 + $0x1c] sm:$0xf]
    %v5777 = vld [vmem:[%s5768 + $0x20] sm:$0xf]
    %v5778 = vld [vmem:[%s5768 + $0x24] sm:$0xf]
    %v5779 = vld [vmem:[%s5768 + $0x28] sm:$0xf]
    %v5780 = vld [vmem:[%s5768 + $0x2c] sm:$0xf]
    %v5781 = vld [vmem:[%s5768 + $0x30] sm:$0xf]
    %v5782 = vld [vmem:[%s5768 + $0x34] sm:$0xf]
    %v5783 = vld [vmem:[%s5768 + $0x38] sm:$0xf]
    %v5784 = vld [vmem:[%s5768 + $0x3c] sm:$0xf]
    %v5785 = vld [vmem:[%s5768 + $0x40] sm:$0xf]
    %v5786 = vld [vmem:[%s5768 + $0x44] sm:$0xf]
    %v5787 = vld [vmem:[%s5768 + $0x48] sm:$0xf]
    %v5788 = vld [vmem:[%s5768 + $0x4c] sm:$0xf]
    %v5789 = vld [vmem:[%s5768 + $0x50] sm:$0xf]
    %v5790 = vld [vmem:[%s5768 + $0x54] sm:$0xf]
    %v5791 = vld [vmem:[%s5768 + $0x58] sm:$0xf]
    %v5792 = vld [vmem:[%s5768 + $0x5c] sm:$0xf]
    %v5793 = vld [vmem:[%s5768 + $0x60] sm:$0xf]
    %v5794 = vld [vmem:[%s5768 + $0x64] sm:$0xf]
    %v5795 = vld [vmem:[%s5768 + $0x68] sm:$0xf]
    %v5796 = vld [vmem:[%s5768 + $0x6c] sm:$0xf]
    %v5797 = vld [vmem:[%s5768 + $0x70] sm:$0xf]
    %v5798 = vld [vmem:[%s5768 + $0x74] sm:$0xf]
    %v5799 = vld [vmem:[%s5768 + $0x78] sm:$0xf]
    %v5800 = vld [vmem:[%s5768 + $0x7c] sm:$0xf]
    %v5833 = vunpack.c.l.b16 %v5769
    %v5834 = vunpack.c.l.b16 %v5770
    %v5835 = vunpack.c.l.b16 %v5771
    %v5836 = vunpack.c.l.b16 %v5772
    %v5837 = vunpack.c.l.b16 %v5773
    %v5838 = vunpack.c.l.b16 %v5774
    %v5839 = vunpack.c.l.b16 %v5775
    %v5840 = vunpack.c.l.b16 %v5776
    %v5841 = vunpack.c.l.b16 %v5777
    %v5842 = vunpack.c.l.b16 %v5778
    %v5843 = vunpack.c.l.b16 %v5779
    %v5844 = vunpack.c.l.b16 %v5780
    %v5845 = vunpack.c.l.b16 %v5781
    %v5846 = vunpack.c.l.b16 %v5782
    %v5847 = vunpack.c.l.b16 %v5783
    %v5848 = vunpack.c.l.b16 %v5784
    %v5849 = vunpack.c.l.b16 %v5785
    %v5850 = vunpack.c.l.b16 %v5786
    %v5851 = vunpack.c.l.b16 %v5787
    %v5852 = vunpack.c.l.b16 %v5788
    %v5853 = vunpack.c.l.b16 %v5789
    %v5854 = vunpack.c.l.b16 %v5790
    %v5855 = vunpack.c.l.b16 %v5791
    %v5856 = vunpack.c.l.b16 %v5792
    %v5857 = vunpack.c.l.b16 %v5793
    %v5858 = vunpack.c.l.b16 %v5794
    %v5859 = vunpack.c.l.b16 %v5795
    %v5860 = vunpack.c.l.b16 %v5796
    %v5861 = vunpack.c.l.b16 %v5797
    %v5862 = vunpack.c.l.b16 %v5798
    %v5863 = vunpack.c.l.b16 %v5799
    %v5864 = vunpack.c.l.b16 %v5800
    %v5865 = vpack.c.b16 %v5834, %v5833
    %v5866 = vpack.c.b16 %v5836, %v5835
    %v5867 = vpack.c.b16 %v5838, %v5837
    %v5868 = vpack.c.b16 %v5840, %v5839
    %v5869 = vpack.c.b16 %v5842, %v5841
    %v5870 = vpack.c.b16 %v5844, %v5843
    %v5871 = vpack.c.b16 %v5846, %v5845
    %v5872 = vpack.c.b16 %v5848, %v5847
    %v5873 = vpack.c.b16 %v5850, %v5849
    %v5874 = vpack.c.b16 %v5852, %v5851
    %v5875 = vpack.c.b16 %v5854, %v5853
    %v5876 = vpack.c.b16 %v5856, %v5855
    %v5877 = vpack.c.b16 %v5858, %v5857
    %v5878 = vpack.c.b16 %v5860, %v5859
    %v5879 = vpack.c.b16 %v5862, %v5861
    %v5880 = vpack.c.b16 %v5864, %v5863
    %5897 = vmatprep.subr.bf16.mxu0 0
    %5898 = vmatpush1.bf16.msra.mxu0 %v5865
    %5899 = vmatprep.subr.bf16.mxu0 0
    %5900 = vmatpush1.bf16.msra.mxu0 %v5866
    %5901 = vmatprep.subr.bf16.mxu0 0
    %5902 = vmatpush1.bf16.msra.mxu0 %v5867
    %5903 = vmatprep.subr.bf16.mxu0 0
    %5904 = vmatpush1.bf16.msra.mxu0 %v5868
    %5905 = vmatprep.subr.bf16.mxu0 0
    %5906 = vmatpush1.bf16.msra.mxu0 %v5869
    %5907 = vmatprep.subr.bf16.mxu0 0
    %5908 = vmatpush1.bf16.msra.mxu0 %v5870
    %5909 = vmatprep.subr.bf16.mxu0 0
    %5910 = vmatpush1.bf16.msra.mxu0 %v5871
    %5911 = vmatprep.subr.bf16.mxu0 0
    %5912 = vmatpush1.bf16.msra.mxu0 %v5872
    %5913 = vmatprep.subr.bf16.mxu0 0
    %5914 = vmatpush1.bf16.msra.mxu0 %v5873
    %5915 = vmatprep.subr.bf16.mxu0 0
    %5916 = vmatpush1.bf16.msra.mxu0 %v5874
    %5917 = vmatprep.subr.bf16.mxu0 0
    %5918 = vmatpush1.bf16.msra.mxu0 %v5875
    %5919 = vmatprep.subr.bf16.mxu0 0
    %5920 = vmatpush1.bf16.msra.mxu0 %v5876
    %5921 = vmatprep.subr.bf16.mxu0 0
    %5922 = vmatpush1.bf16.msra.mxu0 %v5877
    %5923 = vmatprep.subr.bf16.mxu0 0
    %5924 = vmatpush1.bf16.msra.mxu0 %v5878
    %5925 = vmatprep.subr.bf16.mxu0 0
    %5926 = vmatpush1.bf16.msra.mxu0 %v5879
    %5927 = vmatprep.subr.bf16.mxu0 0
    %5928 = vmatpush1.bf16.msra.mxu0 %v5880
    %5929 = vmatprep.mubr.bf16.mxu0 %v5767
    %5930 = vmatmul.mubr.bf16.gmra.mrb[0].mxu0 %v5766
    %v5931 = vpop.f32.mrb[0].mxu0
    %v5932 = vadd.f32 0.0, %v5931
    %v5933 = vpop.f32.mrb[0].mxu0
    %v5934 = vpop.f32.mrb[0].mxu0
    %v5935 = vpop.f32.mrb[0].mxu0
    %5936 = vdwg.mxu0
    %v5937 = vadd.f32 %v5689, %v5932
    %v5938 = vld [vmem:[#allocation2] sm:$0x1]
    %v5940 = vlaneseq
    %v5941 = vshrl.u32 %v5940, 7
    %v5942 = vsub.s32 0, %v5941
    %v5943 = vrot.slane %v5938, %v5942
    %v5945 = vadd.f32 %v5937, %v5943
    %vm5946 = vcmask 1024
    %5947 = vst.msk [vmem:[%s22] sm:$0x3] %vm5946, %v5945
    // Predicated region
    $region110: #{discriminator_forward.1} parent=1 // pred_check
      _
    $region111: #{discriminator_forward.1} parent=1 // pred_check_branch
      %5949 = sbr.rel (0) target = $region113
    $region112: #{discriminator_forward.1} parent=1 // pred_region
      _
    $region113: #{discriminator_forward.1} parent=1 // pred_fallthru
      _
    // Predicated region
    $region114: #{discriminator_forward.1} parent=1 // pred_check
      _
    $region115: #{discriminator_forward.1} parent=1 // pred_check_branch
      %5951 = sbr.rel (0) target = $region117
    $region116: #{discriminator_forward.1} parent=1 // pred_region
      _
    $region117: #{discriminator_forward.1} parent=1 // pred_fallthru
      _
    %5952 = vsyncpa [#allocation4], 1
    %5953 = vsyncpa [#allocation6], 1
    %5954 = vsyncpa [#allocation9], 1

</llo_original>
